<compile_context>
chip_gen: v7x
topology: tpu7x:2x2x1
jax: 0.10.0
libtpu: 0.0.40
codegen_flags: <defaults>
</compile_context>

<pallas_src>
import jax
import jax.numpy as jnp
import numpy as np
from jax.experimental import pallas as pl
from jax.experimental.pallas import tpu as pltpu


def _round_up(x, m):
    return (x + m - 1) // m * m


def _apply_layers(h, refs, relu_flags, dot_dtype):
    """Chain of Linear(+optional ReLU). Weights in `refs` are already cast to
    `dot_dtype` (bf16); biases are f32; accumulation is f32 on the MXU."""
    for idx, do_relu in enumerate(relu_flags):
        w = refs[2 * idx][...]
        b = refs[2 * idx + 1][...]
        h = jnp.dot(h.astype(dot_dtype), w, preferred_element_type=jnp.float32) + b
        if do_relu:
            h = jnp.maximum(h, 0.0)
    return h


# ----------------------------- Pass A ---------------------------------------
def _make_encode_kernel(pre_flags, max_flags, dot_dtype):
    n_pre, n_max = len(pre_flags), len(max_flags)
    n_w = 2 * (n_pre + n_max)

    def kernel(x_ref, *refs):
        w_refs = refs[:n_w]
        z_ref, gmax_ref = refs[n_w], refs[n_w + 1]
        i = pl.program_id(1)                     # reduction ("arbitrary") axis

        h = x_ref[...].astype(jnp.float32)
        # encoder hidden layers + folded(encoder[-1] ∘ in_block[0]) + in_block[1]
        z = _apply_layers(h, w_refs[: 2 * n_pre], pre_flags, dot_dtype)
        z_ref[...] = z.astype(z_ref.dtype)

        # max_block
        g = _apply_layers(z, w_refs[2 * n_pre:], max_flags, dot_dtype)
        tile_max = jnp.broadcast_to(jnp.max(g, axis=0, keepdims=True),
                                    gmax_ref.shape)

        @pl.when(i == 0)
        def _():
            gmax_ref[...] = tile_max

        @pl.when(i > 0)
        def _():
            gmax_ref[...] = jnp.maximum(gmax_ref[...], tile_max)

    return kernel


# ----------------------------- Pass B ---------------------------------------
def _make_decode_kernel(relu_flags, dot_dtype):
    n_w = 2 * len(relu_flags)

    def kernel(z_ref, *refs):
        w_refs = refs[:n_w]
        out_ref = refs[n_w]
        h = _apply_layers(z_ref[...], w_refs, relu_flags, dot_dtype)
        out_ref[...] = h.astype(out_ref.dtype)

    return kernel


# ----------------------------- Wrapper ---------------------------------------
def pointnet_forward(x, params, *, tile=512, num_cores=2,
                     compute_dtype=jnp.bfloat16,
                     vmem_limit_bytes=48 * 1024 * 1024):
    f32 = jnp.float32
    n, in_dim = x.shape

    enc = params["encoder"]
    inb = params["in_block"]
    maxb = params["max_block"]
    outb = params["out_block"]
    wf, bf = params["fcfinal"]
    dec = params["decoder"]

    two_b = inb[-1][0].shape[1]           # 2 * base_nb
    thirty_two_b = maxb[-1][0].shape[1]   # 32 * base_nb
    dec_out = dec[-1][0].shape[1]

    # --- offline affine folding (once, in f32) -------------------------------
    we_l, be_l = enc[-1]                  # encoder last layer (plain)
    wi0, bi0 = inb[0]                     # in_block first layer (pre-ReLU)
    w_ei, b_ei = we_l @ wi0, be_l @ wi0 + bi0
    wo2, bo2 = outb[2]                    # out_block last layer (plain)
    wd0, bd0 = dec[0]                     # decoder first layer
    w_tail = wo2 @ wf @ wd0
    b_tail = (bo2 @ wf + bf) @ wd0 + bd0

    # --- pass-A layer list ----------------------------------------------------
    a_layers = list(enc[:-1]) + [(w_ei, b_ei), inb[1]] + list(maxb)
    n_pre = len(enc[:-1]) + 2
    pre_flags = tuple([True] * (n_pre - 1) + [False])
    max_flags = tuple([True] * (len(maxb) - 1) + [False])
    a_params = []
    for w, b in a_layers:
        a_params += [w.astype(compute_dtype), b.astype(f32)]

    # --- pad points so the grid divides evenly. Padded rows replicate real
    #     rows (mode="edge"), so they cannot change the global max; they are
    #     sliced off at the end.
    chunk = num_cores * tile
    n_pad = _round_up(n, chunk)
    if n_pad != n:
        x = jnp.pad(x, ((0, n_pad - n), (0, 0)), mode="edge")
    tiles_per_core = n_pad // chunk

    def point_idx(c, i, _t=tiles_per_core):
        return (c * _t + i, 0)

    a_in_specs = [pl.BlockSpec((tile, in_dim), point_idx)] + \
                 [pl.BlockSpec(p.shape, lambda c, i: (0, 0)) for p in a_params]

    z, gmax_part = pl.pallas_call(
        _make_encode_kernel(pre_flags, max_flags, compute_dtype),
        out_shape=(
            jax.ShapeDtypeStruct((n_pad, two_b), compute_dtype),   # z kept bf16
            jax.ShapeDtypeStruct((num_cores * 8, thirty_two_b), f32),
        ),
        grid=(num_cores, tiles_per_core),
        in_specs=a_in_specs,
        out_specs=(
            pl.BlockSpec((tile, two_b), point_idx),
            # one 8-row slab per parallel chunk (rows within a slab identical);
            # resident across the "arbitrary" reduction axis.
            pl.BlockSpec((8, thirty_two_b), lambda c, i: (c, 0)),
        ),
        compiler_params=pltpu.CompilerParams(
            dimension_semantics=("parallel", "arbitrary"),
            vmem_limit_bytes=vmem_limit_bytes),
    )(x, *a_params)

    # --- combine per-core partial maxima + hoist grid-invariant matmul -------
    gmax = jnp.max(gmax_part, axis=0, keepdims=True)              # (1, 32b)
    wo0, bo0 = outb[0]
    wo0z, wo0g = wo0[:two_b, :], wo0[two_b:, :]
    gbias = gmax @ wo0g + bo0                                     # (1, 16b) f32

    # --- pass-B layer list ----------------------------------------------------
    b_layers = [(wo0z, gbias, True), (outb[1][0], outb[1][1], True)]
    if len(dec) > 1:
        b_layers.append((w_tail, b_tail, True))
        rest = dec[1:]
        for j, (w, b) in enumerate(rest):
            b_layers.append((w, b, j < len(rest) - 1))
    else:
        b_layers.append((w_tail, b_tail, False))

    # lane-dense final store: pad last layer out-dim to >=128 lanes (zeros)
    w_last, b_last, _ = b_layers[-1]
    out_dim = w_last.shape[1]
    out_pad = max(128, _round_up(out_dim, 128))
    if out_pad != out_dim:
        w_last = jnp.pad(w_last, ((0, 0), (0, out_pad - out_dim)))
        b_last = jnp.pad(b_last, ((0, 0), (0, out_pad - out_dim)))
        b_layers[-1] = (w_last, b_last, False)

    b_flags = tuple(r for (_, _, r) in b_layers)
    b_params = []
    for w, b, _ in b_layers:
        b_params += [w.astype(compute_dtype), b.astype(f32)]

    b_in_specs = [pl.BlockSpec((tile, two_b), lambda i: (i, 0))] + \
                 [pl.BlockSpec(p.shape, lambda i: (0, 0)) for p in b_params]

    out = pl.pallas_call(
        _make_decode_kernel(b_flags, compute_dtype),
        out_shape=jax.ShapeDtypeStruct((n_pad, out_pad), f32),
        grid=(n_pad // tile,),
        in_specs=b_in_specs,
        out_specs=pl.BlockSpec((tile, out_pad), lambda i: (i, 0)),
        compiler_params=pltpu.CompilerParams(
            dimension_semantics=("parallel",),
            vmem_limit_bytes=vmem_limit_bytes),
    )(z, *b_params)

    return out[:n, :dec_out]


# ----------------------------- Parameters -----------------------------------
def _linear_params(key, fan_in, fan_out):
    kw, kb = jax.random.split(key)
    bound = 1.0 / np.sqrt(fan_in)
    w = jax.random.uniform(kw, (fan_in, fan_out), jnp.float32, -bound, bound)
    b = jax.random.uniform(kb, (1, fan_out), jnp.float32, -bound, bound)
    return w, b


def _mlp_params(key, channels):
    keys = jax.random.split(key, len(channels) - 1)
    return [_linear_params(k, channels[i], channels[i + 1])
            for i, k in enumerate(keys)]


def make_pointnet_params(key, base_nb, encoder, decoder):
    b = base_nb
    k = jax.random.split(key, 6)
    return {
        "encoder":   _mlp_params(k[0], encoder),
        "in_block":  _mlp_params(k[1], [encoder[-1], b, b * 2]),
        "max_block": _mlp_params(k[2], [b * 2, b * 4, b * 8, b * 32]),
        "out_block": _mlp_params(k[3], [b * (32 + 2), b * 16, b * 8, b * 4]),
        "fcfinal":   _linear_params(k[4], b * 4, encoder[-1]),
        "decoder":   _mlp_params(k[5], decoder),
    }


# ----------------------------- Pure-JAX reference ---------------------------
def _mlp_ref(x, layers):
    for i, (w, bb) in enumerate(layers):
        x = x @ w + bb
        if i < len(layers) - 1:
            x = jax.nn.relu(x)
    return x


def pointnet_ref(x, params):
    z = _mlp_ref(x, params["encoder"])
    z = _mlp_ref(z, params["in_block"])
    g = _mlp_ref(z, params["max_block"])
    gmax = jnp.max(g, axis=0, keepdims=True)                 # global_max_pool
    gmax_rep = jnp.broadcast_to(gmax, (z.shape[0], gmax.shape[1]))
    h = jnp.concatenate([z, gmax_rep], axis=1)
    h = _mlp_ref(h, params["out_block"])
    wf, bf = params["fcfinal"]
    h = h @ wf + bf
    h = _mlp_ref(h, params["decoder"])
    return h


# ----------------------------- Main ------------------------------------------
if __name__ == "__main__":
    base_nb = 8
    encoder = [4, 16, 8]
    decoder = [8, 16, 4]
    n_points = 2000          # deliberately ragged: exercises the padding path

    key = jax.random.PRNGKey(0)
    k_x, k_p = jax.random.split(key)
    x = jax.random.normal(k_x, (n_points, encoder[0]), dtype=jnp.float32)
    params = make_pointnet_params(k_p, base_nb, encoder, decoder)

    out = pointnet_forward(x, params, tile=512, num_cores=2)
    out = jax.block_until_ready(out)

    ref = pointnet_ref(x, params)
    assert out.shape == (n_points, decoder[-1]), out.shape
    # bf16 matmul operands with f32 accumulation vs pure-f32 reference.
    np.testing.assert_allclose(np.asarray(out), np.asarray(ref),
                               rtol=5e-2, atol=5e-2)
    print("KERNEL_OK")
</pallas_src>

<mosaic_0001>
module attributes {stable_mosaic.version = 11 : i64} {
  func.func @kernel(%arg0: i32, %arg1: i32, %arg2: memref<512x4xf32, #tpu.memory_space<vmem>>, %arg3: memref<4x16xbf16, #tpu.memory_space<vmem>>, %arg4: memref<1x16xf32, #tpu.memory_space<vmem>>, %arg5: memref<16x8xbf16, #tpu.memory_space<vmem>>, %arg6: memref<1x8xf32, #tpu.memory_space<vmem>>, %arg7: memref<8x16xbf16, #tpu.memory_space<vmem>>, %arg8: memref<1x16xf32, #tpu.memory_space<vmem>>, %arg9: memref<16x32xbf16, #tpu.memory_space<vmem>>, %arg10: memref<1x32xf32, #tpu.memory_space<vmem>>, %arg11: memref<32x64xbf16, #tpu.memory_space<vmem>>, %arg12: memref<1x64xf32, #tpu.memory_space<vmem>>, %arg13: memref<64x256xbf16, #tpu.memory_space<vmem>>, %arg14: memref<1x256xf32, #tpu.memory_space<vmem>>, %arg15: memref<512x16xbf16, #tpu.memory_space<vmem>>, %arg16: memref<8x256xf32, #tpu.memory_space<vmem>>) attributes {dimension_semantics = [#tpu.dimension_semantics<parallel>, #tpu.dimension_semantics<arbitrary>], iteration_bounds = array<i64: 2, 2>, scalar_prefetch = 0 : i64, scratch_operands = 0 : i64, tpu.core_type = #tpu.core_type<tc>, window_params = [{transform_indices = @transform_0, window_bounds = array<i64: 512, 4>}, {pipeline_mode = #tpu.pipeline_mode<synchronous>, transform_indices = @transform_1, window_bounds = array<i64: 4, 16>}, {pipeline_mode = #tpu.pipeline_mode<synchronous>, transform_indices = @transform_2, window_bounds = array<i64: 1, 16>}, {pipeline_mode = #tpu.pipeline_mode<synchronous>, transform_indices = @transform_3, window_bounds = array<i64: 16, 8>}, {pipeline_mode = #tpu.pipeline_mode<synchronous>, transform_indices = @transform_4, window_bounds = array<i64: 1, 8>}, {pipeline_mode = #tpu.pipeline_mode<synchronous>, transform_indices = @transform_5, window_bounds = array<i64: 8, 16>}, {pipeline_mode = #tpu.pipeline_mode<synchronous>, transform_indices = @transform_6, window_bounds = array<i64: 1, 16>}, {pipeline_mode = #tpu.pipeline_mode<synchronous>, transform_indices = @transform_7, window_bounds = array<i64: 16, 32>}, {pipeline_mode = #tpu.pipeline_mode<synchronous>, transform_indices = @transform_8, window_bounds = array<i64: 1, 32>}, {pipeline_mode = #tpu.pipeline_mode<synchronous>, transform_indices = @transform_9, window_bounds = array<i64: 32, 64>}, {pipeline_mode = #tpu.pipeline_mode<synchronous>, transform_indices = @transform_10, window_bounds = array<i64: 1, 64>}, {pipeline_mode = #tpu.pipeline_mode<synchronous>, transform_indices = @transform_11, window_bounds = array<i64: 64, 256>}, {pipeline_mode = #tpu.pipeline_mode<synchronous>, transform_indices = @transform_12, window_bounds = array<i64: 1, 256>}, {transform_indices = @transform_13, window_bounds = array<i64: 512, 16>}, {transform_indices = @transform_14, window_bounds = array<i64: 8, 256>}]} {
    %c0 = arith.constant 0 : index
    %c0_0 = arith.constant 0 : index
    %0 = vector.load %arg2[%c0, %c0_0] : memref<512x4xf32, #tpu.memory_space<vmem>>, vector<512x4xf32>
    %c0_1 = arith.constant 0 : index
    %c0_2 = arith.constant 0 : index
    %1 = vector.load %arg3[%c0_1, %c0_2] : memref<4x16xbf16, #tpu.memory_space<vmem>>, vector<4x16xbf16>
    %c0_3 = arith.constant 0 : index
    %c0_4 = arith.constant 0 : index
    %2 = vector.load %arg4[%c0_3, %c0_4] : memref<1x16xf32, #tpu.memory_space<vmem>>, vector<1x16xf32>
    %3 = arith.truncf %0 : vector<512x4xf32> to vector<512x4xbf16>
    %cst = arith.constant dense<0.000000e+00> : vector<512x16xf32>
    %4 = tpu.matmul %3, %1, %cst {dimension_numbers = #tpu.dot_dimension_numbers<[1], [0], [0], [1], [0, 0, 1, 1], [], []>} : vector<512x4xbf16>, vector<4x16xbf16>, vector<512x16xf32> -> vector<512x16xf32>
    %5 = vector.broadcast %2 : vector<1x16xf32> to vector<512x16xf32>
    %6 = arith.addf %4, %5 : vector<512x16xf32>
    %cst_5 = arith.constant 0.000000e+00 : f32
    %7 = vector.broadcast %cst_5 : f32 to vector<512x16xf32>
    %8 = arith.maximumf %6, %7 : vector<512x16xf32>
    %c0_6 = arith.constant 0 : index
    %c0_7 = arith.constant 0 : index
    %9 = vector.load %arg5[%c0_6, %c0_7] : memref<16x8xbf16, #tpu.memory_space<vmem>>, vector<16x8xbf16>
    %c0_8 = arith.constant 0 : index
    %c0_9 = arith.constant 0 : index
    %10 = vector.load %arg6[%c0_8, %c0_9] : memref<1x8xf32, #tpu.memory_space<vmem>>, vector<1x8xf32>
    %11 = arith.truncf %8 : vector<512x16xf32> to vector<512x16xbf16>
    %cst_10 = arith.constant dense<0.000000e+00> : vector<512x8xf32>
    %12 = tpu.matmul %11, %9, %cst_10 {dimension_numbers = #tpu.dot_dimension_numbers<[1], [0], [0], [1], [0, 0, 1, 1], [], []>} : vector<512x16xbf16>, vector<16x8xbf16>, vector<512x8xf32> -> vector<512x8xf32>
    %13 = vector.broadcast %10 : vector<1x8xf32> to vector<512x8xf32>
    %14 = arith.addf %12, %13 : vector<512x8xf32>
    %cst_11 = arith.constant 0.000000e+00 : f32
    %15 = vector.broadcast %cst_11 : f32 to vector<512x8xf32>
    %16 = arith.maximumf %14, %15 : vector<512x8xf32>
    %c0_12 = arith.constant 0 : index
    %c0_13 = arith.constant 0 : index
    %17 = vector.load %arg7[%c0_12, %c0_13] : memref<8x16xbf16, #tpu.memory_space<vmem>>, vector<8x16xbf16>
    %c0_14 = arith.constant 0 : index
    %c0_15 = arith.constant 0 : index
    %18 = vector.load %arg8[%c0_14, %c0_15] : memref<1x16xf32, #tpu.memory_space<vmem>>, vector<1x16xf32>
    %19 = arith.truncf %16 : vector<512x8xf32> to vector<512x8xbf16>
    %cst_16 = arith.constant dense<0.000000e+00> : vector<512x16xf32>
    %20 = tpu.matmul %19, %17, %cst_16 {dimension_numbers = #tpu.dot_dimension_numbers<[1], [0], [0], [1], [0, 0, 1, 1], [], []>} : vector<512x8xbf16>, vector<8x16xbf16>, vector<512x16xf32> -> vector<512x16xf32>
    %21 = vector.broadcast %18 : vector<1x16xf32> to vector<512x16xf32>
    %22 = arith.addf %20, %21 : vector<512x16xf32>
    %23 = arith.truncf %22 : vector<512x16xf32> to vector<512x16xbf16>
    %c0_17 = arith.constant 0 : index
    %c0_18 = arith.constant 0 : index
    %24 = vector.load %arg15[%c0_17, %c0_18] : memref<512x16xbf16, #tpu.memory_space<vmem>>, vector<512x16xbf16>
    tpu.vector_store %arg15[%c0_17, %c0_18], %23 {strides = array<i32>} : memref<512x16xbf16, #tpu.memory_space<vmem>>, vector<512x16xbf16>,
    %c0_19 = arith.constant 0 : index
    %c0_20 = arith.constant 0 : index
    %25 = vector.load %arg9[%c0_19, %c0_20] : memref<16x32xbf16, #tpu.memory_space<vmem>>, vector<16x32xbf16>
    %c0_21 = arith.constant 0 : index
    %c0_22 = arith.constant 0 : index
    %26 = vector.load %arg10[%c0_21, %c0_22] : memref<1x32xf32, #tpu.memory_space<vmem>>, vector<1x32xf32>
    %27 = arith.truncf %22 : vector<512x16xf32> to vector<512x16xbf16>
    %cst_23 = arith.constant dense<0.000000e+00> : vector<512x32xf32>
    %28 = tpu.matmul %27, %25, %cst_23 {dimension_numbers = #tpu.dot_dimension_numbers<[1], [0], [0], [1], [0, 0, 1, 1], [], []>} : vector<512x16xbf16>, vector<16x32xbf16>, vector<512x32xf32> -> vector<512x32xf32>
    %29 = vector.broadcast %26 : vector<1x32xf32> to vector<512x32xf32>
    %30 = arith.addf %28, %29 : vector<512x32xf32>
    %cst_24 = arith.constant 0.000000e+00 : f32
    %31 = vector.broadcast %cst_24 : f32 to vector<512x32xf32>
    %32 = arith.maximumf %30, %31 : vector<512x32xf32>
    %c0_25 = arith.constant 0 : index
    %c0_26 = arith.constant 0 : index
    %33 = vector.load %arg11[%c0_25, %c0_26] : memref<32x64xbf16, #tpu.memory_space<vmem>>, vector<32x64xbf16>
    %c0_27 = arith.constant 0 : index
    %c0_28 = arith.constant 0 : index
    %34 = vector.load %arg12[%c0_27, %c0_28] : memref<1x64xf32, #tpu.memory_space<vmem>>, vector<1x64xf32>
    %35 = arith.truncf %32 : vector<512x32xf32> to vector<512x32xbf16>
    %cst_29 = arith.constant dense<0.000000e+00> : vector<512x64xf32>
    %36 = tpu.matmul %35, %33, %cst_29 {dimension_numbers = #tpu.dot_dimension_numbers<[1], [0], [0], [1], [0, 0, 1, 1], [], []>} : vector<512x32xbf16>, vector<32x64xbf16>, vector<512x64xf32> -> vector<512x64xf32>
    %37 = vector.broadcast %34 : vector<1x64xf32> to vector<512x64xf32>
    %38 = arith.addf %36, %37 : vector<512x64xf32>
    %cst_30 = arith.constant 0.000000e+00 : f32
    %39 = vector.broadcast %cst_30 : f32 to vector<512x64xf32>
    %40 = arith.maximumf %38, %39 : vector<512x64xf32>
    %c0_31 = arith.constant 0 : index
    %c0_32 = arith.constant 0 : index
    %41 = vector.load %arg13[%c0_31, %c0_32] : memref<64x256xbf16, #tpu.memory_space<vmem>>, vector<64x256xbf16>
    %c0_33 = arith.constant 0 : index
    %c0_34 = arith.constant 0 : index
    %42 = vector.load %arg14[%c0_33, %c0_34] : memref<1x256xf32, #tpu.memory_space<vmem>>, vector<1x256xf32>
    %43 = arith.truncf %40 : vector<512x64xf32> to vector<512x64xbf16>
    %cst_35 = arith.constant dense<0.000000e+00> : vector<512x256xf32>
    %44 = tpu.matmul %43, %41, %cst_35 {dimension_numbers = #tpu.dot_dimension_numbers<[1], [0], [0], [1], [0, 0, 1, 1], [], []>} : vector<512x64xbf16>, vector<64x256xbf16>, vector<512x256xf32> -> vector<512x256xf32>
    %45 = vector.broadcast %42 : vector<1x256xf32> to vector<512x256xf32>
    %46 = arith.addf %44, %45 : vector<512x256xf32>
    %cst_36 = arith.constant dense<0xFF800000> : vector<256xf32>
    %47 = vector.multi_reduction <maximumf>, %46, %cst_36 [0] : vector<512x256xf32> to vector<256xf32>
    %48 = vector.shape_cast %47 : vector<256xf32> to vector<1x256xf32>
    %49 = vector.shape_cast %48 : vector<1x256xf32> to vector<1x256xf32>
    %50 = vector.broadcast %49 : vector<1x256xf32> to vector<8x256xf32>
    %c0_i32 = arith.constant 0 : i32
    %51 = arith.cmpi eq, %arg1, %c0_i32 : i32
    %52 = arith.extui %51 : i1 to i32
    %c0_i32_37 = arith.constant 0 : i32
    %53 = arith.cmpi ne, %52, %c0_i32_37 : i32
    scf.if %53 {
      %c0_40 = arith.constant 0 : index
      %c0_41 = arith.constant 0 : index
      %57 = vector.load %arg16[%c0_40, %c0_41] : memref<8x256xf32, #tpu.memory_space<vmem>>, vector<8x256xf32>
      tpu.vector_store %arg16[%c0_40, %c0_41], %50 {strides = array<i32>} : memref<8x256xf32, #tpu.memory_space<vmem>>, vector<8x256xf32>,
    } else {
    }
    %c0_i32_38 = arith.constant 0 : i32
    %54 = arith.cmpi sgt, %arg1, %c0_i32_38 : i32
    %55 = arith.extui %54 : i1 to i32
    %c0_i32_39 = arith.constant 0 : i32
    %56 = arith.cmpi ne, %55, %c0_i32_39 : i32
    scf.if %56 {
      %c0_40 = arith.constant 0 : index
      %c0_41 = arith.constant 0 : index
      %57 = vector.load %arg16[%c0_40, %c0_41] : memref<8x256xf32, #tpu.memory_space<vmem>>, vector<8x256xf32>
      %58 = arith.maximumf %57, %50 : vector<8x256xf32>
      %c0_42 = arith.constant 0 : index
      %c0_43 = arith.constant 0 : index
      %59 = vector.load %arg16[%c0_42, %c0_43] : memref<8x256xf32, #tpu.memory_space<vmem>>, vector<8x256xf32>
      tpu.vector_store %arg16[%c0_42, %c0_43], %58 {strides = array<i32>} : memref<8x256xf32, #tpu.memory_space<vmem>>, vector<8x256xf32>,
    } else {
    }
    return
  }
  func.func @transform_0(%arg0: i32, %arg1: i32) -> (i32, i32) {
    %c2_i32 = arith.constant 2 : i32
    %0 = arith.muli %arg0, %c2_i32 : i32
    %1 = arith.addi %0, %arg1 : i32
    %c0_i32 = arith.constant 0 : i32
    %c0_i32_0 = arith.constant 0 : i32
    return %1, %c0_i32 : i32, i32
  }
  func.func @transform_1(%arg0: i32, %arg1: i32) -> (i32, i32) {
    %c0_i32 = arith.constant 0 : i32
    %c0_i32_0 = arith.constant 0 : i32
    %c0_i32_1 = arith.constant 0 : i32
    return %c0_i32, %c0_i32_0 : i32, i32
  }
  func.func @transform_2(%arg0: i32, %arg1: i32) -> (i32, i32) {
    %c0_i32 = arith.constant 0 : i32
    %c0_i32_0 = arith.constant 0 : i32
    %c0_i32_1 = arith.constant 0 : i32
    return %c0_i32, %c0_i32_0 : i32, i32
  }
  func.func @transform_3(%arg0: i32, %arg1: i32) -> (i32, i32) {
    %c0_i32 = arith.constant 0 : i32
    %c0_i32_0 = arith.constant 0 : i32
    %c0_i32_1 = arith.constant 0 : i32
    return %c0_i32, %c0_i32_0 : i32, i32
  }
  func.func @transform_4(%arg0: i32, %arg1: i32) -> (i32, i32) {
    %c0_i32 = arith.constant 0 : i32
    %c0_i32_0 = arith.constant 0 : i32
    %c0_i32_1 = arith.constant 0 : i32
    return %c0_i32, %c0_i32_0 : i32, i32
  }
  func.func @transform_5(%arg0: i32, %arg1: i32) -> (i32, i32) {
    %c0_i32 = arith.constant 0 : i32
    %c0_i32_0 = arith.constant 0 : i32
    %c0_i32_1 = arith.constant 0 : i32
    return %c0_i32, %c0_i32_0 : i32, i32
  }
  func.func @transform_6(%arg0: i32, %arg1: i32) -> (i32, i32) {
    %c0_i32 = arith.constant 0 : i32
    %c0_i32_0 = arith.constant 0 : i32
    %c0_i32_1 = arith.constant 0 : i32
    return %c0_i32, %c0_i32_0 : i32, i32
  }
  func.func @transform_7(%arg0: i32, %arg1: i32) -> (i32, i32) {
    %c0_i32 = arith.constant 0 : i32
    %c0_i32_0 = arith.constant 0 : i32
    %c0_i32_1 = arith.constant 0 : i32
    return %c0_i32, %c0_i32_0 : i32, i32
  }
  func.func @transform_8(%arg0: i32, %arg1: i32) -> (i32, i32) {
    %c0_i32 = arith.constant 0 : i32
    %c0_i32_0 = arith.constant 0 : i32
    %c0_i32_1 = arith.constant 0 : i32
    return %c0_i32, %c0_i32_0 : i32, i32
  }
  func.func @transform_9(%arg0: i32, %arg1: i32) -> (i32, i32) {
    %c0_i32 = arith.constant 0 : i32
    %c0_i32_0 = arith.constant 0 : i32
    %c0_i32_1 = arith.constant 0 : i32
    return %c0_i32, %c0_i32_0 : i32, i32
  }
  func.func @transform_10(%arg0: i32, %arg1: i32) -> (i32, i32) {
    %c0_i32 = arith.constant 0 : i32
    %c0_i32_0 = arith.constant 0 : i32
    %c0_i32_1 = arith.constant 0 : i32
    return %c0_i32, %c0_i32_0 : i32, i32
  }
  func.func @transform_11(%arg0: i32, %arg1: i32) -> (i32, i32) {
    %c0_i32 = arith.constant 0 : i32
    %c0_i32_0 = arith.constant 0 : i32
    %c0_i32_1 = arith.constant 0 : i32
    return %c0_i32, %c0_i32_0 : i32, i32
  }
  func.func @transform_12(%arg0: i32, %arg1: i32) -> (i32, i32) {
    %c0_i32 = arith.constant 0 : i32
    %c0_i32_0 = arith.constant 0 : i32
    %c0_i32_1 = arith.constant 0 : i32
    return %c0_i32, %c0_i32_0 : i32, i32
  }
  func.func @transform_13(%arg0: i32, %arg1: i32) -> (i32, i32) {
    %c2_i32 = arith.constant 2 : i32
    %0 = arith.muli %arg0, %c2_i32 : i32
    %1 = arith.addi %0, %arg1 : i32
    %c0_i32 = arith.constant 0 : i32
    %c0_i32_0 = arith.constant 0 : i32
    return %1, %c0_i32 : i32, i32
  }
  func.func @transform_14(%arg0: i32, %arg1: i32) -> (i32, i32) {
    %c0_i32 = arith.constant 0 : i32
    %c0_i32_0 = arith.constant 0 : i32
    return %arg0, %c0_i32 : i32, i32
  }
}

</mosaic_0001>

<llo_original>
// kernel: tpu_custom_call.1
$region0: #{tpu_custom_call.1}
  #allocation0 [shape = 'u32[]', space=smem, size = 0x4, offset = 0x4, fixed_abs, tag = 'smem constant byte address 0x4 - core index']
  #allocation1 [shape = 'u32[144,128]{1,0:T(1,128)}', space=vmem, size = 0x12000, scoped, tag = 'internal scratch']
  %s0 = inlined_call_operand.vmem [shape: f32[2048,4], index: 0, kind: input, shape index: {}]
  %s1 = inlined_call_operand.vmem [shape: bf16[4,16], index: 1, kind: input, shape index: {}]
  %s2 = inlined_call_operand.vmem [shape: f32[1,16], index: 2, kind: input, shape index: {}]
  %s3 = inlined_call_operand.vmem [shape: bf16[16,8], index: 3, kind: input, shape index: {}]
  %s4 = inlined_call_operand.vmem [shape: f32[1,8], index: 4, kind: input, shape index: {}]
  %s5 = inlined_call_operand.vmem [shape: bf16[8,16], index: 5, kind: input, shape index: {}]
  %s6 = inlined_call_operand.vmem [shape: f32[1,16], index: 6, kind: input, shape index: {}]
  %s7 = inlined_call_operand.vmem [shape: bf16[16,32], index: 7, kind: input, shape index: {}]
  %s8 = inlined_call_operand.vmem [shape: f32[1,32], index: 8, kind: input, shape index: {}]
  %s9 = inlined_call_operand.vmem [shape: bf16[32,64], index: 9, kind: input, shape index: {}]
  %s10 = inlined_call_operand.vmem [shape: f32[1,64], index: 10, kind: input, shape index: {}]
  %s11 = inlined_call_operand.vmem [shape: bf16[64,256], index: 11, kind: input, shape index: {}]
  %s12 = inlined_call_operand.vmem [shape: f32[1,256], index: 12, kind: input, shape index: {}]
  %s13 = inlined_call_operand.vmem [shape: bf16[2048,16], index: 13, kind: output, shape index: {0}]
  %s14 = inlined_call_operand.hbm [shape: f32[16,256], index: 14, kind: output, shape index: {1}]
  %15 = xla_tuple %s13, %s14
  %s16 = sld [smem:[#allocation0]]
  $region101: #{tpu_custom_call.1} parent=0
    _
  %s18 = ssub.s32 1, %s16
  %s19 = scalar_select 0, %s18, %s16
  $region1: #{tpu_custom_call.1} parent=0
    #allocation2 [shape = 'u8[16384]{0}', space=vmem, size = 0x4000, scoped, tag = 'output window, operand 1']
    #allocation3 [shape = 's32[2]{0}', space=sflag, size = 0x8, scoped, tag = 'scoped memory for tpu_custom_call.1']
    %20 = vsyncpa [#allocation3], 0
    %s21 = scalar_lea.sflag [#allocation3], 1
    %22 = vsyncpa %s21, 0
    loop: start=0, step=1, limit=6
    $region2: #{tpu_custom_call.1} parent=1 // loop_pre_header
      _
    $region3: #{tpu_custom_call.1} parent=1 // loop_header
      %s24 = sphi 0, %s28
      %p25 = scmp.ge.s32.totalorder %s24, 6
      %s31 = sphi 0, %s43
      %s32 = sphi 0, %s39
      %s33 = sphi 0, %s31
      %s34 = sphi 0, %s32
      %s35 = sphi 0, %s33
      %s36 = sphi 0, %s34
      %s50 = sphi 0, %s52
      %s53 = sphi 0, %s50
      %s54 = sphi 0, %s53
      %s70 = sphi 0, %s54
      %s74 = sphi 0, %s74
      %s76 = sphi 0, %s74
      %s77 = sphi 0, %s76
      %s91 = sphi 0, %s77
      %s95 = sphi 0, %s95
      %s97 = sphi 0, %s95
      %s98 = sphi 0, %s97
      %s112 = sphi 0, %s98
      %s116 = sphi 0, %s116
      %s118 = sphi 0, %s116
      %s119 = sphi 0, %s118
      %s133 = sphi 0, %s119
      %s137 = sphi 0, %s137
      %s139 = sphi 0, %s137
      %s140 = sphi 0, %s139
      %s154 = sphi 0, %s140
      %s158 = sphi 0, %s158
      %s160 = sphi 0, %s158
      %s161 = sphi 0, %s160
      %s175 = sphi 0, %s161
      %s179 = sphi 0, %s179
      %s181 = sphi 0, %s179
      %s182 = sphi 0, %s181
      %s196 = sphi 0, %s182
      %s200 = sphi 0, %s200
      %s202 = sphi 0, %s200
      %s203 = sphi 0, %s202
      %s217 = sphi 0, %s203
      %s221 = sphi 0, %s221
      %s223 = sphi 0, %s221
      %s224 = sphi 0, %s223
      %s238 = sphi 0, %s224
      %s242 = sphi 0, %s242
      %s244 = sphi 0, %s242
      %s245 = sphi 0, %s244
      %s259 = sphi 0, %s245
      %s263 = sphi 0, %s263
      %s265 = sphi 0, %s263
      %s266 = sphi 0, %s265
      %s280 = sphi 0, %s266
      %s284 = sphi 0, %s284
      %s286 = sphi 0, %s284
      %s287 = sphi 0, %s286
      %s301 = sphi 0, %s287
      %s305 = sphi 0, %s305
      %s307 = sphi 0, %s305
      %s308 = sphi 0, %s307
      %s322 = sphi 0, %s308
      %s332 = sphi 0, %s334
      %s335 = sphi 0, %s332
      %s336 = sphi 0, %s335
      %s352 = sphi 0, %s336
      %s358 = sphi 0, %s360
      %s361 = sphi 0, %s358
      %s362 = sphi 0, %s361
      %s378 = sphi 0, %s362
    $region4: #{tpu_custom_call.1} parent=1 // loop_header_branch
      %27 = sbr.rel (%p25) target = $region8
    $region5: #{tpu_custom_call.1} parent=1 // loop_body
      %s29 = ssub.s32 %s24, 1
      %s30 = ssub.s32 %s24, 2
      %s37 = sadd.s32 1, %s32
      %p38 = scmp.ge.s32.totalorder %s37, 2
      %s39 = scalar_select %p38, 0, %s37
      %s40 = sadd.s32 1, %s31
      %s41 = scalar_select %p38, %s40, %s31
      %p42 = scmp.ge.s32.totalorder %s41, 2
      %s43 = scalar_select %p42, 0, %s41
      %s44 = smul.u32 %s31, 2
      %s45 = sadd.s32 %s44, %s32
      %s46 = smul.u32 %s43, 2
      %s47 = sadd.s32 %s46, %s39
      %s48 = ssub.s32 %s45, %s47
      %p49 = scmp.eq.s32.totalorder %s48, 0
      %s51 = sadd.s32 %s50, 1
      %s52 = scalar_select %p49, %s50, %s51
      %p55 = pneg %p49
      %p56 = scmp.eq.s32.totalorder %s24, 3
      %p57 = por %p55, %p56
      %p58 = scmp.ne.s32.totalorder %s50, %s53
      %p59 = scmp.eq.s32.totalorder %s24, 0
      %p60 = por %p58, %p59
      %p61 = scmp.ne.s32.totalorder %s50, %s53
      %p62 = scmp.eq.s32.totalorder %s29, 3
      %p63 = por %p61, %p62
      %p64 = scmp.ne.s32.totalorder %s53, %s54
      %p65 = scmp.eq.s32.totalorder %s29, 0
      %p66 = por %p64, %p65
      %p67 = scmp.ne.s32.totalorder %s53, %s54
      %p68 = scmp.eq.s32.totalorder %s30, 3
      %p69 = por %p67, %p68
      %p71 = scmp.ne.s32.totalorder %s54, %s70
      %p72 = scmp.eq.s32.totalorder %s30, 0
      %p73 = por %p71, %p72
      %s75 = sadd.s32 %s74, 1
      %p78 = scmp.eq.s32.totalorder %s24, 3
      %p79 = scmp.ne.s32.totalorder %s74, %s76
      %p80 = scmp.eq.s32.totalorder %s24, 0
      %p81 = por %p79, %p80
      %p82 = scmp.ne.s32.totalorder %s74, %s76
      %p83 = scmp.eq.s32.totalorder %s29, 3
      %p84 = por %p82, %p83
      %p85 = scmp.ne.s32.totalorder %s76, %s77
      %p86 = scmp.eq.s32.totalorder %s29, 0
      %p87 = por %p85, %p86
      %p88 = scmp.ne.s32.totalorder %s76, %s77
      %p89 = scmp.eq.s32.totalorder %s30, 3
      %p90 = por %p88, %p89
      %p92 = scmp.ne.s32.totalorder %s77, %s91
      %p93 = scmp.eq.s32.totalorder %s30, 0
      %p94 = por %p92, %p93
      %s96 = sadd.s32 %s95, 1
      %p99 = scmp.eq.s32.totalorder %s24, 3
      %p100 = scmp.ne.s32.totalorder %s95, %s97
      %p101 = scmp.eq.s32.totalorder %s24, 0
      %p102 = por %p100, %p101
      %p103 = scmp.ne.s32.totalorder %s95, %s97
      %p104 = scmp.eq.s32.totalorder %s29, 3
      %p105 = por %p103, %p104
      %p106 = scmp.ne.s32.totalorder %s97, %s98
      %p107 = scmp.eq.s32.totalorder %s29, 0
      %p108 = por %p106, %p107
      %p109 = scmp.ne.s32.totalorder %s97, %s98
      %p110 = scmp.eq.s32.totalorder %s30, 3
      %p111 = por %p109, %p110
      %p113 = scmp.ne.s32.totalorder %s98, %s112
      %p114 = scmp.eq.s32.totalorder %s30, 0
      %p115 = por %p113, %p114
      %s117 = sadd.s32 %s116, 1
      %p120 = scmp.eq.s32.totalorder %s24, 3
      %p121 = scmp.ne.s32.totalorder %s116, %s118
      %p122 = scmp.eq.s32.totalorder %s24, 0
      %p123 = por %p121, %p122
      %p124 = scmp.ne.s32.totalorder %s116, %s118
      %p125 = scmp.eq.s32.totalorder %s29, 3
      %p126 = por %p124, %p125
      %p127 = scmp.ne.s32.totalorder %s118, %s119
      %p128 = scmp.eq.s32.totalorder %s29, 0
      %p129 = por %p127, %p128
      %p130 = scmp.ne.s32.totalorder %s118, %s119
      %p131 = scmp.eq.s32.totalorder %s30, 3
      %p132 = por %p130, %p131
      %p134 = scmp.ne.s32.totalorder %s119, %s133
      %p135 = scmp.eq.s32.totalorder %s30, 0
      %p136 = por %p134, %p135
      %s138 = sadd.s32 %s137, 1
      %p141 = scmp.eq.s32.totalorder %s24, 3
      %p142 = scmp.ne.s32.totalorder %s137, %s139
      %p143 = scmp.eq.s32.totalorder %s24, 0
      %p144 = por %p142, %p143
      %p145 = scmp.ne.s32.totalorder %s137, %s139
      %p146 = scmp.eq.s32.totalorder %s29, 3
      %p147 = por %p145, %p146
      %p148 = scmp.ne.s32.totalorder %s139, %s140
      %p149 = scmp.eq.s32.totalorder %s29, 0
      %p150 = por %p148, %p149
      %p151 = scmp.ne.s32.totalorder %s139, %s140
      %p152 = scmp.eq.s32.totalorder %s30, 3
      %p153 = por %p151, %p152
      %p155 = scmp.ne.s32.totalorder %s140, %s154
      %p156 = scmp.eq.s32.totalorder %s30, 0
      %p157 = por %p155, %p156
      %s159 = sadd.s32 %s158, 1
      %p162 = scmp.eq.s32.totalorder %s24, 3
      %p163 = scmp.ne.s32.totalorder %s158, %s160
      %p164 = scmp.eq.s32.totalorder %s24, 0
      %p165 = por %p163, %p164
      %p166 = scmp.ne.s32.totalorder %s158, %s160
      %p167 = scmp.eq.s32.totalorder %s29, 3
      %p168 = por %p166, %p167
      %p169 = scmp.ne.s32.totalorder %s160, %s161
      %p170 = scmp.eq.s32.totalorder %s29, 0
      %p171 = por %p169, %p170
      %p172 = scmp.ne.s32.totalorder %s160, %s161
      %p173 = scmp.eq.s32.totalorder %s30, 3
      %p174 = por %p172, %p173
      %p176 = scmp.ne.s32.totalorder %s161, %s175
      %p177 = scmp.eq.s32.totalorder %s30, 0
      %p178 = por %p176, %p177
      %s180 = sadd.s32 %s179, 1
      %p183 = scmp.eq.s32.totalorder %s24, 3
      %p184 = scmp.ne.s32.totalorder %s179, %s181
      %p185 = scmp.eq.s32.totalorder %s24, 0
      %p186 = por %p184, %p185
      %p187 = scmp.ne.s32.totalorder %s179, %s181
      %p188 = scmp.eq.s32.totalorder %s29, 3
      %p189 = por %p187, %p188
      %p190 = scmp.ne.s32.totalorder %s181, %s182
      %p191 = scmp.eq.s32.totalorder %s29, 0
      %p192 = por %p190, %p191
      %p193 = scmp.ne.s32.totalorder %s181, %s182
      %p194 = scmp.eq.s32.totalorder %s30, 3
      %p195 = por %p193, %p194
      %p197 = scmp.ne.s32.totalorder %s182, %s196
      %p198 = scmp.eq.s32.totalorder %s30, 0
      %p199 = por %p197, %p198
      %s201 = sadd.s32 %s200, 1
      %p204 = scmp.eq.s32.totalorder %s24, 3
      %p205 = scmp.ne.s32.totalorder %s200, %s202
      %p206 = scmp.eq.s32.totalorder %s24, 0
      %p207 = por %p205, %p206
      %p208 = scmp.ne.s32.totalorder %s200, %s202
      %p209 = scmp.eq.s32.totalorder %s29, 3
      %p210 = por %p208, %p209
      %p211 = scmp.ne.s32.totalorder %s202, %s203
      %p212 = scmp.eq.s32.totalorder %s29, 0
      %p213 = por %p211, %p212
      %p214 = scmp.ne.s32.totalorder %s202, %s203
      %p215 = scmp.eq.s32.totalorder %s30, 3
      %p216 = por %p214, %p215
      %p218 = scmp.ne.s32.totalorder %s203, %s217
      %p219 = scmp.eq.s32.totalorder %s30, 0
      %p220 = por %p218, %p219
      %s222 = sadd.s32 %s221, 1
      %p225 = scmp.eq.s32.totalorder %s24, 3
      %p226 = scmp.ne.s32.totalorder %s221, %s223
      %p227 = scmp.eq.s32.totalorder %s24, 0
      %p228 = por %p226, %p227
      %p229 = scmp.ne.s32.totalorder %s221, %s223
      %p230 = scmp.eq.s32.totalorder %s29, 3
      %p231 = por %p229, %p230
      %p232 = scmp.ne.s32.totalorder %s223, %s224
      %p233 = scmp.eq.s32.totalorder %s29, 0
      %p234 = por %p232, %p233
      %p235 = scmp.ne.s32.totalorder %s223, %s224
      %p236 = scmp.eq.s32.totalorder %s30, 3
      %p237 = por %p235, %p236
      %p239 = scmp.ne.s32.totalorder %s224, %s238
      %p240 = scmp.eq.s32.totalorder %s30, 0
      %p241 = por %p239, %p240
      %s243 = sadd.s32 %s242, 1
      %p246 = scmp.eq.s32.totalorder %s24, 3
      %p247 = scmp.ne.s32.totalorder %s242, %s244
      %p248 = scmp.eq.s32.totalorder %s24, 0
      %p249 = por %p247, %p248
      %p250 = scmp.ne.s32.totalorder %s242, %s244
      %p251 = scmp.eq.s32.totalorder %s29, 3
      %p252 = por %p250, %p251
      %p253 = scmp.ne.s32.totalorder %s244, %s245
      %p254 = scmp.eq.s32.totalorder %s29, 0
      %p255 = por %p253, %p254
      %p256 = scmp.ne.s32.totalorder %s244, %s245
      %p257 = scmp.eq.s32.totalorder %s30, 3
      %p258 = por %p256, %p257
      %p260 = scmp.ne.s32.totalorder %s245, %s259
      %p261 = scmp.eq.s32.totalorder %s30, 0
      %p262 = por %p260, %p261
      %s264 = sadd.s32 %s263, 1
      %p267 = scmp.eq.s32.totalorder %s24, 3
      %p268 = scmp.ne.s32.totalorder %s263, %s265
      %p269 = scmp.eq.s32.totalorder %s24, 0
      %p270 = por %p268, %p269
      %p271 = scmp.ne.s32.totalorder %s263, %s265
      %p272 = scmp.eq.s32.totalorder %s29, 3
      %p273 = por %p271, %p272
      %p274 = scmp.ne.s32.totalorder %s265, %s266
      %p275 = scmp.eq.s32.totalorder %s29, 0
      %p276 = por %p274, %p275
      %p277 = scmp.ne.s32.totalorder %s265, %s266
      %p278 = scmp.eq.s32.totalorder %s30, 3
      %p279 = por %p277, %p278
      %p281 = scmp.ne.s32.totalorder %s266, %s280
      %p282 = scmp.eq.s32.totalorder %s30, 0
      %p283 = por %p281, %p282
      %s285 = sadd.s32 %s284, 1
      %p288 = scmp.eq.s32.totalorder %s24, 3
      %p289 = scmp.ne.s32.totalorder %s284, %s286
      %p290 = scmp.eq.s32.totalorder %s24, 0
      %p291 = por %p289, %p290
      %p292 = scmp.ne.s32.totalorder %s284, %s286
      %p293 = scmp.eq.s32.totalorder %s29, 3
      %p294 = por %p292, %p293
      %p295 = scmp.ne.s32.totalorder %s286, %s287
      %p296 = scmp.eq.s32.totalorder %s29, 0
      %p297 = por %p295, %p296
      %p298 = scmp.ne.s32.totalorder %s286, %s287
      %p299 = scmp.eq.s32.totalorder %s30, 3
      %p300 = por %p298, %p299
      %p302 = scmp.ne.s32.totalorder %s287, %s301
      %p303 = scmp.eq.s32.totalorder %s30, 0
      %p304 = por %p302, %p303
      %s306 = sadd.s32 %s305, 1
      %p309 = scmp.eq.s32.totalorder %s24, 3
      %p310 = scmp.ne.s32.totalorder %s305, %s307
      %p311 = scmp.eq.s32.totalorder %s24, 0
      %p312 = por %p310, %p311
      %p313 = scmp.ne.s32.totalorder %s305, %s307
      %p314 = scmp.eq.s32.totalorder %s29, 3
      %p315 = por %p313, %p314
      %p316 = scmp.ne.s32.totalorder %s307, %s308
      %p317 = scmp.eq.s32.totalorder %s29, 0
      %p318 = por %p316, %p317
      %p319 = scmp.ne.s32.totalorder %s307, %s308
      %p320 = scmp.eq.s32.totalorder %s30, 3
      %p321 = por %p319, %p320
      %p323 = scmp.ne.s32.totalorder %s308, %s322
      %p324 = scmp.eq.s32.totalorder %s30, 0
      %p325 = por %p323, %p324
      %s326 = smul.u32 %s31, 2
      %s327 = sadd.s32 %s326, %s32
      %s328 = smul.u32 %s43, 2
      %s329 = sadd.s32 %s328, %s39
      %s330 = ssub.s32 %s327, %s329
      %p331 = scmp.eq.s32.totalorder %s330, 0
      %s333 = sadd.s32 %s332, 1
      %s334 = scalar_select %p331, %s332, %s333
      %p337 = pneg %p331
      %p338 = scmp.eq.s32.totalorder %s24, 3
      %p339 = por %p337, %p338
      %p340 = scmp.ne.s32.totalorder %s332, %s335
      %p341 = scmp.eq.s32.totalorder %s24, 0
      %p342 = por %p340, %p341
      %p343 = scmp.ne.s32.totalorder %s332, %s335
      %p344 = scmp.eq.s32.totalorder %s29, 3
      %p345 = por %p343, %p344
      %p346 = scmp.ne.s32.totalorder %s335, %s336
      %p347 = scmp.eq.s32.totalorder %s29, 0
      %p348 = por %p346, %p347
      %p349 = scmp.ne.s32.totalorder %s335, %s336
      %p350 = scmp.eq.s32.totalorder %s30, 3
      %p351 = por %p349, %p350
      %p353 = scmp.ne.s32.totalorder %s336, %s352
      %p354 = scmp.eq.s32.totalorder %s30, 0
      %p355 = por %p353, %p354
      %s356 = ssub.s32 %s31, %s43
      %p357 = scmp.eq.s32.totalorder %s356, 0
      %s359 = sadd.s32 %s358, 1
      %s360 = scalar_select %p357, %s358, %s359
      %p363 = pneg %p357
      %p364 = scmp.eq.s32.totalorder %s24, 3
      %p365 = por %p363, %p364
      %p366 = scmp.ne.s32.totalorder %s358, %s361
      %p367 = scmp.eq.s32.totalorder %s24, 0
      %p368 = por %p366, %p367
      %p369 = scmp.ne.s32.totalorder %s358, %s361
      %p370 = scmp.eq.s32.totalorder %s29, 3
      %p371 = por %p369, %p370
      %p372 = scmp.ne.s32.totalorder %s361, %s362
      %p373 = scmp.eq.s32.totalorder %s29, 0
      %p374 = por %p372, %p373
      %p375 = scmp.ne.s32.totalorder %s361, %s362
      %p376 = scmp.eq.s32.totalorder %s30, 3
      %p377 = por %p375, %p376
      %p379 = scmp.ne.s32.totalorder %s362, %s378
      %p380 = scmp.eq.s32.totalorder %s30, 0
      %p381 = por %p379, %p380
      %p382 = scmp.le.s32.totalorder 1, %s24
      %p383 = scmp.lt.s32.totalorder %s24, 5
      %p384 = pnand %p382, %p383
      %p385 = pneg %p384
      // Predicated region
      $region9: #{tpu_custom_call.1} parent=5 // pred_check
        _
      $region10: #{tpu_custom_call.1} parent=5 // pred_check_branch
        %387 = sbr.rel (%p384) target = $region12
      $region11: #{tpu_custom_call.1} parent=5 // pred_region
        %s388 = ssub.s32 %s24, 1
        // Predicated region
        $region13: #{tpu_custom_call.1} parent=11 // pred_check
          %p389 = pneg %p87
        $region14: #{tpu_custom_call.1} parent=11 // pred_check_branch
          %391 = sbr.rel (%p389) target = $region16
        $region15: #{tpu_custom_call.1} parent=11 // pred_region
          _
        $region16: #{tpu_custom_call.1} parent=11 // pred_fallthru
          _
        // Predicated region
        $region17: #{tpu_custom_call.1} parent=11 // pred_check
          %p392 = pneg %p108
        $region18: #{tpu_custom_call.1} parent=11 // pred_check_branch
          %394 = sbr.rel (%p392) target = $region20
        $region19: #{tpu_custom_call.1} parent=11 // pred_region
          _
        $region20: #{tpu_custom_call.1} parent=11 // pred_fallthru
          _
        // Predicated region
        $region21: #{tpu_custom_call.1} parent=11 // pred_check
          %p395 = pneg %p129
        $region22: #{tpu_custom_call.1} parent=11 // pred_check_branch
          %397 = sbr.rel (%p395) target = $region24
        $region23: #{tpu_custom_call.1} parent=11 // pred_region
          _
        $region24: #{tpu_custom_call.1} parent=11 // pred_fallthru
          _
        // Predicated region
        $region25: #{tpu_custom_call.1} parent=11 // pred_check
          %p398 = pneg %p150
        $region26: #{tpu_custom_call.1} parent=11 // pred_check_branch
          %400 = sbr.rel (%p398) target = $region28
        $region27: #{tpu_custom_call.1} parent=11 // pred_region
          _
        $region28: #{tpu_custom_call.1} parent=11 // pred_fallthru
          _
        // Predicated region
        $region29: #{tpu_custom_call.1} parent=11 // pred_check
          %p401 = pneg %p171
        $region30: #{tpu_custom_call.1} parent=11 // pred_check_branch
          %403 = sbr.rel (%p401) target = $region32
        $region31: #{tpu_custom_call.1} parent=11 // pred_region
          _
        $region32: #{tpu_custom_call.1} parent=11 // pred_fallthru
          _
        // Predicated region
        $region33: #{tpu_custom_call.1} parent=11 // pred_check
          %p404 = pneg %p192
        $region34: #{tpu_custom_call.1} parent=11 // pred_check_branch
          %406 = sbr.rel (%p404) target = $region36
        $region35: #{tpu_custom_call.1} parent=11 // pred_region
          _
        $region36: #{tpu_custom_call.1} parent=11 // pred_fallthru
          _
        // Predicated region
        $region37: #{tpu_custom_call.1} parent=11 // pred_check
          %p407 = pneg %p213
        $region38: #{tpu_custom_call.1} parent=11 // pred_check_branch
          %409 = sbr.rel (%p407) target = $region40
        $region39: #{tpu_custom_call.1} parent=11 // pred_region
          _
        $region40: #{tpu_custom_call.1} parent=11 // pred_fallthru
          _
        // Predicated region
        $region41: #{tpu_custom_call.1} parent=11 // pred_check
          %p410 = pneg %p234
        $region42: #{tpu_custom_call.1} parent=11 // pred_check_branch
          %412 = sbr.rel (%p410) target = $region44
        $region43: #{tpu_custom_call.1} parent=11 // pred_region
          _
        $region44: #{tpu_custom_call.1} parent=11 // pred_fallthru
          _
        // Predicated region
        $region45: #{tpu_custom_call.1} parent=11 // pred_check
          %p413 = pneg %p255
        $region46: #{tpu_custom_call.1} parent=11 // pred_check_branch
          %415 = sbr.rel (%p413) target = $region48
        $region47: #{tpu_custom_call.1} parent=11 // pred_region
          _
        $region48: #{tpu_custom_call.1} parent=11 // pred_fallthru
          _
        // Predicated region
        $region49: #{tpu_custom_call.1} parent=11 // pred_check
          %p416 = pneg %p276
        $region50: #{tpu_custom_call.1} parent=11 // pred_check_branch
          %418 = sbr.rel (%p416) target = $region52
        $region51: #{tpu_custom_call.1} parent=11 // pred_region
          _
        $region52: #{tpu_custom_call.1} parent=11 // pred_fallthru
          _
        // Predicated region
        $region53: #{tpu_custom_call.1} parent=11 // pred_check
          %p419 = pneg %p297
        $region54: #{tpu_custom_call.1} parent=11 // pred_check_branch
          %421 = sbr.rel (%p419) target = $region56
        $region55: #{tpu_custom_call.1} parent=11 // pred_region
          _
        $region56: #{tpu_custom_call.1} parent=11 // pred_fallthru
          _
        // Predicated region
        $region57: #{tpu_custom_call.1} parent=11 // pred_check
          %p422 = pneg %p318
        $region58: #{tpu_custom_call.1} parent=11 // pred_check_branch
          %424 = sbr.rel (%p422) target = $region60
        $region59: #{tpu_custom_call.1} parent=11 // pred_region
          _
        $region60: #{tpu_custom_call.1} parent=11 // pred_fallthru
          _
      $region12: #{tpu_custom_call.1} parent=5 // pred_fallthru
        _
      %p425 = scmp.lt.s32.totalorder %s24, 4
      // Predicated region
      $region61: #{tpu_custom_call.1} parent=5 // pred_check
        %p426 = pneg %p425
      $region62: #{tpu_custom_call.1} parent=5 // pred_check_branch
        %428 = sbr.rel (%p426) target = $region64
      $region63: #{tpu_custom_call.1} parent=5 // pred_region
        // Predicated region
        $region65: #{tpu_custom_call.1} parent=63 // pred_check
          %p429 = pneg %p60
        $region66: #{tpu_custom_call.1} parent=63 // pred_check_branch
          %431 = sbr.rel (%p429) target = $region68
        $region67: #{tpu_custom_call.1} parent=63 // pred_region
          %s432 = smul.u32 %s31, 2
          %s433 = sadd.s32 %s432, %s32
          %s434 = smul.u32 64, %s433
          %p435 = scmp.lt.s32.totalorder %s434, 255
          %s436 = scalar_select %p435, %s434, 255
          %s437 = smul.addr %s436, 8
          %s438 = scalar_lea.vmem %s0, %s437
          %s439 = smul.u32 %s31, 2
          %s440 = sadd.s32 %s439, %s32
          %s441 = smul.u32 64, %s440
        $region68: #{tpu_custom_call.1} parent=63 // pred_fallthru
          _
      $region64: #{tpu_custom_call.1} parent=5 // pred_fallthru
        _
      %p442 = scmp.le.s32.totalorder 1, %s24
      %p443 = scmp.lt.s32.totalorder %s24, 5
      %p444 = pnand %p442, %p443
      %p445 = pneg %p444
      // Predicated region
      $region69: #{tpu_custom_call.1} parent=5 // pred_check
        _
      $region70: #{tpu_custom_call.1} parent=5 // pred_check_branch
        %447 = sbr.rel (%p444) target = $region72
      $region71: #{tpu_custom_call.1} parent=5 // pred_region
        %s448 = ssub.s32 %s24, 1
        %s449 = smul.u32 %s33, 2
        %s450 = sadd.s32 %s449, %s34
        %s451 = smul.u32 64, %s450
        %p452 = scmp.lt.s32.totalorder %s451, 255
        %s453 = scalar_select %p452, %s451, 255
        %s454 = smul.addr %s453, 8
        %s455 = scalar_lea.vmem %s0, %s454
        %p456 = pneg %p66
        %p457 = pneg %p63
        %p458 = pneg %p87
        %p459 = pneg %p84
        %p460 = pneg %p108
        %p461 = pneg %p105
        %p462 = pneg %p129
        %p463 = pneg %p126
        %p464 = pneg %p150
        %p465 = pneg %p147
        %p466 = pneg %p171
        %p467 = pneg %p168
        %p468 = pneg %p192
        %p469 = pneg %p189
        %p470 = pneg %p213
        %p471 = pneg %p210
        %p472 = pneg %p234
        %p473 = pneg %p231
        %p474 = pneg %p255
        %p475 = pneg %p252
        %p476 = pneg %p276
        %p477 = pneg %p273
        %p478 = pneg %p297
        %p479 = pneg %p294
        %p480 = pneg %p318
        %p481 = pneg %p315
        %p482 = pneg %p348
        %p483 = pneg %p345
        %s484 = smul.u32 %s33, 2
        %s485 = sadd.s32 %s484, %s34
        %s486 = smul.u32 64, %s485
        %p487 = scmp.lt.s32.totalorder %s486, 255
        %s488 = scalar_select %p487, %s486, 255
        %s489 = smul.addr %s488, 4
        %s490 = scalar_lea.vmem %s13, %s489
        %p491 = pneg %p374
        %p492 = pneg %p371
        %s493 = sand.u32 %s361, 1
        %s494 = scalar_lea.sflag [#allocation3], %s493
        %s495 = sand.u32 %s361, 1
        %s496 = smul.addr %s495, 16
        %s497 = scalar_lea.vmem [#allocation2], %s496
        %s498 = smul.u32 %s33, 2
        %s499 = sadd.s32 %s498, %s34
        %s500 = smul.u32 64, %s499
        %p501 = scmp.lt.s32.totalorder %s500, 255
        %s502 = scalar_select %p501, %s500, 255
        %s503 = smul.addr %s502, 8
        %s504 = scalar_lea.vmem %s0, %s503
        %s505 = smul.u32 %s33, 2
        %s506 = sadd.s32 %s505, %s34
        %s507 = smul.u32 64, %s506
        %s508 = smul.u32 %s33, 2
        %s509 = sadd.s32 %s508, %s34
        %s510 = smul.u32 64, %s509
        %p511 = scmp.lt.s32.totalorder %s510, 255
        %s512 = scalar_select %p511, %s510, 255
        %s513 = smul.addr %s512, 4
        %s514 = scalar_lea.vmem %s13, %s513
        %s515 = smul.u32 %s33, 2
        %s516 = sadd.s32 %s515, %s34
        %s517 = smul.u32 64, %s516
        %v519 = vld [vmem:[%s504] sm:$0xff]
        %v520 = vld [vmem:[%s504 + $0x8] sm:$0xff]
        %v521 = vld [vmem:[%s504 + $0x10] sm:$0xff]
        %v522 = vld [vmem:[%s504 + $0x18] sm:$0xff]
        %v523 = vld [vmem:[%s504 + $0x20] sm:$0xff]
        %v524 = vld [vmem:[%s504 + $0x28] sm:$0xff]
        %v525 = vld [vmem:[%s504 + $0x30] sm:$0xff]
        %v526 = vld [vmem:[%s504 + $0x38] sm:$0xff]
        %v527 = vld [vmem:[%s504 + $0x40] sm:$0xff]
        %v528 = vld [vmem:[%s504 + $0x48] sm:$0xff]
        %v529 = vld [vmem:[%s504 + $0x50] sm:$0xff]
        %v530 = vld [vmem:[%s504 + $0x58] sm:$0xff]
        %v531 = vld [vmem:[%s504 + $0x60] sm:$0xff]
        %v532 = vld [vmem:[%s504 + $0x68] sm:$0xff]
        %v533 = vld [vmem:[%s504 + $0x70] sm:$0xff]
        %v534 = vld [vmem:[%s504 + $0x78] sm:$0xff]
        %v535 = vld [vmem:[%s504 + $0x80] sm:$0xff]
        %v536 = vld [vmem:[%s504 + $0x88] sm:$0xff]
        %v537 = vld [vmem:[%s504 + $0x90] sm:$0xff]
        %v538 = vld [vmem:[%s504 + $0x98] sm:$0xff]
        %v539 = vld [vmem:[%s504 + $0xa0] sm:$0xff]
        %v540 = vld [vmem:[%s504 + $0xa8] sm:$0xff]
        %v541 = vld [vmem:[%s504 + $0xb0] sm:$0xff]
        %v542 = vld [vmem:[%s504 + $0xb8] sm:$0xff]
        %v543 = vld [vmem:[%s504 + $0xc0] sm:$0xff]
        %v544 = vld [vmem:[%s504 + $0xc8] sm:$0xff]
        %v545 = vld [vmem:[%s504 + $0xd0] sm:$0xff]
        %v546 = vld [vmem:[%s504 + $0xd8] sm:$0xff]
        %v547 = vld [vmem:[%s504 + $0xe0] sm:$0xff]
        %v548 = vld [vmem:[%s504 + $0xe8] sm:$0xff]
        %v549 = vld [vmem:[%s504 + $0xf0] sm:$0xff]
        %v550 = vld [vmem:[%s504 + $0xf8] sm:$0xff]
        %v551 = vld [vmem:[%s504 + $0x100] sm:$0xff]
        %v552 = vld [vmem:[%s504 + $0x108] sm:$0xff]
        %v553 = vld [vmem:[%s504 + $0x110] sm:$0xff]
        %v554 = vld [vmem:[%s504 + $0x118] sm:$0xff]
        %v555 = vld [vmem:[%s504 + $0x120] sm:$0xff]
        %v556 = vld [vmem:[%s504 + $0x128] sm:$0xff]
        %v557 = vld [vmem:[%s504 + $0x130] sm:$0xff]
        %v558 = vld [vmem:[%s504 + $0x138] sm:$0xff]
        %v559 = vld [vmem:[%s504 + $0x140] sm:$0xff]
        %v560 = vld [vmem:[%s504 + $0x148] sm:$0xff]
        %v561 = vld [vmem:[%s504 + $0x150] sm:$0xff]
        %v562 = vld [vmem:[%s504 + $0x158] sm:$0xff]
        %v563 = vld [vmem:[%s504 + $0x160] sm:$0xff]
        %v564 = vld [vmem:[%s504 + $0x168] sm:$0xff]
        %v565 = vld [vmem:[%s504 + $0x170] sm:$0xff]
        %v566 = vld [vmem:[%s504 + $0x178] sm:$0xff]
        %v567 = vld [vmem:[%s504 + $0x180] sm:$0xff]
        %v568 = vld [vmem:[%s504 + $0x188] sm:$0xff]
        %v569 = vld [vmem:[%s504 + $0x190] sm:$0xff]
        %v570 = vld [vmem:[%s504 + $0x198] sm:$0xff]
        %v571 = vld [vmem:[%s504 + $0x1a0] sm:$0xff]
        %v572 = vld [vmem:[%s504 + $0x1a8] sm:$0xff]
        %v573 = vld [vmem:[%s504 + $0x1b0] sm:$0xff]
        %v574 = vld [vmem:[%s504 + $0x1b8] sm:$0xff]
        %v575 = vld [vmem:[%s504 + $0x1c0] sm:$0xff]
        %v576 = vld [vmem:[%s504 + $0x1c8] sm:$0xff]
        %v577 = vld [vmem:[%s504 + $0x1d0] sm:$0xff]
        %v578 = vld [vmem:[%s504 + $0x1d8] sm:$0xff]
        %v579 = vld [vmem:[%s504 + $0x1e0] sm:$0xff]
        %v580 = vld [vmem:[%s504 + $0x1e8] sm:$0xff]
        %v581 = vld [vmem:[%s504 + $0x1f0] sm:$0xff]
        %v582 = vld [vmem:[%s504 + $0x1f8] sm:$0xff]
        %v583 = vld [vmem:[%s1] sm:$0x3]
        %v584 = vld [vmem:[%s2] sm:$0x1]
        %v585 = vpack.c.bf16 %v520, %v519
        %v586 = vpack.c.bf16 %v522, %v521
        %v587 = vpack.c.bf16 %v524, %v523
        %v588 = vpack.c.bf16 %v526, %v525
        %v589 = vpack.c.bf16 %v528, %v527
        %v590 = vpack.c.bf16 %v530, %v529
        %v591 = vpack.c.bf16 %v532, %v531
        %v592 = vpack.c.bf16 %v534, %v533
        %v593 = vpack.c.bf16 %v536, %v535
        %v594 = vpack.c.bf16 %v538, %v537
        %v595 = vpack.c.bf16 %v540, %v539
        %v596 = vpack.c.bf16 %v542, %v541
        %v597 = vpack.c.bf16 %v544, %v543
        %v598 = vpack.c.bf16 %v546, %v545
        %v599 = vpack.c.bf16 %v548, %v547
        %v600 = vpack.c.bf16 %v550, %v549
        %v601 = vpack.c.bf16 %v552, %v551
        %v602 = vpack.c.bf16 %v554, %v553
        %v603 = vpack.c.bf16 %v556, %v555
        %v604 = vpack.c.bf16 %v558, %v557
        %v605 = vpack.c.bf16 %v560, %v559
        %v606 = vpack.c.bf16 %v562, %v561
        %v607 = vpack.c.bf16 %v564, %v563
        %v608 = vpack.c.bf16 %v566, %v565
        %v609 = vpack.c.bf16 %v568, %v567
        %v610 = vpack.c.bf16 %v570, %v569
        %v611 = vpack.c.bf16 %v572, %v571
        %v612 = vpack.c.bf16 %v574, %v573
        %v613 = vpack.c.bf16 %v576, %v575
        %v614 = vpack.c.bf16 %v578, %v577
        %v615 = vpack.c.bf16 %v580, %v579
        %v616 = vpack.c.bf16 %v582, %v581
        %v618 = vlaneseq
        %v619 = vshrl.u32 %v618, 7
        %v620 = vsub.s32 0, %v619
        %v621 = vrot.slane %v584, %v620
        %vm623 = vcmask 31744
        %v625 = vsel %vm623, %v585, 0
        %v628 = vsel %vm623, %v586, 0
        %v631 = vsel %vm623, %v587, 0
        %v634 = vsel %vm623, %v588, 0
        %v637 = vsel %vm623, %v589, 0
        %v640 = vsel %vm623, %v590, 0
        %v643 = vsel %vm623, %v591, 0
        %v646 = vsel %vm623, %v592, 0
        %v649 = vsel %vm623, %v593, 0
        %v652 = vsel %vm623, %v594, 0
        %v655 = vsel %vm623, %v595, 0
        %v658 = vsel %vm623, %v596, 0
        %v661 = vsel %vm623, %v597, 0
        %v664 = vsel %vm623, %v598, 0
        %v667 = vsel %vm623, %v599, 0
        %v670 = vsel %vm623, %v600, 0
        %v673 = vsel %vm623, %v601, 0
        %v676 = vsel %vm623, %v602, 0
        %v679 = vsel %vm623, %v603, 0
        %v682 = vsel %vm623, %v604, 0
        %v685 = vsel %vm623, %v605, 0
        %v688 = vsel %vm623, %v606, 0
        %v691 = vsel %vm623, %v607, 0
        %v694 = vsel %vm623, %v608, 0
        %v697 = vsel %vm623, %v609, 0
        %v700 = vsel %vm623, %v610, 0
        %v703 = vsel %vm623, %v611, 0
        %v706 = vsel %vm623, %v612, 0
        %v709 = vsel %vm623, %v613, 0
        %v712 = vsel %vm623, %v614, 0
        %v715 = vsel %vm623, %v615, 0
        %v718 = vsel %vm623, %v616, 0
        %vm720 = vcmask 1041408
        %v722 = vsel %vm720, %v583, 0
        %724 = vmatprep.subr.bf16.mxu0 0
        %725 = vmatpush1.bf16.msra.mxu0 %v722
        %726 = vmatprep.subr.bf16.mxu0 0
        %727 = vmatpush1.bf16.msra.mxu0 0
        %728 = vmatprep.subr.bf16.mxu0 0
        %729 = vmatpush1.bf16.msra.mxu0 0
        %730 = vmatprep.subr.bf16.mxu0 0
        %731 = vmatpush1.bf16.msra.mxu0 0
        %732 = vmatprep.subr.bf16.mxu0 0
        %733 = vmatpush1.bf16.msra.mxu0 0
        %734 = vmatprep.subr.bf16.mxu0 0
        %735 = vmatpush1.bf16.msra.mxu0 0
        %736 = vmatprep.subr.bf16.mxu0 0
        %737 = vmatpush1.bf16.msra.mxu0 0
        %738 = vmatprep.subr.bf16.mxu0 0
        %739 = vmatpush1.bf16.msra.mxu0 0
        %740 = vmatprep.subr.bf16.mxu0 0
        %741 = vmatpush1.bf16.msra.mxu0 0
        %742 = vmatprep.subr.bf16.mxu0 0
        %743 = vmatpush1.bf16.msra.mxu0 0
        %744 = vmatprep.subr.bf16.mxu0 0
        %745 = vmatpush1.bf16.msra.mxu0 0
        %746 = vmatprep.subr.bf16.mxu0 0
        %747 = vmatpush1.bf16.msra.mxu0 0
        %748 = vmatprep.subr.bf16.mxu0 0
        %749 = vmatpush1.bf16.msra.mxu0 0
        %750 = vmatprep.subr.bf16.mxu0 0
        %751 = vmatpush1.bf16.msra.mxu0 0
        %752 = vmatprep.subr.bf16.mxu0 0
        %753 = vmatpush1.bf16.msra.mxu0 0
        %754 = vmatprep.subr.bf16.mxu0 0
        %755 = vmatpush1.bf16.msra.mxu0 0
        %756 = vmatprep.mubr.bf16.mxu0 0
        %757 = vmatmul.mubr.bf16.gmra.mrb[0].mxu0 %v625
        %v758 = vpop.f32.mrb[0].mxu0
        %v759 = vadd.f32 %v621, %v758
        %v760 = vpop.f32.mrb[0].mxu0
        %v761 = vpop.f32.mrb[0].mxu0
        %v762 = vadd.f32 %v621, %v761
        %v763 = vpop.f32.mrb[0].mxu0
        %764 = vmatprep.mubr.bf16.mxu0 0
        %765 = vmatmul.mubr.bf16.gmra.mrb[0].mxu0 %v628
        %v766 = vpop.f32.mrb[0].mxu0
        %v767 = vadd.f32 %v621, %v766
        %v768 = vpop.f32.mrb[0].mxu0
        %v769 = vpop.f32.mrb[0].mxu0
        %v770 = vadd.f32 %v621, %v769
        %v771 = vpop.f32.mrb[0].mxu0
        %772 = vmatprep.mubr.bf16.mxu0 0
        %773 = vmatmul.mubr.bf16.gmra.mrb[0].mxu0 %v631
        %v774 = vpop.f32.mrb[0].mxu0
        %v775 = vadd.f32 %v621, %v774
        %v776 = vpop.f32.mrb[0].mxu0
        %v777 = vpop.f32.mrb[0].mxu0
        %v778 = vadd.f32 %v621, %v777
        %v779 = vpop.f32.mrb[0].mxu0
        %780 = vmatprep.mubr.bf16.mxu0 0
        %781 = vmatmul.mubr.bf16.gmra.mrb[0].mxu0 %v634
        %v782 = vpop.f32.mrb[0].mxu0
        %v783 = vadd.f32 %v621, %v782
        %v784 = vpop.f32.mrb[0].mxu0
        %v785 = vpop.f32.mrb[0].mxu0
        %v786 = vadd.f32 %v621, %v785
        %v787 = vpop.f32.mrb[0].mxu0
        %788 = vmatprep.mubr.bf16.mxu0 0
        %789 = vmatmul.mubr.bf16.gmra.mrb[0].mxu0 %v637
        %v790 = vpop.f32.mrb[0].mxu0
        %v791 = vadd.f32 %v621, %v790
        %v792 = vpop.f32.mrb[0].mxu0
        %v793 = vpop.f32.mrb[0].mxu0
        %v794 = vadd.f32 %v621, %v793
        %v795 = vpop.f32.mrb[0].mxu0
        %796 = vmatprep.mubr.bf16.mxu0 0
        %797 = vmatmul.mubr.bf16.gmra.mrb[0].mxu0 %v640
        %v798 = vpop.f32.mrb[0].mxu0
        %v799 = vadd.f32 %v621, %v798
        %v800 = vpop.f32.mrb[0].mxu0
        %v801 = vpop.f32.mrb[0].mxu0
        %v802 = vadd.f32 %v621, %v801
        %v803 = vpop.f32.mrb[0].mxu0
        %804 = vmatprep.mubr.bf16.mxu0 0
        %805 = vmatmul.mubr.bf16.gmra.mrb[0].mxu0 %v643
        %v806 = vpop.f32.mrb[0].mxu0
        %v807 = vadd.f32 %v621, %v806
        %v808 = vpop.f32.mrb[0].mxu0
        %v809 = vpop.f32.mrb[0].mxu0
        %v810 = vadd.f32 %v621, %v809
        %v811 = vpop.f32.mrb[0].mxu0
        %812 = vmatprep.mubr.bf16.mxu0 0
        %813 = vmatmul.mubr.bf16.gmra.mrb[0].mxu0 %v646
        %v814 = vpop.f32.mrb[0].mxu0
        %v815 = vadd.f32 %v621, %v814
        %v816 = vpop.f32.mrb[0].mxu0
        %v817 = vpop.f32.mrb[0].mxu0
        %v818 = vadd.f32 %v621, %v817
        %v819 = vpop.f32.mrb[0].mxu0
        %820 = vmatprep.mubr.bf16.mxu0 0
        %821 = vmatmul.mubr.bf16.gmra.mrb[0].mxu0 %v649
        %v822 = vpop.f32.mrb[0].mxu0
        %v823 = vadd.f32 %v621, %v822
        %v824 = vpop.f32.mrb[0].mxu0
        %v825 = vpop.f32.mrb[0].mxu0
        %v826 = vadd.f32 %v621, %v825
        %v827 = vpop.f32.mrb[0].mxu0
        %828 = vmatprep.mubr.bf16.mxu0 0
        %829 = vmatmul.mubr.bf16.gmra.mrb[0].mxu0 %v652
        %v830 = vpop.f32.mrb[0].mxu0
        %v831 = vadd.f32 %v621, %v830
        %v832 = vpop.f32.mrb[0].mxu0
        %v833 = vpop.f32.mrb[0].mxu0
        %v834 = vadd.f32 %v621, %v833
        %v835 = vpop.f32.mrb[0].mxu0
        %836 = vmatprep.mubr.bf16.mxu0 0
        %837 = vmatmul.mubr.bf16.gmra.mrb[0].mxu0 %v655
        %v838 = vpop.f32.mrb[0].mxu0
        %v839 = vadd.f32 %v621, %v838
        %v840 = vpop.f32.mrb[0].mxu0
        %v841 = vpop.f32.mrb[0].mxu0
        %v842 = vadd.f32 %v621, %v841
        %v843 = vpop.f32.mrb[0].mxu0
        %844 = vmatprep.mubr.bf16.mxu0 0
        %845 = vmatmul.mubr.bf16.gmra.mrb[0].mxu0 %v658
        %v846 = vpop.f32.mrb[0].mxu0
        %v847 = vadd.f32 %v621, %v846
        %v848 = vpop.f32.mrb[0].mxu0
        %v849 = vpop.f32.mrb[0].mxu0
        %v850 = vadd.f32 %v621, %v849
        %v851 = vpop.f32.mrb[0].mxu0
        %852 = vmatprep.mubr.bf16.mxu0 0
        %853 = vmatmul.mubr.bf16.gmra.mrb[0].mxu0 %v661
        %v854 = vpop.f32.mrb[0].mxu0
        %v855 = vadd.f32 %v621, %v854
        %v856 = vpop.f32.mrb[0].mxu0
        %v857 = vpop.f32.mrb[0].mxu0
        %v858 = vadd.f32 %v621, %v857
        %v859 = vpop.f32.mrb[0].mxu0
        %860 = vmatprep.mubr.bf16.mxu0 0
        %861 = vmatmul.mubr.bf16.gmra.mrb[0].mxu0 %v664
        %v862 = vpop.f32.mrb[0].mxu0
        %v863 = vadd.f32 %v621, %v862
        %v864 = vpop.f32.mrb[0].mxu0
        %v865 = vpop.f32.mrb[0].mxu0
        %v866 = vadd.f32 %v621, %v865
        %v867 = vpop.f32.mrb[0].mxu0
        %868 = vmatprep.mubr.bf16.mxu0 0
        %869 = vmatmul.mubr.bf16.gmra.mrb[0].mxu0 %v667
        %v870 = vpop.f32.mrb[0].mxu0
        %v871 = vadd.f32 %v621, %v870
        %v872 = vpop.f32.mrb[0].mxu0
        %v873 = vpop.f32.mrb[0].mxu0
        %v874 = vadd.f32 %v621, %v873
        %v875 = vpop.f32.mrb[0].mxu0
        %876 = vmatprep.mubr.bf16.mxu0 0
        %877 = vmatmul.mubr.bf16.gmra.mrb[0].mxu0 %v670
        %v878 = vpop.f32.mrb[0].mxu0
        %v879 = vadd.f32 %v621, %v878
        %v880 = vpop.f32.mrb[0].mxu0
        %v881 = vpop.f32.mrb[0].mxu0
        %v882 = vadd.f32 %v621, %v881
        %v883 = vpop.f32.mrb[0].mxu0
        %884 = vmatprep.mubr.bf16.mxu0 0
        %885 = vmatmul.mubr.bf16.gmra.mrb[0].mxu0 %v673
        %v886 = vpop.f32.mrb[0].mxu0
        %v887 = vadd.f32 %v621, %v886
        %v888 = vpop.f32.mrb[0].mxu0
        %v889 = vpop.f32.mrb[0].mxu0
        %v890 = vadd.f32 %v621, %v889
        %v891 = vpop.f32.mrb[0].mxu0
        %892 = vmatprep.mubr.bf16.mxu0 0
        %893 = vmatmul.mubr.bf16.gmra.mrb[0].mxu0 %v676
        %v894 = vpop.f32.mrb[0].mxu0
        %v895 = vadd.f32 %v621, %v894
        %v896 = vpop.f32.mrb[0].mxu0
        %v897 = vpop.f32.mrb[0].mxu0
        %v898 = vadd.f32 %v621, %v897
        %v899 = vpop.f32.mrb[0].mxu0
        %900 = vmatprep.mubr.bf16.mxu0 0
        %901 = vmatmul.mubr.bf16.gmra.mrb[0].mxu0 %v679
        %v902 = vpop.f32.mrb[0].mxu0
        %v903 = vadd.f32 %v621, %v902
        %v904 = vpop.f32.mrb[0].mxu0
        %v905 = vpop.f32.mrb[0].mxu0
        %v906 = vadd.f32 %v621, %v905
        %v907 = vpop.f32.mrb[0].mxu0
        %908 = vmatprep.mubr.bf16.mxu0 0
        %909 = vmatmul.mubr.bf16.gmra.mrb[0].mxu0 %v682
        %v910 = vpop.f32.mrb[0].mxu0
        %v911 = vadd.f32 %v621, %v910
        %v912 = vpop.f32.mrb[0].mxu0
        %v913 = vpop.f32.mrb[0].mxu0
        %v914 = vadd.f32 %v621, %v913
        %v915 = vpop.f32.mrb[0].mxu0
        %916 = vmatprep.mubr.bf16.mxu0 0
        %917 = vmatmul.mubr.bf16.gmra.mrb[0].mxu0 %v685
        %v918 = vpop.f32.mrb[0].mxu0
        %v919 = vadd.f32 %v621, %v918
        %v920 = vpop.f32.mrb[0].mxu0
        %v921 = vpop.f32.mrb[0].mxu0
        %v922 = vadd.f32 %v621, %v921
        %v923 = vpop.f32.mrb[0].mxu0
        %924 = vmatprep.mubr.bf16.mxu0 0
        %925 = vmatmul.mubr.bf16.gmra.mrb[0].mxu0 %v688
        %v926 = vpop.f32.mrb[0].mxu0
        %v927 = vadd.f32 %v621, %v926
        %v928 = vpop.f32.mrb[0].mxu0
        %v929 = vpop.f32.mrb[0].mxu0
        %v930 = vadd.f32 %v621, %v929
        %v931 = vpop.f32.mrb[0].mxu0
        %932 = vmatprep.mubr.bf16.mxu0 0
        %933 = vmatmul.mubr.bf16.gmra.mrb[0].mxu0 %v691
        %v934 = vpop.f32.mrb[0].mxu0
        %v935 = vadd.f32 %v621, %v934
        %v936 = vpop.f32.mrb[0].mxu0
        %v937 = vpop.f32.mrb[0].mxu0
        %v938 = vadd.f32 %v621, %v937
        %v939 = vpop.f32.mrb[0].mxu0
        %940 = vmatprep.mubr.bf16.mxu0 0
        %941 = vmatmul.mubr.bf16.gmra.mrb[0].mxu0 %v694
        %v942 = vpop.f32.mrb[0].mxu0
        %v943 = vadd.f32 %v621, %v942
        %v944 = vpop.f32.mrb[0].mxu0
        %v945 = vpop.f32.mrb[0].mxu0
        %v946 = vadd.f32 %v621, %v945
        %v947 = vpop.f32.mrb[0].mxu0
        %948 = vmatprep.mubr.bf16.mxu0 0
        %949 = vmatmul.mubr.bf16.gmra.mrb[0].mxu0 %v697
        %v950 = vpop.f32.mrb[0].mxu0
        %v951 = vadd.f32 %v621, %v950
        %v952 = vpop.f32.mrb[0].mxu0
        %v953 = vpop.f32.mrb[0].mxu0
        %v954 = vadd.f32 %v621, %v953
        %v955 = vpop.f32.mrb[0].mxu0
        %956 = vmatprep.mubr.bf16.mxu0 0
        %957 = vmatmul.mubr.bf16.gmra.mrb[0].mxu0 %v700
        %v958 = vpop.f32.mrb[0].mxu0
        %v959 = vadd.f32 %v621, %v958
        %v960 = vpop.f32.mrb[0].mxu0
        %v961 = vpop.f32.mrb[0].mxu0
        %v962 = vadd.f32 %v621, %v961
        %v963 = vpop.f32.mrb[0].mxu0
        %964 = vmatprep.mubr.bf16.mxu0 0
        %965 = vmatmul.mubr.bf16.gmra.mrb[0].mxu0 %v703
        %v966 = vpop.f32.mrb[0].mxu0
        %v967 = vadd.f32 %v621, %v966
        %v968 = vpop.f32.mrb[0].mxu0
        %v969 = vpop.f32.mrb[0].mxu0
        %v970 = vadd.f32 %v621, %v969
        %v971 = vpop.f32.mrb[0].mxu0
        %972 = vmatprep.mubr.bf16.mxu0 0
        %973 = vmatmul.mubr.bf16.gmra.mrb[0].mxu0 %v706
        %v974 = vpop.f32.mrb[0].mxu0
        %v975 = vadd.f32 %v621, %v974
        %v976 = vpop.f32.mrb[0].mxu0
        %v977 = vpop.f32.mrb[0].mxu0
        %v978 = vadd.f32 %v621, %v977
        %v979 = vpop.f32.mrb[0].mxu0
        %980 = vmatprep.mubr.bf16.mxu0 0
        %981 = vmatmul.mubr.bf16.gmra.mrb[0].mxu0 %v709
        %v982 = vpop.f32.mrb[0].mxu0
        %v983 = vadd.f32 %v621, %v982
        %v984 = vpop.f32.mrb[0].mxu0
        %v985 = vpop.f32.mrb[0].mxu0
        %v986 = vadd.f32 %v621, %v985
        %v987 = vpop.f32.mrb[0].mxu0
        %988 = vmatprep.mubr.bf16.mxu0 0
        %989 = vmatmul.mubr.bf16.gmra.mrb[0].mxu0 %v712
        %v990 = vpop.f32.mrb[0].mxu0
        %v991 = vadd.f32 %v621, %v990
        %v992 = vpop.f32.mrb[0].mxu0
        %v993 = vpop.f32.mrb[0].mxu0
        %v994 = vadd.f32 %v621, %v993
        %v995 = vpop.f32.mrb[0].mxu0
        %996 = vmatprep.mubr.bf16.mxu0 0
        %997 = vmatmul.mubr.bf16.gmra.mrb[0].mxu0 %v715
        %v998 = vpop.f32.mrb[0].mxu0
        %v999 = vadd.f32 %v621, %v998
        %v1000 = vpop.f32.mrb[0].mxu0
        %v1001 = vpop.f32.mrb[0].mxu0
        %v1002 = vadd.f32 %v621, %v1001
        %v1003 = vpop.f32.mrb[0].mxu0
        %1004 = vmatprep.mubr.bf16.mxu0 0
        %1005 = vmatmul.mubr.bf16.gmra.mrb[0].mxu0 %v718
        %v1006 = vpop.f32.mrb[0].mxu0
        %v1007 = vadd.f32 %v621, %v1006
        %v1008 = vpop.f32.mrb[0].mxu0
        %v1009 = vpop.f32.mrb[0].mxu0
        %v1010 = vadd.f32 %v621, %v1009
        %v1011 = vpop.f32.mrb[0].mxu0
        %1012 = vdwg.mxu0
        %v1013 = vmax.f32 %v759, 0.0
        %v1014 = vmax.f32 %v762, 0.0
        %v1015 = vmax.f32 %v767, 0.0
        %v1016 = vmax.f32 %v770, 0.0
        %v1017 = vmax.f32 %v775, 0.0
        %v1018 = vmax.f32 %v778, 0.0
        %v1019 = vmax.f32 %v783, 0.0
        %v1020 = vmax.f32 %v786, 0.0
        %v1021 = vmax.f32 %v791, 0.0
        %v1022 = vmax.f32 %v794, 0.0
        %v1023 = vmax.f32 %v799, 0.0
        %v1024 = vmax.f32 %v802, 0.0
        %v1025 = vmax.f32 %v807, 0.0
        %v1026 = vmax.f32 %v810, 0.0
        %v1027 = vmax.f32 %v815, 0.0
        %v1028 = vmax.f32 %v818, 0.0
        %v1029 = vmax.f32 %v823, 0.0
        %v1030 = vmax.f32 %v826, 0.0
        %v1031 = vmax.f32 %v831, 0.0
        %v1032 = vmax.f32 %v834, 0.0
        %v1033 = vmax.f32 %v839, 0.0
        %v1034 = vmax.f32 %v842, 0.0
        %v1035 = vmax.f32 %v847, 0.0
        %v1036 = vmax.f32 %v850, 0.0
        %v1037 = vmax.f32 %v855, 0.0
        %v1038 = vmax.f32 %v858, 0.0
        %v1039 = vmax.f32 %v863, 0.0
        %v1040 = vmax.f32 %v866, 0.0
        %v1041 = vmax.f32 %v871, 0.0
        %v1042 = vmax.f32 %v874, 0.0
        %v1043 = vmax.f32 %v879, 0.0
        %v1044 = vmax.f32 %v882, 0.0
        %v1045 = vmax.f32 %v887, 0.0
        %v1046 = vmax.f32 %v890, 0.0
        %v1047 = vmax.f32 %v895, 0.0
        %v1048 = vmax.f32 %v898, 0.0
        %v1049 = vmax.f32 %v903, 0.0
        %v1050 = vmax.f32 %v906, 0.0
        %v1051 = vmax.f32 %v911, 0.0
        %v1052 = vmax.f32 %v914, 0.0
        %v1053 = vmax.f32 %v919, 0.0
        %v1054 = vmax.f32 %v922, 0.0
        %v1055 = vmax.f32 %v927, 0.0
        %v1056 = vmax.f32 %v930, 0.0
        %v1057 = vmax.f32 %v935, 0.0
        %v1058 = vmax.f32 %v938, 0.0
        %v1059 = vmax.f32 %v943, 0.0
        %v1060 = vmax.f32 %v946, 0.0
        %v1061 = vmax.f32 %v951, 0.0
        %v1062 = vmax.f32 %v954, 0.0
        %v1063 = vmax.f32 %v959, 0.0
        %v1064 = vmax.f32 %v962, 0.0
        %v1065 = vmax.f32 %v967, 0.0
        %v1066 = vmax.f32 %v970, 0.0
        %v1067 = vmax.f32 %v975, 0.0
        %v1068 = vmax.f32 %v978, 0.0
        %v1069 = vmax.f32 %v983, 0.0
        %v1070 = vmax.f32 %v986, 0.0
        %v1071 = vmax.f32 %v991, 0.0
        %v1072 = vmax.f32 %v994, 0.0
        %v1073 = vmax.f32 %v999, 0.0
        %v1074 = vmax.f32 %v1002, 0.0
        %v1075 = vmax.f32 %v1007, 0.0
        %v1076 = vmax.f32 %v1010, 0.0
        %v1077 = vld [vmem:[%s3] sm:$0xf]
        %v1078 = vld [vmem:[%s3 + $0x4] sm:$0xf]
        %v1079 = vld [vmem:[%s4] sm:$0x1]
        %v1080 = vpack.c.bf16 %v1014, %v1013
        %v1081 = vpack.c.bf16 %v1016, %v1015
        %v1082 = vpack.c.bf16 %v1018, %v1017
        %v1083 = vpack.c.bf16 %v1020, %v1019
        %v1084 = vpack.c.bf16 %v1022, %v1021
        %v1085 = vpack.c.bf16 %v1024, %v1023
        %v1086 = vpack.c.bf16 %v1026, %v1025
        %v1087 = vpack.c.bf16 %v1028, %v1027
        %v1088 = vpack.c.bf16 %v1030, %v1029
        %v1089 = vpack.c.bf16 %v1032, %v1031
        %v1090 = vpack.c.bf16 %v1034, %v1033
        %v1091 = vpack.c.bf16 %v1036, %v1035
        %v1092 = vpack.c.bf16 %v1038, %v1037
        %v1093 = vpack.c.bf16 %v1040, %v1039
        %v1094 = vpack.c.bf16 %v1042, %v1041
        %v1095 = vpack.c.bf16 %v1044, %v1043
        %v1096 = vpack.c.bf16 %v1046, %v1045
        %v1097 = vpack.c.bf16 %v1048, %v1047
        %v1098 = vpack.c.bf16 %v1050, %v1049
        %v1099 = vpack.c.bf16 %v1052, %v1051
        %v1100 = vpack.c.bf16 %v1054, %v1053
        %v1101 = vpack.c.bf16 %v1056, %v1055
        %v1102 = vpack.c.bf16 %v1058, %v1057
        %v1103 = vpack.c.bf16 %v1060, %v1059
        %v1104 = vpack.c.bf16 %v1062, %v1061
        %v1105 = vpack.c.bf16 %v1064, %v1063
        %v1106 = vpack.c.bf16 %v1066, %v1065
        %v1107 = vpack.c.bf16 %v1068, %v1067
        %v1108 = vpack.c.bf16 %v1070, %v1069
        %v1109 = vpack.c.bf16 %v1072, %v1071
        %v1110 = vpack.c.bf16 %v1074, %v1073
        %v1111 = vpack.c.bf16 %v1076, %v1075
        %v1113 = vlaneseq
        %v1114 = vshrl.u32 %v1113, 7
        %v1115 = vsub.s32 0, %v1114
        %v1116 = vrot.slane %v1079, %v1115
        %v1120 = vunpack.c.l.b16 %v1077
        %v1121 = vunpack.c.l.b16 %v1078
        %v1122 = vpack.c.b16 %v1121, %v1120
        %vm1124 = vcmask 130048
        %v1126 = vsel %vm1124, %v1080, 0
        %v1129 = vsel %vm1124, %v1081, 0
        %v1132 = vsel %vm1124, %v1082, 0
        %v1135 = vsel %vm1124, %v1083, 0
        %v1138 = vsel %vm1124, %v1084, 0
        %v1141 = vsel %vm1124, %v1085, 0
        %v1144 = vsel %vm1124, %v1086, 0
        %v1147 = vsel %vm1124, %v1087, 0
        %v1150 = vsel %vm1124, %v1088, 0
        %v1153 = vsel %vm1124, %v1089, 0
        %v1156 = vsel %vm1124, %v1090, 0
        %v1159 = vsel %vm1124, %v1091, 0
        %v1162 = vsel %vm1124, %v1092, 0
        %v1165 = vsel %vm1124, %v1093, 0
        %v1168 = vsel %vm1124, %v1094, 0
        %v1171 = vsel %vm1124, %v1095, 0
        %v1174 = vsel %vm1124, %v1096, 0
        %v1177 = vsel %vm1124, %v1097, 0
        %v1180 = vsel %vm1124, %v1098, 0
        %v1183 = vsel %vm1124, %v1099, 0
        %v1186 = vsel %vm1124, %v1100, 0
        %v1189 = vsel %vm1124, %v1101, 0
        %v1192 = vsel %vm1124, %v1102, 0
        %v1195 = vsel %vm1124, %v1103, 0
        %v1198 = vsel %vm1124, %v1104, 0
        %v1201 = vsel %vm1124, %v1105, 0
        %v1204 = vsel %vm1124, %v1106, 0
        %v1207 = vsel %vm1124, %v1107, 0
        %v1210 = vsel %vm1124, %v1108, 0
        %v1213 = vsel %vm1124, %v1109, 0
        %v1216 = vsel %vm1124, %v1110, 0
        %v1219 = vsel %vm1124, %v1111, 0
        %1221 = vmatprep.subr.bf16.mxu0 0
        %1222 = vmatpush1.bf16.msra.mxu0 %v1122
        %1223 = vmatprep.subr.bf16.mxu0 0
        %1224 = vmatpush1.bf16.msra.mxu0 0
        %1225 = vmatprep.subr.bf16.mxu0 0
        %1226 = vmatpush1.bf16.msra.mxu0 0
        %1227 = vmatprep.subr.bf16.mxu0 0
        %1228 = vmatpush1.bf16.msra.mxu0 0
        %1229 = vmatprep.subr.bf16.mxu0 0
        %1230 = vmatpush1.bf16.msra.mxu0 0
        %1231 = vmatprep.subr.bf16.mxu0 0
        %1232 = vmatpush1.bf16.msra.mxu0 0
        %1233 = vmatprep.subr.bf16.mxu0 0
        %1234 = vmatpush1.bf16.msra.mxu0 0
        %1235 = vmatprep.subr.bf16.mxu0 0
        %1236 = vmatpush1.bf16.msra.mxu0 0
        %1237 = vmatprep.subr.bf16.mxu0 0
        %1238 = vmatpush1.bf16.msra.mxu0 0
        %1239 = vmatprep.subr.bf16.mxu0 0
        %1240 = vmatpush1.bf16.msra.mxu0 0
        %1241 = vmatprep.subr.bf16.mxu0 0
        %1242 = vmatpush1.bf16.msra.mxu0 0
        %1243 = vmatprep.subr.bf16.mxu0 0
        %1244 = vmatpush1.bf16.msra.mxu0 0
        %1245 = vmatprep.subr.bf16.mxu0 0
        %1246 = vmatpush1.bf16.msra.mxu0 0
        %1247 = vmatprep.subr.bf16.mxu0 0
        %1248 = vmatpush1.bf16.msra.mxu0 0
        %1249 = vmatprep.subr.bf16.mxu0 0
        %1250 = vmatpush1.bf16.msra.mxu0 0
        %1251 = vmatprep.subr.bf16.mxu0 0
        %1252 = vmatpush1.bf16.msra.mxu0 0
        %1253 = vmatprep.mubr.bf16.mxu0 0
        %1254 = vmatmul.mubr.bf16.gmra.mrb[0].mxu0 %v1126
        %v1255 = vpop.f32.mrb[0].mxu0
        %v1256 = vadd.f32 %v1116, %v1255
        %v1257 = vpop.f32.mrb[0].mxu0
        %v1258 = vpop.f32.mrb[0].mxu0
        %v1259 = vadd.f32 %v1116, %v1258
        %v1260 = vpop.f32.mrb[0].mxu0
        %1261 = vmatprep.mubr.bf16.mxu0 0
        %1262 = vmatmul.mubr.bf16.gmra.mrb[0].mxu0 %v1129
        %v1263 = vpop.f32.mrb[0].mxu0
        %v1264 = vadd.f32 %v1116, %v1263
        %v1265 = vpop.f32.mrb[0].mxu0
        %v1266 = vpop.f32.mrb[0].mxu0
        %v1267 = vadd.f32 %v1116, %v1266
        %v1268 = vpop.f32.mrb[0].mxu0
        %1269 = vmatprep.mubr.bf16.mxu0 0
        %1270 = vmatmul.mubr.bf16.gmra.mrb[0].mxu0 %v1132
        %v1271 = vpop.f32.mrb[0].mxu0
        %v1272 = vadd.f32 %v1116, %v1271
        %v1273 = vpop.f32.mrb[0].mxu0
        %v1274 = vpop.f32.mrb[0].mxu0
        %v1275 = vadd.f32 %v1116, %v1274
        %v1276 = vpop.f32.mrb[0].mxu0
        %1277 = vmatprep.mubr.bf16.mxu0 0
        %1278 = vmatmul.mubr.bf16.gmra.mrb[0].mxu0 %v1135
        %v1279 = vpop.f32.mrb[0].mxu0
        %v1280 = vadd.f32 %v1116, %v1279
        %v1281 = vpop.f32.mrb[0].mxu0
        %v1282 = vpop.f32.mrb[0].mxu0
        %v1283 = vadd.f32 %v1116, %v1282
        %v1284 = vpop.f32.mrb[0].mxu0
        %1285 = vmatprep.mubr.bf16.mxu0 0
        %1286 = vmatmul.mubr.bf16.gmra.mrb[0].mxu0 %v1138
        %v1287 = vpop.f32.mrb[0].mxu0
        %v1288 = vadd.f32 %v1116, %v1287
        %v1289 = vpop.f32.mrb[0].mxu0
        %v1290 = vpop.f32.mrb[0].mxu0
        %v1291 = vadd.f32 %v1116, %v1290
        %v1292 = vpop.f32.mrb[0].mxu0
        %1293 = vmatprep.mubr.bf16.mxu0 0
        %1294 = vmatmul.mubr.bf16.gmra.mrb[0].mxu0 %v1141
        %v1295 = vpop.f32.mrb[0].mxu0
        %v1296 = vadd.f32 %v1116, %v1295
        %v1297 = vpop.f32.mrb[0].mxu0
        %v1298 = vpop.f32.mrb[0].mxu0
        %v1299 = vadd.f32 %v1116, %v1298
        %v1300 = vpop.f32.mrb[0].mxu0
        %1301 = vmatprep.mubr.bf16.mxu0 0
        %1302 = vmatmul.mubr.bf16.gmra.mrb[0].mxu0 %v1144
        %v1303 = vpop.f32.mrb[0].mxu0
        %v1304 = vadd.f32 %v1116, %v1303
        %v1305 = vpop.f32.mrb[0].mxu0
        %v1306 = vpop.f32.mrb[0].mxu0
        %v1307 = vadd.f32 %v1116, %v1306
        %v1308 = vpop.f32.mrb[0].mxu0
        %1309 = vmatprep.mubr.bf16.mxu0 0
        %1310 = vmatmul.mubr.bf16.gmra.mrb[0].mxu0 %v1147
        %v1311 = vpop.f32.mrb[0].mxu0
        %v1312 = vadd.f32 %v1116, %v1311
        %v1313 = vpop.f32.mrb[0].mxu0
        %v1314 = vpop.f32.mrb[0].mxu0
        %v1315 = vadd.f32 %v1116, %v1314
        %v1316 = vpop.f32.mrb[0].mxu0
        %1317 = vmatprep.mubr.bf16.mxu0 0
        %1318 = vmatmul.mubr.bf16.gmra.mrb[0].mxu0 %v1150
        %v1319 = vpop.f32.mrb[0].mxu0
        %v1320 = vadd.f32 %v1116, %v1319
        %v1321 = vpop.f32.mrb[0].mxu0
        %v1322 = vpop.f32.mrb[0].mxu0
        %v1323 = vadd.f32 %v1116, %v1322
        %v1324 = vpop.f32.mrb[0].mxu0
        %1325 = vmatprep.mubr.bf16.mxu0 0
        %1326 = vmatmul.mubr.bf16.gmra.mrb[0].mxu0 %v1153
        %v1327 = vpop.f32.mrb[0].mxu0
        %v1328 = vadd.f32 %v1116, %v1327
        %v1329 = vpop.f32.mrb[0].mxu0
        %v1330 = vpop.f32.mrb[0].mxu0
        %v1331 = vadd.f32 %v1116, %v1330
        %v1332 = vpop.f32.mrb[0].mxu0
        %1333 = vmatprep.mubr.bf16.mxu0 0
        %1334 = vmatmul.mubr.bf16.gmra.mrb[0].mxu0 %v1156
        %v1335 = vpop.f32.mrb[0].mxu0
        %v1336 = vadd.f32 %v1116, %v1335
        %v1337 = vpop.f32.mrb[0].mxu0
        %v1338 = vpop.f32.mrb[0].mxu0
        %v1339 = vadd.f32 %v1116, %v1338
        %v1340 = vpop.f32.mrb[0].mxu0
        %1341 = vmatprep.mubr.bf16.mxu0 0
        %1342 = vmatmul.mubr.bf16.gmra.mrb[0].mxu0 %v1159
        %v1343 = vpop.f32.mrb[0].mxu0
        %v1344 = vadd.f32 %v1116, %v1343
        %v1345 = vpop.f32.mrb[0].mxu0
        %v1346 = vpop.f32.mrb[0].mxu0
        %v1347 = vadd.f32 %v1116, %v1346
        %v1348 = vpop.f32.mrb[0].mxu0
        %1349 = vmatprep.mubr.bf16.mxu0 0
        %1350 = vmatmul.mubr.bf16.gmra.mrb[0].mxu0 %v1162
        %v1351 = vpop.f32.mrb[0].mxu0
        %v1352 = vadd.f32 %v1116, %v1351
        %v1353 = vpop.f32.mrb[0].mxu0
        %v1354 = vpop.f32.mrb[0].mxu0
        %v1355 = vadd.f32 %v1116, %v1354
        %v1356 = vpop.f32.mrb[0].mxu0
        %1357 = vmatprep.mubr.bf16.mxu0 0
        %1358 = vmatmul.mubr.bf16.gmra.mrb[0].mxu0 %v1165
        %v1359 = vpop.f32.mrb[0].mxu0
        %v1360 = vadd.f32 %v1116, %v1359
        %v1361 = vpop.f32.mrb[0].mxu0
        %v1362 = vpop.f32.mrb[0].mxu0
        %v1363 = vadd.f32 %v1116, %v1362
        %v1364 = vpop.f32.mrb[0].mxu0
        %1365 = vmatprep.mubr.bf16.mxu0 0
        %1366 = vmatmul.mubr.bf16.gmra.mrb[0].mxu0 %v1168
        %v1367 = vpop.f32.mrb[0].mxu0
        %v1368 = vadd.f32 %v1116, %v1367
        %v1369 = vpop.f32.mrb[0].mxu0
        %v1370 = vpop.f32.mrb[0].mxu0
        %v1371 = vadd.f32 %v1116, %v1370
        %v1372 = vpop.f32.mrb[0].mxu0
        %1373 = vmatprep.mubr.bf16.mxu0 0
        %1374 = vmatmul.mubr.bf16.gmra.mrb[0].mxu0 %v1171
        %v1375 = vpop.f32.mrb[0].mxu0
        %v1376 = vadd.f32 %v1116, %v1375
        %v1377 = vpop.f32.mrb[0].mxu0
        %v1378 = vpop.f32.mrb[0].mxu0
        %v1379 = vadd.f32 %v1116, %v1378
        %v1380 = vpop.f32.mrb[0].mxu0
        %1381 = vmatprep.mubr.bf16.mxu0 0
        %1382 = vmatmul.mubr.bf16.gmra.mrb[0].mxu0 %v1174
        %v1383 = vpop.f32.mrb[0].mxu0
        %v1384 = vadd.f32 %v1116, %v1383
        %v1385 = vpop.f32.mrb[0].mxu0
        %v1386 = vpop.f32.mrb[0].mxu0
        %v1387 = vadd.f32 %v1116, %v1386
        %v1388 = vpop.f32.mrb[0].mxu0
        %1389 = vmatprep.mubr.bf16.mxu0 0
        %1390 = vmatmul.mubr.bf16.gmra.mrb[0].mxu0 %v1177
        %v1391 = vpop.f32.mrb[0].mxu0
        %v1392 = vadd.f32 %v1116, %v1391
        %v1393 = vpop.f32.mrb[0].mxu0
        %v1394 = vpop.f32.mrb[0].mxu0
        %v1395 = vadd.f32 %v1116, %v1394
        %v1396 = vpop.f32.mrb[0].mxu0
        %1397 = vmatprep.mubr.bf16.mxu0 0
        %1398 = vmatmul.mubr.bf16.gmra.mrb[0].mxu0 %v1180
        %v1399 = vpop.f32.mrb[0].mxu0
        %v1400 = vadd.f32 %v1116, %v1399
        %v1401 = vpop.f32.mrb[0].mxu0
        %v1402 = vpop.f32.mrb[0].mxu0
        %v1403 = vadd.f32 %v1116, %v1402
        %v1404 = vpop.f32.mrb[0].mxu0
        %1405 = vmatprep.mubr.bf16.mxu0 0
        %1406 = vmatmul.mubr.bf16.gmra.mrb[0].mxu0 %v1183
        %v1407 = vpop.f32.mrb[0].mxu0
        %v1408 = vadd.f32 %v1116, %v1407
        %v1409 = vpop.f32.mrb[0].mxu0
        %v1410 = vpop.f32.mrb[0].mxu0
        %v1411 = vadd.f32 %v1116, %v1410
        %v1412 = vpop.f32.mrb[0].mxu0
        %1413 = vmatprep.mubr.bf16.mxu0 0
        %1414 = vmatmul.mubr.bf16.gmra.mrb[0].mxu0 %v1186
        %v1415 = vpop.f32.mrb[0].mxu0
        %v1416 = vadd.f32 %v1116, %v1415
        %v1417 = vpop.f32.mrb[0].mxu0
        %v1418 = vpop.f32.mrb[0].mxu0
        %v1419 = vadd.f32 %v1116, %v1418
        %v1420 = vpop.f32.mrb[0].mxu0
        %1421 = vmatprep.mubr.bf16.mxu0 0
        %1422 = vmatmul.mubr.bf16.gmra.mrb[0].mxu0 %v1189
        %v1423 = vpop.f32.mrb[0].mxu0
        %v1424 = vadd.f32 %v1116, %v1423
        %v1425 = vpop.f32.mrb[0].mxu0
        %v1426 = vpop.f32.mrb[0].mxu0
        %v1427 = vadd.f32 %v1116, %v1426
        %v1428 = vpop.f32.mrb[0].mxu0
        %1429 = vmatprep.mubr.bf16.mxu0 0
        %1430 = vmatmul.mubr.bf16.gmra.mrb[0].mxu0 %v1192
        %v1431 = vpop.f32.mrb[0].mxu0
        %v1432 = vadd.f32 %v1116, %v1431
        %v1433 = vpop.f32.mrb[0].mxu0
        %v1434 = vpop.f32.mrb[0].mxu0
        %v1435 = vadd.f32 %v1116, %v1434
        %v1436 = vpop.f32.mrb[0].mxu0
        %1437 = vmatprep.mubr.bf16.mxu0 0
        %1438 = vmatmul.mubr.bf16.gmra.mrb[0].mxu0 %v1195
        %v1439 = vpop.f32.mrb[0].mxu0
        %v1440 = vadd.f32 %v1116, %v1439
        %v1441 = vpop.f32.mrb[0].mxu0
        %v1442 = vpop.f32.mrb[0].mxu0
        %v1443 = vadd.f32 %v1116, %v1442
        %v1444 = vpop.f32.mrb[0].mxu0
        %1445 = vmatprep.mubr.bf16.mxu0 0
        %1446 = vmatmul.mubr.bf16.gmra.mrb[0].mxu0 %v1198
        %v1447 = vpop.f32.mrb[0].mxu0
        %v1448 = vadd.f32 %v1116, %v1447
        %v1449 = vpop.f32.mrb[0].mxu0
        %v1450 = vpop.f32.mrb[0].mxu0
        %v1451 = vadd.f32 %v1116, %v1450
        %v1452 = vpop.f32.mrb[0].mxu0
        %1453 = vmatprep.mubr.bf16.mxu0 0
        %1454 = vmatmul.mubr.bf16.gmra.mrb[0].mxu0 %v1201
        %v1455 = vpop.f32.mrb[0].mxu0
        %v1456 = vadd.f32 %v1116, %v1455
        %v1457 = vpop.f32.mrb[0].mxu0
        %v1458 = vpop.f32.mrb[0].mxu0
        %v1459 = vadd.f32 %v1116, %v1458
        %v1460 = vpop.f32.mrb[0].mxu0
        %1461 = vmatprep.mubr.bf16.mxu0 0
        %1462 = vmatmul.mubr.bf16.gmra.mrb[0].mxu0 %v1204
        %v1463 = vpop.f32.mrb[0].mxu0
        %v1464 = vadd.f32 %v1116, %v1463
        %v1465 = vpop.f32.mrb[0].mxu0
        %v1466 = vpop.f32.mrb[0].mxu0
        %v1467 = vadd.f32 %v1116, %v1466
        %v1468 = vpop.f32.mrb[0].mxu0
        %1469 = vmatprep.mubr.bf16.mxu0 0
        %1470 = vmatmul.mubr.bf16.gmra.mrb[0].mxu0 %v1207
        %v1471 = vpop.f32.mrb[0].mxu0
        %v1472 = vadd.f32 %v1116, %v1471
        %v1473 = vpop.f32.mrb[0].mxu0
        %v1474 = vpop.f32.mrb[0].mxu0
        %v1475 = vadd.f32 %v1116, %v1474
        %v1476 = vpop.f32.mrb[0].mxu0
        %1477 = vmatprep.mubr.bf16.mxu0 0
        %1478 = vmatmul.mubr.bf16.gmra.mrb[0].mxu0 %v1210
        %v1479 = vpop.f32.mrb[0].mxu0
        %v1480 = vadd.f32 %v1116, %v1479
        %v1481 = vpop.f32.mrb[0].mxu0
        %v1482 = vpop.f32.mrb[0].mxu0
        %v1483 = vadd.f32 %v1116, %v1482
        %v1484 = vpop.f32.mrb[0].mxu0
        %1485 = vmatprep.mubr.bf16.mxu0 0
        %1486 = vmatmul.mubr.bf16.gmra.mrb[0].mxu0 %v1213
        %v1487 = vpop.f32.mrb[0].mxu0
        %v1488 = vadd.f32 %v1116, %v1487
        %v1489 = vpop.f32.mrb[0].mxu0
        %v1490 = vpop.f32.mrb[0].mxu0
        %v1491 = vadd.f32 %v1116, %v1490
        %v1492 = vpop.f32.mrb[0].mxu0
        %1493 = vmatprep.mubr.bf16.mxu0 0
        %1494 = vmatmul.mubr.bf16.gmra.mrb[0].mxu0 %v1216
        %v1495 = vpop.f32.mrb[0].mxu0
        %v1496 = vadd.f32 %v1116, %v1495
        %v1497 = vpop.f32.mrb[0].mxu0
        %v1498 = vpop.f32.mrb[0].mxu0
        %v1499 = vadd.f32 %v1116, %v1498
        %v1500 = vpop.f32.mrb[0].mxu0
        %1501 = vmatprep.mubr.bf16.mxu0 0
        %1502 = vmatmul.mubr.bf16.gmra.mrb[0].mxu0 %v1219
        %v1503 = vpop.f32.mrb[0].mxu0
        %v1504 = vadd.f32 %v1116, %v1503
        %v1505 = vpop.f32.mrb[0].mxu0
        %v1506 = vpop.f32.mrb[0].mxu0
        %v1507 = vadd.f32 %v1116, %v1506
        %v1508 = vpop.f32.mrb[0].mxu0
        %1509 = vdwg.mxu0
        %v1510 = vmax.f32 %v1256, 0.0
        %v1511 = vmax.f32 %v1259, 0.0
        %v1512 = vmax.f32 %v1264, 0.0
        %v1513 = vmax.f32 %v1267, 0.0
        %v1514 = vmax.f32 %v1272, 0.0
        %v1515 = vmax.f32 %v1275, 0.0
        %v1516 = vmax.f32 %v1280, 0.0
        %v1517 = vmax.f32 %v1283, 0.0
        %v1518 = vmax.f32 %v1288, 0.0
        %v1519 = vmax.f32 %v1291, 0.0
        %v1520 = vmax.f32 %v1296, 0.0
        %v1521 = vmax.f32 %v1299, 0.0
        %v1522 = vmax.f32 %v1304, 0.0
        %v1523 = vmax.f32 %v1307, 0.0
        %v1524 = vmax.f32 %v1312, 0.0
        %v1525 = vmax.f32 %v1315, 0.0
        %v1526 = vmax.f32 %v1320, 0.0
        %v1527 = vmax.f32 %v1323, 0.0
        %v1528 = vmax.f32 %v1328, 0.0
        %v1529 = vmax.f32 %v1331, 0.0
        %v1530 = vmax.f32 %v1336, 0.0
        %v1531 = vmax.f32 %v1339, 0.0
        %v1532 = vmax.f32 %v1344, 0.0
        %v1533 = vmax.f32 %v1347, 0.0
        %v1534 = vmax.f32 %v1352, 0.0
        %v1535 = vmax.f32 %v1355, 0.0
        %v1536 = vmax.f32 %v1360, 0.0
        %v1537 = vmax.f32 %v1363, 0.0
        %v1538 = vmax.f32 %v1368, 0.0
        %v1539 = vmax.f32 %v1371, 0.0
        %v1540 = vmax.f32 %v1376, 0.0
        %v1541 = vmax.f32 %v1379, 0.0
        %v1542 = vmax.f32 %v1384, 0.0
        %v1543 = vmax.f32 %v1387, 0.0
        %v1544 = vmax.f32 %v1392, 0.0
        %v1545 = vmax.f32 %v1395, 0.0
        %v1546 = vmax.f32 %v1400, 0.0
        %v1547 = vmax.f32 %v1403, 0.0
        %v1548 = vmax.f32 %v1408, 0.0
        %v1549 = vmax.f32 %v1411, 0.0
        %v1550 = vmax.f32 %v1416, 0.0
        %v1551 = vmax.f32 %v1419, 0.0
        %v1552 = vmax.f32 %v1424, 0.0
        %v1553 = vmax.f32 %v1427, 0.0
        %v1554 = vmax.f32 %v1432, 0.0
        %v1555 = vmax.f32 %v1435, 0.0
        %v1556 = vmax.f32 %v1440, 0.0
        %v1557 = vmax.f32 %v1443, 0.0
        %v1558 = vmax.f32 %v1448, 0.0
        %v1559 = vmax.f32 %v1451, 0.0
        %v1560 = vmax.f32 %v1456, 0.0
        %v1561 = vmax.f32 %v1459, 0.0
        %v1562 = vmax.f32 %v1464, 0.0
        %v1563 = vmax.f32 %v1467, 0.0
        %v1564 = vmax.f32 %v1472, 0.0
        %v1565 = vmax.f32 %v1475, 0.0
        %v1566 = vmax.f32 %v1480, 0.0
        %v1567 = vmax.f32 %v1483, 0.0
        %v1568 = vmax.f32 %v1488, 0.0
        %v1569 = vmax.f32 %v1491, 0.0
        %v1570 = vmax.f32 %v1496, 0.0
        %v1571 = vmax.f32 %v1499, 0.0
        %v1572 = vmax.f32 %v1504, 0.0
        %v1573 = vmax.f32 %v1507, 0.0
        %v1574 = vld [vmem:[%s5] sm:$0xf]
        %v1575 = vld [vmem:[%s6] sm:$0x1]
        %v1576 = vpack.c.bf16 %v1511, %v1510
        %v1577 = vpack.c.bf16 %v1513, %v1512
        %v1578 = vpack.c.bf16 %v1515, %v1514
        %v1579 = vpack.c.bf16 %v1517, %v1516
        %v1580 = vpack.c.bf16 %v1519, %v1518
        %v1581 = vpack.c.bf16 %v1521, %v1520
        %v1582 = vpack.c.bf16 %v1523, %v1522
        %v1583 = vpack.c.bf16 %v1525, %v1524
        %v1584 = vpack.c.bf16 %v1527, %v1526
        %v1585 = vpack.c.bf16 %v1529, %v1528
        %v1586 = vpack.c.bf16 %v1531, %v1530
        %v1587 = vpack.c.bf16 %v1533, %v1532
        %v1588 = vpack.c.bf16 %v1535, %v1534
        %v1589 = vpack.c.bf16 %v1537, %v1536
        %v1590 = vpack.c.bf16 %v1539, %v1538
        %v1591 = vpack.c.bf16 %v1541, %v1540
        %v1592 = vpack.c.bf16 %v1543, %v1542
        %v1593 = vpack.c.bf16 %v1545, %v1544
        %v1594 = vpack.c.bf16 %v1547, %v1546
        %v1595 = vpack.c.bf16 %v1549, %v1548
        %v1596 = vpack.c.bf16 %v1551, %v1550
        %v1597 = vpack.c.bf16 %v1553, %v1552
        %v1598 = vpack.c.bf16 %v1555, %v1554
        %v1599 = vpack.c.bf16 %v1557, %v1556
        %v1600 = vpack.c.bf16 %v1559, %v1558
        %v1601 = vpack.c.bf16 %v1561, %v1560
        %v1602 = vpack.c.bf16 %v1563, %v1562
        %v1603 = vpack.c.bf16 %v1565, %v1564
        %v1604 = vpack.c.bf16 %v1567, %v1566
        %v1605 = vpack.c.bf16 %v1569, %v1568
        %v1606 = vpack.c.bf16 %v1571, %v1570
        %v1607 = vpack.c.bf16 %v1573, %v1572
        %v1609 = vlaneseq
        %v1610 = vshrl.u32 %v1609, 7
        %v1611 = vsub.s32 0, %v1610
        %v1612 = vrot.slane %v1575, %v1611
        %vm1614 = vcmask 64512
        %v1616 = vsel %vm1614, %v1576, 0
        %v1619 = vsel %vm1614, %v1577, 0
        %v1622 = vsel %vm1614, %v1578, 0
        %v1625 = vsel %vm1614, %v1579, 0
        %v1628 = vsel %vm1614, %v1580, 0
        %v1631 = vsel %vm1614, %v1581, 0
        %v1634 = vsel %vm1614, %v1582, 0
        %v1637 = vsel %vm1614, %v1583, 0
        %v1640 = vsel %vm1614, %v1584, 0
        %v1643 = vsel %vm1614, %v1585, 0
        %v1646 = vsel %vm1614, %v1586, 0
        %v1649 = vsel %vm1614, %v1587, 0
        %v1652 = vsel %vm1614, %v1588, 0
        %v1655 = vsel %vm1614, %v1589, 0
        %v1658 = vsel %vm1614, %v1590, 0
        %v1661 = vsel %vm1614, %v1591, 0
        %v1664 = vsel %vm1614, %v1592, 0
        %v1667 = vsel %vm1614, %v1593, 0
        %v1670 = vsel %vm1614, %v1594, 0
        %v1673 = vsel %vm1614, %v1595, 0
        %v1676 = vsel %vm1614, %v1596, 0
        %v1679 = vsel %vm1614, %v1597, 0
        %v1682 = vsel %vm1614, %v1598, 0
        %v1685 = vsel %vm1614, %v1599, 0
        %v1688 = vsel %vm1614, %v1600, 0
        %v1691 = vsel %vm1614, %v1601, 0
        %v1694 = vsel %vm1614, %v1602, 0
        %v1697 = vsel %vm1614, %v1603, 0
        %v1700 = vsel %vm1614, %v1604, 0
        %v1703 = vsel %vm1614, %v1605, 0
        %v1706 = vsel %vm1614, %v1606, 0
        %v1709 = vsel %vm1614, %v1607, 0
        %vm1711 = vcmask 1043456
        %v1713 = vsel %vm1711, %v1574, 0
        %1715 = vmatprep.subr.bf16.mxu0 0
        %1716 = vmatpush1.bf16.msra.mxu0 %v1713
        %1717 = vmatprep.subr.bf16.mxu0 0
        %1718 = vmatpush1.bf16.msra.mxu0 0
        %1719 = vmatprep.subr.bf16.mxu0 0
        %1720 = vmatpush1.bf16.msra.mxu0 0
        %1721 = vmatprep.subr.bf16.mxu0 0
        %1722 = vmatpush1.bf16.msra.mxu0 0
        %1723 = vmatprep.subr.bf16.mxu0 0
        %1724 = vmatpush1.bf16.msra.mxu0 0
        %1725 = vmatprep.subr.bf16.mxu0 0
        %1726 = vmatpush1.bf16.msra.mxu0 0
        %1727 = vmatprep.subr.bf16.mxu0 0
        %1728 = vmatpush1.bf16.msra.mxu0 0
        %1729 = vmatprep.subr.bf16.mxu0 0
        %1730 = vmatpush1.bf16.msra.mxu0 0
        %1731 = vmatprep.subr.bf16.mxu0 0
        %1732 = vmatpush1.bf16.msra.mxu0 0
        %1733 = vmatprep.subr.bf16.mxu0 0
        %1734 = vmatpush1.bf16.msra.mxu0 0
        %1735 = vmatprep.subr.bf16.mxu0 0
        %1736 = vmatpush1.bf16.msra.mxu0 0
        %1737 = vmatprep.subr.bf16.mxu0 0
        %1738 = vmatpush1.bf16.msra.mxu0 0
        %1739 = vmatprep.subr.bf16.mxu0 0
        %1740 = vmatpush1.bf16.msra.mxu0 0
        %1741 = vmatprep.subr.bf16.mxu0 0
        %1742 = vmatpush1.bf16.msra.mxu0 0
        %1743 = vmatprep.subr.bf16.mxu0 0
        %1744 = vmatpush1.bf16.msra.mxu0 0
        %1745 = vmatprep.subr.bf16.mxu0 0
        %1746 = vmatpush1.bf16.msra.mxu0 0
        %1747 = vmatprep.mubr.bf16.mxu0 0
        %1748 = vmatmul.mubr.bf16.gmra.mrb[0].mxu0 %v1616
        %v1749 = vpop.f32.mrb[0].mxu0
        %v1750 = vadd.f32 %v1612, %v1749
        %v1751 = vpop.f32.mrb[0].mxu0
        %v1752 = vpop.f32.mrb[0].mxu0
        %v1753 = vadd.f32 %v1612, %v1752
        %v1754 = vpop.f32.mrb[0].mxu0
        %1755 = vmatprep.mubr.bf16.mxu0 0
        %1756 = vmatmul.mubr.bf16.gmra.mrb[0].mxu0 %v1619
        %v1757 = vpop.f32.mrb[0].mxu0
        %v1758 = vadd.f32 %v1612, %v1757
        %v1759 = vpop.f32.mrb[0].mxu0
        %v1760 = vpop.f32.mrb[0].mxu0
        %v1761 = vadd.f32 %v1612, %v1760
        %v1762 = vpop.f32.mrb[0].mxu0
        %1763 = vmatprep.mubr.bf16.mxu0 0
        %1764 = vmatmul.mubr.bf16.gmra.mrb[0].mxu0 %v1622
        %v1765 = vpop.f32.mrb[0].mxu0
        %v1766 = vadd.f32 %v1612, %v1765
        %v1767 = vpop.f32.mrb[0].mxu0
        %v1768 = vpop.f32.mrb[0].mxu0
        %v1769 = vadd.f32 %v1612, %v1768
        %v1770 = vpop.f32.mrb[0].mxu0
        %1771 = vmatprep.mubr.bf16.mxu0 0
        %1772 = vmatmul.mubr.bf16.gmra.mrb[0].mxu0 %v1625
        %v1773 = vpop.f32.mrb[0].mxu0
        %v1774 = vadd.f32 %v1612, %v1773
        %v1775 = vpop.f32.mrb[0].mxu0
        %v1776 = vpop.f32.mrb[0].mxu0
        %v1777 = vadd.f32 %v1612, %v1776
        %v1778 = vpop.f32.mrb[0].mxu0
        %1779 = vmatprep.mubr.bf16.mxu0 0
        %1780 = vmatmul.mubr.bf16.gmra.mrb[0].mxu0 %v1628
        %v1781 = vpop.f32.mrb[0].mxu0
        %v1782 = vadd.f32 %v1612, %v1781
        %v1783 = vpop.f32.mrb[0].mxu0
        %v1784 = vpop.f32.mrb[0].mxu0
        %v1785 = vadd.f32 %v1612, %v1784
        %v1786 = vpop.f32.mrb[0].mxu0
        %1787 = vmatprep.mubr.bf16.mxu0 0
        %1788 = vmatmul.mubr.bf16.gmra.mrb[0].mxu0 %v1631
        %v1789 = vpop.f32.mrb[0].mxu0
        %v1790 = vadd.f32 %v1612, %v1789
        %v1791 = vpop.f32.mrb[0].mxu0
        %v1792 = vpop.f32.mrb[0].mxu0
        %v1793 = vadd.f32 %v1612, %v1792
        %v1794 = vpop.f32.mrb[0].mxu0
        %1795 = vmatprep.mubr.bf16.mxu0 0
        %1796 = vmatmul.mubr.bf16.gmra.mrb[0].mxu0 %v1634
        %v1797 = vpop.f32.mrb[0].mxu0
        %v1798 = vadd.f32 %v1612, %v1797
        %v1799 = vpop.f32.mrb[0].mxu0
        %v1800 = vpop.f32.mrb[0].mxu0
        %v1801 = vadd.f32 %v1612, %v1800
        %v1802 = vpop.f32.mrb[0].mxu0
        %1803 = vmatprep.mubr.bf16.mxu0 0
        %1804 = vmatmul.mubr.bf16.gmra.mrb[0].mxu0 %v1637
        %v1805 = vpop.f32.mrb[0].mxu0
        %v1806 = vadd.f32 %v1612, %v1805
        %v1807 = vpop.f32.mrb[0].mxu0
        %v1808 = vpop.f32.mrb[0].mxu0
        %v1809 = vadd.f32 %v1612, %v1808
        %v1810 = vpop.f32.mrb[0].mxu0
        %1811 = vmatprep.mubr.bf16.mxu0 0
        %1812 = vmatmul.mubr.bf16.gmra.mrb[0].mxu0 %v1640
        %v1813 = vpop.f32.mrb[0].mxu0
        %v1814 = vadd.f32 %v1612, %v1813
        %v1815 = vpop.f32.mrb[0].mxu0
        %v1816 = vpop.f32.mrb[0].mxu0
        %v1817 = vadd.f32 %v1612, %v1816
        %v1818 = vpop.f32.mrb[0].mxu0
        %1819 = vmatprep.mubr.bf16.mxu0 0
        %1820 = vmatmul.mubr.bf16.gmra.mrb[0].mxu0 %v1643
        %v1821 = vpop.f32.mrb[0].mxu0
        %v1822 = vadd.f32 %v1612, %v1821
        %v1823 = vpop.f32.mrb[0].mxu0
        %v1824 = vpop.f32.mrb[0].mxu0
        %v1825 = vadd.f32 %v1612, %v1824
        %v1826 = vpop.f32.mrb[0].mxu0
        %1827 = vmatprep.mubr.bf16.mxu0 0
        %1828 = vmatmul.mubr.bf16.gmra.mrb[0].mxu0 %v1646
        %v1829 = vpop.f32.mrb[0].mxu0
        %v1830 = vadd.f32 %v1612, %v1829
        %v1831 = vpop.f32.mrb[0].mxu0
        %v1832 = vpop.f32.mrb[0].mxu0
        %v1833 = vadd.f32 %v1612, %v1832
        %v1834 = vpop.f32.mrb[0].mxu0
        %1835 = vmatprep.mubr.bf16.mxu0 0
        %1836 = vmatmul.mubr.bf16.gmra.mrb[0].mxu0 %v1649
        %v1837 = vpop.f32.mrb[0].mxu0
        %v1838 = vadd.f32 %v1612, %v1837
        %v1839 = vpop.f32.mrb[0].mxu0
        %v1840 = vpop.f32.mrb[0].mxu0
        %v1841 = vadd.f32 %v1612, %v1840
        %v1842 = vpop.f32.mrb[0].mxu0
        %1843 = vmatprep.mubr.bf16.mxu0 0
        %1844 = vmatmul.mubr.bf16.gmra.mrb[0].mxu0 %v1652
        %v1845 = vpop.f32.mrb[0].mxu0
        %v1846 = vadd.f32 %v1612, %v1845
        %v1847 = vpop.f32.mrb[0].mxu0
        %v1848 = vpop.f32.mrb[0].mxu0
        %v1849 = vadd.f32 %v1612, %v1848
        %v1850 = vpop.f32.mrb[0].mxu0
        %1851 = vmatprep.mubr.bf16.mxu0 0
        %1852 = vmatmul.mubr.bf16.gmra.mrb[0].mxu0 %v1655
        %v1853 = vpop.f32.mrb[0].mxu0
        %v1854 = vadd.f32 %v1612, %v1853
        %v1855 = vpop.f32.mrb[0].mxu0
        %v1856 = vpop.f32.mrb[0].mxu0
        %v1857 = vadd.f32 %v1612, %v1856
        %v1858 = vpop.f32.mrb[0].mxu0
        %1859 = vmatprep.mubr.bf16.mxu0 0
        %1860 = vmatmul.mubr.bf16.gmra.mrb[0].mxu0 %v1658
        %v1861 = vpop.f32.mrb[0].mxu0
        %v1862 = vadd.f32 %v1612, %v1861
        %v1863 = vpop.f32.mrb[0].mxu0
        %v1864 = vpop.f32.mrb[0].mxu0
        %v1865 = vadd.f32 %v1612, %v1864
        %v1866 = vpop.f32.mrb[0].mxu0
        %1867 = vmatprep.mubr.bf16.mxu0 0
        %1868 = vmatmul.mubr.bf16.gmra.mrb[0].mxu0 %v1661
        %v1869 = vpop.f32.mrb[0].mxu0
        %v1870 = vadd.f32 %v1612, %v1869
        %v1871 = vpop.f32.mrb[0].mxu0
        %v1872 = vpop.f32.mrb[0].mxu0
        %v1873 = vadd.f32 %v1612, %v1872
        %v1874 = vpop.f32.mrb[0].mxu0
        %1875 = vmatprep.mubr.bf16.mxu0 0
        %1876 = vmatmul.mubr.bf16.gmra.mrb[0].mxu0 %v1664
        %v1877 = vpop.f32.mrb[0].mxu0
        %v1878 = vadd.f32 %v1612, %v1877
        %v1879 = vpop.f32.mrb[0].mxu0
        %v1880 = vpop.f32.mrb[0].mxu0
        %v1881 = vadd.f32 %v1612, %v1880
        %v1882 = vpop.f32.mrb[0].mxu0
        %1883 = vmatprep.mubr.bf16.mxu0 0
        %1884 = vmatmul.mubr.bf16.gmra.mrb[0].mxu0 %v1667
        %v1885 = vpop.f32.mrb[0].mxu0
        %v1886 = vadd.f32 %v1612, %v1885
        %v1887 = vpop.f32.mrb[0].mxu0
        %v1888 = vpop.f32.mrb[0].mxu0
        %v1889 = vadd.f32 %v1612, %v1888
        %v1890 = vpop.f32.mrb[0].mxu0
        %1891 = vmatprep.mubr.bf16.mxu0 0
        %1892 = vmatmul.mubr.bf16.gmra.mrb[0].mxu0 %v1670
        %v1893 = vpop.f32.mrb[0].mxu0
        %v1894 = vadd.f32 %v1612, %v1893
        %v1895 = vpop.f32.mrb[0].mxu0
        %v1896 = vpop.f32.mrb[0].mxu0
        %v1897 = vadd.f32 %v1612, %v1896
        %v1898 = vpop.f32.mrb[0].mxu0
        %1899 = vmatprep.mubr.bf16.mxu0 0
        %1900 = vmatmul.mubr.bf16.gmra.mrb[0].mxu0 %v1673
        %v1901 = vpop.f32.mrb[0].mxu0
        %v1902 = vadd.f32 %v1612, %v1901
        %v1903 = vpop.f32.mrb[0].mxu0
        %v1904 = vpop.f32.mrb[0].mxu0
        %v1905 = vadd.f32 %v1612, %v1904
        %v1906 = vpop.f32.mrb[0].mxu0
        %1907 = vmatprep.mubr.bf16.mxu0 0
        %1908 = vmatmul.mubr.bf16.gmra.mrb[0].mxu0 %v1676
        %v1909 = vpop.f32.mrb[0].mxu0
        %v1910 = vadd.f32 %v1612, %v1909
        %v1911 = vpop.f32.mrb[0].mxu0
        %v1912 = vpop.f32.mrb[0].mxu0
        %v1913 = vadd.f32 %v1612, %v1912
        %v1914 = vpop.f32.mrb[0].mxu0
        %1915 = vmatprep.mubr.bf16.mxu0 0
        %1916 = vmatmul.mubr.bf16.gmra.mrb[0].mxu0 %v1679
        %v1917 = vpop.f32.mrb[0].mxu0
        %v1918 = vadd.f32 %v1612, %v1917
        %v1919 = vpop.f32.mrb[0].mxu0
        %v1920 = vpop.f32.mrb[0].mxu0
        %v1921 = vadd.f32 %v1612, %v1920
        %v1922 = vpop.f32.mrb[0].mxu0
        %1923 = vmatprep.mubr.bf16.mxu0 0
        %1924 = vmatmul.mubr.bf16.gmra.mrb[0].mxu0 %v1682
        %v1925 = vpop.f32.mrb[0].mxu0
        %v1926 = vadd.f32 %v1612, %v1925
        %v1927 = vpop.f32.mrb[0].mxu0
        %v1928 = vpop.f32.mrb[0].mxu0
        %v1929 = vadd.f32 %v1612, %v1928
        %v1930 = vpop.f32.mrb[0].mxu0
        %1931 = vmatprep.mubr.bf16.mxu0 0
        %1932 = vmatmul.mubr.bf16.gmra.mrb[0].mxu0 %v1685
        %v1933 = vpop.f32.mrb[0].mxu0
        %v1934 = vadd.f32 %v1612, %v1933
        %v1935 = vpop.f32.mrb[0].mxu0
        %v1936 = vpop.f32.mrb[0].mxu0
        %v1937 = vadd.f32 %v1612, %v1936
        %v1938 = vpop.f32.mrb[0].mxu0
        %1939 = vmatprep.mubr.bf16.mxu0 0
        %1940 = vmatmul.mubr.bf16.gmra.mrb[0].mxu0 %v1688
        %v1941 = vpop.f32.mrb[0].mxu0
        %v1942 = vadd.f32 %v1612, %v1941
        %v1943 = vpop.f32.mrb[0].mxu0
        %v1944 = vpop.f32.mrb[0].mxu0
        %v1945 = vadd.f32 %v1612, %v1944
        %v1946 = vpop.f32.mrb[0].mxu0
        %1947 = vmatprep.mubr.bf16.mxu0 0
        %1948 = vmatmul.mubr.bf16.gmra.mrb[0].mxu0 %v1691
        %v1949 = vpop.f32.mrb[0].mxu0
        %v1950 = vadd.f32 %v1612, %v1949
        %v1951 = vpop.f32.mrb[0].mxu0
        %v1952 = vpop.f32.mrb[0].mxu0
        %v1953 = vadd.f32 %v1612, %v1952
        %v1954 = vpop.f32.mrb[0].mxu0
        %1955 = vmatprep.mubr.bf16.mxu0 0
        %1956 = vmatmul.mubr.bf16.gmra.mrb[0].mxu0 %v1694
        %v1957 = vpop.f32.mrb[0].mxu0
        %v1958 = vadd.f32 %v1612, %v1957
        %v1959 = vpop.f32.mrb[0].mxu0
        %v1960 = vpop.f32.mrb[0].mxu0
        %v1961 = vadd.f32 %v1612, %v1960
        %v1962 = vpop.f32.mrb[0].mxu0
        %1963 = vmatprep.mubr.bf16.mxu0 0
        %1964 = vmatmul.mubr.bf16.gmra.mrb[0].mxu0 %v1697
        %v1965 = vpop.f32.mrb[0].mxu0
        %v1966 = vadd.f32 %v1612, %v1965
        %v1967 = vpop.f32.mrb[0].mxu0
        %v1968 = vpop.f32.mrb[0].mxu0
        %v1969 = vadd.f32 %v1612, %v1968
        %v1970 = vpop.f32.mrb[0].mxu0
        %1971 = vmatprep.mubr.bf16.mxu0 0
        %1972 = vmatmul.mubr.bf16.gmra.mrb[0].mxu0 %v1700
        %v1973 = vpop.f32.mrb[0].mxu0
        %v1974 = vadd.f32 %v1612, %v1973
        %v1975 = vpop.f32.mrb[0].mxu0
        %v1976 = vpop.f32.mrb[0].mxu0
        %v1977 = vadd.f32 %v1612, %v1976
        %v1978 = vpop.f32.mrb[0].mxu0
        %1979 = vmatprep.mubr.bf16.mxu0 0
        %1980 = vmatmul.mubr.bf16.gmra.mrb[0].mxu0 %v1703
        %v1981 = vpop.f32.mrb[0].mxu0
        %v1982 = vadd.f32 %v1612, %v1981
        %v1983 = vpop.f32.mrb[0].mxu0
        %v1984 = vpop.f32.mrb[0].mxu0
        %v1985 = vadd.f32 %v1612, %v1984
        %v1986 = vpop.f32.mrb[0].mxu0
        %1987 = vmatprep.mubr.bf16.mxu0 0
        %1988 = vmatmul.mubr.bf16.gmra.mrb[0].mxu0 %v1706
        %v1989 = vpop.f32.mrb[0].mxu0
        %v1990 = vadd.f32 %v1612, %v1989
        %v1991 = vpop.f32.mrb[0].mxu0
        %v1992 = vpop.f32.mrb[0].mxu0
        %v1993 = vadd.f32 %v1612, %v1992
        %v1994 = vpop.f32.mrb[0].mxu0
        %1995 = vmatprep.mubr.bf16.mxu0 0
        %1996 = vmatmul.mubr.bf16.gmra.mrb[0].mxu0 %v1709
        %v1997 = vpop.f32.mrb[0].mxu0
        %v1998 = vadd.f32 %v1612, %v1997
        %v1999 = vpop.f32.mrb[0].mxu0
        %v2000 = vpop.f32.mrb[0].mxu0
        %v2001 = vadd.f32 %v1612, %v2000
        %v2002 = vpop.f32.mrb[0].mxu0
        %2003 = vdwg.mxu0
        %v2004 = vpack.c.bf16 %v1753, %v1750
        %v2005 = vpack.c.bf16 %v1761, %v1758
        %v2006 = vpack.c.bf16 %v1769, %v1766
        %v2007 = vpack.c.bf16 %v1777, %v1774
        %v2008 = vpack.c.bf16 %v1785, %v1782
        %v2009 = vpack.c.bf16 %v1793, %v1790
        %v2010 = vpack.c.bf16 %v1801, %v1798
        %v2011 = vpack.c.bf16 %v1809, %v1806
        %v2012 = vpack.c.bf16 %v1817, %v1814
        %v2013 = vpack.c.bf16 %v1825, %v1822
        %v2014 = vpack.c.bf16 %v1833, %v1830
        %v2015 = vpack.c.bf16 %v1841, %v1838
        %v2016 = vpack.c.bf16 %v1849, %v1846
        %v2017 = vpack.c.bf16 %v1857, %v1854
        %v2018 = vpack.c.bf16 %v1865, %v1862
        %v2019 = vpack.c.bf16 %v1873, %v1870
        %v2020 = vpack.c.bf16 %v1881, %v1878
        %v2021 = vpack.c.bf16 %v1889, %v1886
        %v2022 = vpack.c.bf16 %v1897, %v1894
        %v2023 = vpack.c.bf16 %v1905, %v1902
        %v2024 = vpack.c.bf16 %v1913, %v1910
        %v2025 = vpack.c.bf16 %v1921, %v1918
        %v2026 = vpack.c.bf16 %v1929, %v1926
        %v2027 = vpack.c.bf16 %v1937, %v1934
        %v2028 = vpack.c.bf16 %v1945, %v1942
        %v2029 = vpack.c.bf16 %v1953, %v1950
        %v2030 = vpack.c.bf16 %v1961, %v1958
        %v2031 = vpack.c.bf16 %v1969, %v1966
        %v2032 = vpack.c.bf16 %v1977, %v1974
        %v2033 = vpack.c.bf16 %v1985, %v1982
        %v2034 = vpack.c.bf16 %v1993, %v1990
        %v2035 = vpack.c.bf16 %v2001, %v1998
        %v2068 = vunpack.c.l.b16 %v2004
        %v2069 = vunpack.c.h.b16 %v2004
        %v2070 = vunpack.c.l.b16 %v2005
        %v2071 = vunpack.c.h.b16 %v2005
        %v2072 = vunpack.c.l.b16 %v2006
        %v2073 = vunpack.c.h.b16 %v2006
        %v2074 = vunpack.c.l.b16 %v2007
        %v2075 = vunpack.c.h.b16 %v2007
        %v2076 = vunpack.c.l.b16 %v2008
        %v2077 = vunpack.c.h.b16 %v2008
        %v2078 = vunpack.c.l.b16 %v2009
        %v2079 = vunpack.c.h.b16 %v2009
        %v2080 = vunpack.c.l.b16 %v2010
        %v2081 = vunpack.c.h.b16 %v2010
        %v2082 = vunpack.c.l.b16 %v2011
        %v2083 = vunpack.c.h.b16 %v2011
        %v2084 = vunpack.c.l.b16 %v2012
        %v2085 = vunpack.c.h.b16 %v2012
        %v2086 = vunpack.c.l.b16 %v2013
        %v2087 = vunpack.c.h.b16 %v2013
        %v2088 = vunpack.c.l.b16 %v2014
        %v2089 = vunpack.c.h.b16 %v2014
        %v2090 = vunpack.c.l.b16 %v2015
        %v2091 = vunpack.c.h.b16 %v2015
        %v2092 = vunpack.c.l.b16 %v2016
        %v2093 = vunpack.c.h.b16 %v2016
        %v2094 = vunpack.c.l.b16 %v2017
        %v2095 = vunpack.c.h.b16 %v2017
        %v2096 = vunpack.c.l.b16 %v2018
        %v2097 = vunpack.c.h.b16 %v2018
        %v2098 = vunpack.c.l.b16 %v2019
        %v2099 = vunpack.c.h.b16 %v2019
        %v2100 = vunpack.c.l.b16 %v2020
        %v2101 = vunpack.c.h.b16 %v2020
        %v2102 = vunpack.c.l.b16 %v2021
        %v2103 = vunpack.c.h.b16 %v2021
        %v2104 = vunpack.c.l.b16 %v2022
        %v2105 = vunpack.c.h.b16 %v2022
        %v2106 = vunpack.c.l.b16 %v2023
        %v2107 = vunpack.c.h.b16 %v2023
        %v2108 = vunpack.c.l.b16 %v2024
        %v2109 = vunpack.c.h.b16 %v2024
        %v2110 = vunpack.c.l.b16 %v2025
        %v2111 = vunpack.c.h.b16 %v2025
        %v2112 = vunpack.c.l.b16 %v2026
        %v2113 = vunpack.c.h.b16 %v2026
        %v2114 = vunpack.c.l.b16 %v2027
        %v2115 = vunpack.c.h.b16 %v2027
        %v2116 = vunpack.c.l.b16 %v2028
        %v2117 = vunpack.c.h.b16 %v2028
        %v2118 = vunpack.c.l.b16 %v2029
        %v2119 = vunpack.c.h.b16 %v2029
        %v2120 = vunpack.c.l.b16 %v2030
        %v2121 = vunpack.c.h.b16 %v2030
        %v2122 = vunpack.c.l.b16 %v2031
        %v2123 = vunpack.c.h.b16 %v2031
        %v2124 = vunpack.c.l.b16 %v2032
        %v2125 = vunpack.c.h.b16 %v2032
        %v2126 = vunpack.c.l.b16 %v2033
        %v2127 = vunpack.c.h.b16 %v2033
        %v2128 = vunpack.c.l.b16 %v2034
        %v2129 = vunpack.c.h.b16 %v2034
        %v2130 = vunpack.c.l.b16 %v2035
        %v2131 = vunpack.c.h.b16 %v2035
        %v2132 = vpack.c.b16 %v2068, %v2068
        %v2133 = vpack.c.b16 %v2069, %v2069
        %v2134 = vpack.c.b16 %v2070, %v2070
        %v2135 = vpack.c.b16 %v2071, %v2071
        %v2136 = vpack.c.b16 %v2072, %v2072
        %v2137 = vpack.c.b16 %v2073, %v2073
        %v2138 = vpack.c.b16 %v2074, %v2074
        %v2139 = vpack.c.b16 %v2075, %v2075
        %v2140 = vpack.c.b16 %v2076, %v2076
        %v2141 = vpack.c.b16 %v2077, %v2077
        %v2142 = vpack.c.b16 %v2078, %v2078
        %v2143 = vpack.c.b16 %v2079, %v2079
        %v2144 = vpack.c.b16 %v2080, %v2080
        %v2145 = vpack.c.b16 %v2081, %v2081
        %v2146 = vpack.c.b16 %v2082, %v2082
        %v2147 = vpack.c.b16 %v2083, %v2083
        %v2148 = vpack.c.b16 %v2084, %v2084
        %v2149 = vpack.c.b16 %v2085, %v2085
        %v2150 = vpack.c.b16 %v2086, %v2086
        %v2151 = vpack.c.b16 %v2087, %v2087
        %v2152 = vpack.c.b16 %v2088, %v2088
        %v2153 = vpack.c.b16 %v2089, %v2089
        %v2154 = vpack.c.b16 %v2090, %v2090
        %v2155 = vpack.c.b16 %v2091, %v2091
        %v2156 = vpack.c.b16 %v2092, %v2092
        %v2157 = vpack.c.b16 %v2093, %v2093
        %v2158 = vpack.c.b16 %v2094, %v2094
        %v2159 = vpack.c.b16 %v2095, %v2095
        %v2160 = vpack.c.b16 %v2096, %v2096
        %v2161 = vpack.c.b16 %v2097, %v2097
        %v2162 = vpack.c.b16 %v2098, %v2098
        %v2163 = vpack.c.b16 %v2099, %v2099
        %v2164 = vpack.c.b16 %v2100, %v2100
        %v2165 = vpack.c.b16 %v2101, %v2101
        %v2166 = vpack.c.b16 %v2102, %v2102
        %v2167 = vpack.c.b16 %v2103, %v2103
        %v2168 = vpack.c.b16 %v2104, %v2104
        %v2169 = vpack.c.b16 %v2105, %v2105
        %v2170 = vpack.c.b16 %v2106, %v2106
        %v2171 = vpack.c.b16 %v2107, %v2107
        %v2172 = vpack.c.b16 %v2108, %v2108
        %v2173 = vpack.c.b16 %v2109, %v2109
        %v2174 = vpack.c.b16 %v2110, %v2110
        %v2175 = vpack.c.b16 %v2111, %v2111
        %v2176 = vpack.c.b16 %v2112, %v2112
        %v2177 = vpack.c.b16 %v2113, %v2113
        %v2178 = vpack.c.b16 %v2114, %v2114
        %v2179 = vpack.c.b16 %v2115, %v2115
        %v2180 = vpack.c.b16 %v2116, %v2116
        %v2181 = vpack.c.b16 %v2117, %v2117
        %v2182 = vpack.c.b16 %v2118, %v2118
        %v2183 = vpack.c.b16 %v2119, %v2119
        %v2184 = vpack.c.b16 %v2120, %v2120
        %v2185 = vpack.c.b16 %v2121, %v2121
        %v2186 = vpack.c.b16 %v2122, %v2122
        %v2187 = vpack.c.b16 %v2123, %v2123
        %v2188 = vpack.c.b16 %v2124, %v2124
        %v2189 = vpack.c.b16 %v2125, %v2125
        %v2190 = vpack.c.b16 %v2126, %v2126
        %v2191 = vpack.c.b16 %v2127, %v2127
        %v2192 = vpack.c.b16 %v2128, %v2128
        %v2193 = vpack.c.b16 %v2129, %v2129
        %v2194 = vpack.c.b16 %v2130, %v2130
        %v2195 = vpack.c.b16 %v2131, %v2131
        %vm2260 = vcmask 125952
        %2261 = vst.msk [vmem:[%s514] sm:$0xf] %vm2260, %v2132
        %2262 = vst.msk [vmem:[%s514 + $0x4] sm:$0xf] %vm2260, %v2133
        %2263 = vst.msk [vmem:[%s514 + $0x8] sm:$0xf] %vm2260, %v2134
        %2264 = vst.msk [vmem:[%s514 + $0xc] sm:$0xf] %vm2260, %v2135
        %2265 = vst.msk [vmem:[%s514 + $0x10] sm:$0xf] %vm2260, %v2136
        %2266 = vst.msk [vmem:[%s514 + $0x14] sm:$0xf] %vm2260, %v2137
        %2267 = vst.msk [vmem:[%s514 + $0x18] sm:$0xf] %vm2260, %v2138
        %2268 = vst.msk [vmem:[%s514 + $0x1c] sm:$0xf] %vm2260, %v2139
        %2269 = vst.msk [vmem:[%s514 + $0x20] sm:$0xf] %vm2260, %v2140
        %2270 = vst.msk [vmem:[%s514 + $0x24] sm:$0xf] %vm2260, %v2141
        %2271 = vst.msk [vmem:[%s514 + $0x28] sm:$0xf] %vm2260, %v2142
        %2272 = vst.msk [vmem:[%s514 + $0x2c] sm:$0xf] %vm2260, %v2143
        %2273 = vst.msk [vmem:[%s514 + $0x30] sm:$0xf] %vm2260, %v2144
        %2274 = vst.msk [vmem:[%s514 + $0x34] sm:$0xf] %vm2260, %v2145
        %2275 = vst.msk [vmem:[%s514 + $0x38] sm:$0xf] %vm2260, %v2146
        %2276 = vst.msk [vmem:[%s514 + $0x3c] sm:$0xf] %vm2260, %v2147
        %2277 = vst.msk [vmem:[%s514 + $0x40] sm:$0xf] %vm2260, %v2148
        %2278 = vst.msk [vmem:[%s514 + $0x44] sm:$0xf] %vm2260, %v2149
        %2279 = vst.msk [vmem:[%s514 + $0x48] sm:$0xf] %vm2260, %v2150
        %2280 = vst.msk [vmem:[%s514 + $0x4c] sm:$0xf] %vm2260, %v2151
        %2281 = vst.msk [vmem:[%s514 + $0x50] sm:$0xf] %vm2260, %v2152
        %2282 = vst.msk [vmem:[%s514 + $0x54] sm:$0xf] %vm2260, %v2153
        %2283 = vst.msk [vmem:[%s514 + $0x58] sm:$0xf] %vm2260, %v2154
        %2284 = vst.msk [vmem:[%s514 + $0x5c] sm:$0xf] %vm2260, %v2155
        %2285 = vst.msk [vmem:[%s514 + $0x60] sm:$0xf] %vm2260, %v2156
        %2286 = vst.msk [vmem:[%s514 + $0x64] sm:$0xf] %vm2260, %v2157
        %2287 = vst.msk [vmem:[%s514 + $0x68] sm:$0xf] %vm2260, %v2158
        %2288 = vst.msk [vmem:[%s514 + $0x6c] sm:$0xf] %vm2260, %v2159
        %2289 = vst.msk [vmem:[%s514 + $0x70] sm:$0xf] %vm2260, %v2160
        %2290 = vst.msk [vmem:[%s514 + $0x74] sm:$0xf] %vm2260, %v2161
        %2291 = vst.msk [vmem:[%s514 + $0x78] sm:$0xf] %vm2260, %v2162
        %2292 = vst.msk [vmem:[%s514 + $0x7c] sm:$0xf] %vm2260, %v2163
        %2293 = vst.msk [vmem:[%s514 + $0x80] sm:$0xf] %vm2260, %v2164
        %2294 = vst.msk [vmem:[%s514 + $0x84] sm:$0xf] %vm2260, %v2165
        %2295 = vst.msk [vmem:[%s514 + $0x88] sm:$0xf] %vm2260, %v2166
        %2296 = vst.msk [vmem:[%s514 + $0x8c] sm:$0xf] %vm2260, %v2167
        %2297 = vst.msk [vmem:[%s514 + $0x90] sm:$0xf] %vm2260, %v2168
        %2298 = vst.msk [vmem:[%s514 + $0x94] sm:$0xf] %vm2260, %v2169
        %2299 = vst.msk [vmem:[%s514 + $0x98] sm:$0xf] %vm2260, %v2170
        %2300 = vst.msk [vmem:[%s514 + $0x9c] sm:$0xf] %vm2260, %v2171
        %2301 = vst.msk [vmem:[%s514 + $0xa0] sm:$0xf] %vm2260, %v2172
        %2302 = vst.msk [vmem:[%s514 + $0xa4] sm:$0xf] %vm2260, %v2173
        %2303 = vst.msk [vmem:[%s514 + $0xa8] sm:$0xf] %vm2260, %v2174
        %2304 = vst.msk [vmem:[%s514 + $0xac] sm:$0xf] %vm2260, %v2175
        %2305 = vst.msk [vmem:[%s514 + $0xb0] sm:$0xf] %vm2260, %v2176
        %2306 = vst.msk [vmem:[%s514 + $0xb4] sm:$0xf] %vm2260, %v2177
        %2307 = vst.msk [vmem:[%s514 + $0xb8] sm:$0xf] %vm2260, %v2178
        %2308 = vst.msk [vmem:[%s514 + $0xbc] sm:$0xf] %vm2260, %v2179
        %2309 = vst.msk [vmem:[%s514 + $0xc0] sm:$0xf] %vm2260, %v2180
        %2310 = vst.msk [vmem:[%s514 + $0xc4] sm:$0xf] %vm2260, %v2181
        %2311 = vst.msk [vmem:[%s514 + $0xc8] sm:$0xf] %vm2260, %v2182
        %2312 = vst.msk [vmem:[%s514 + $0xcc] sm:$0xf] %vm2260, %v2183
        %2313 = vst.msk [vmem:[%s514 + $0xd0] sm:$0xf] %vm2260, %v2184
        %2314 = vst.msk [vmem:[%s514 + $0xd4] sm:$0xf] %vm2260, %v2185
        %2315 = vst.msk [vmem:[%s514 + $0xd8] sm:$0xf] %vm2260, %v2186
        %2316 = vst.msk [vmem:[%s514 + $0xdc] sm:$0xf] %vm2260, %v2187
        %2317 = vst.msk [vmem:[%s514 + $0xe0] sm:$0xf] %vm2260, %v2188
        %2318 = vst.msk [vmem:[%s514 + $0xe4] sm:$0xf] %vm2260, %v2189
        %2319 = vst.msk [vmem:[%s514 + $0xe8] sm:$0xf] %vm2260, %v2190
        %2320 = vst.msk [vmem:[%s514 + $0xec] sm:$0xf] %vm2260, %v2191
        %2321 = vst.msk [vmem:[%s514 + $0xf0] sm:$0xf] %vm2260, %v2192
        %2322 = vst.msk [vmem:[%s514 + $0xf4] sm:$0xf] %vm2260, %v2193
        %2323 = vst.msk [vmem:[%s514 + $0xf8] sm:$0xf] %vm2260, %v2194
        %2324 = vst.msk [vmem:[%s514 + $0xfc] sm:$0xf] %vm2260, %v2195
        %v2325 = vld [vmem:[%s7] sm:$0xf]
        %v2326 = vld [vmem:[%s7 + $0x4] sm:$0xf]
        %v2327 = vld [vmem:[%s8] sm:$0x1]
        %v2329 = vlaneseq
        %v2330 = vshrl.u32 %v2329, 7
        %v2331 = vsub.s32 0, %v2330
        %v2332 = vrot.slane %v2327, %v2331
        %v2336 = vunpack.c.l.b16 %v2325
        %v2337 = vunpack.c.l.b16 %v2326
        %v2338 = vpack.c.b16 %v2337, %v2336
        %v2341 = vsel %vm1124, %v2004, 0
        %v2344 = vsel %vm1124, %v2005, 0
        %v2347 = vsel %vm1124, %v2006, 0
        %v2350 = vsel %vm1124, %v2007, 0
        %v2353 = vsel %vm1124, %v2008, 0
        %v2356 = vsel %vm1124, %v2009, 0
        %v2359 = vsel %vm1124, %v2010, 0
        %v2362 = vsel %vm1124, %v2011, 0
        %v2365 = vsel %vm1124, %v2012, 0
        %v2368 = vsel %vm1124, %v2013, 0
        %v2371 = vsel %vm1124, %v2014, 0
        %v2374 = vsel %vm1124, %v2015, 0
        %v2377 = vsel %vm1124, %v2016, 0
        %v2380 = vsel %vm1124, %v2017, 0
        %v2383 = vsel %vm1124, %v2018, 0
        %v2386 = vsel %vm1124, %v2019, 0
        %v2389 = vsel %vm1124, %v2020, 0
        %v2392 = vsel %vm1124, %v2021, 0
        %v2395 = vsel %vm1124, %v2022, 0
        %v2398 = vsel %vm1124, %v2023, 0
        %v2401 = vsel %vm1124, %v2024, 0
        %v2404 = vsel %vm1124, %v2025, 0
        %v2407 = vsel %vm1124, %v2026, 0
        %v2410 = vsel %vm1124, %v2027, 0
        %v2413 = vsel %vm1124, %v2028, 0
        %v2416 = vsel %vm1124, %v2029, 0
        %v2419 = vsel %vm1124, %v2030, 0
        %v2422 = vsel %vm1124, %v2031, 0
        %v2425 = vsel %vm1124, %v2032, 0
        %v2428 = vsel %vm1124, %v2033, 0
        %v2431 = vsel %vm1124, %v2034, 0
        %v2434 = vsel %vm1124, %v2035, 0
        %2436 = vmatprep.subr.bf16.mxu0 0
        %2437 = vmatpush1.bf16.msra.mxu0 %v2338
        %2438 = vmatprep.subr.bf16.mxu0 0
        %2439 = vmatpush1.bf16.msra.mxu0 0
        %2440 = vmatprep.subr.bf16.mxu0 0
        %2441 = vmatpush1.bf16.msra.mxu0 0
        %2442 = vmatprep.subr.bf16.mxu0 0
        %2443 = vmatpush1.bf16.msra.mxu0 0
        %2444 = vmatprep.subr.bf16.mxu0 0
        %2445 = vmatpush1.bf16.msra.mxu0 0
        %2446 = vmatprep.subr.bf16.mxu0 0
        %2447 = vmatpush1.bf16.msra.mxu0 0
        %2448 = vmatprep.subr.bf16.mxu0 0
        %2449 = vmatpush1.bf16.msra.mxu0 0
        %2450 = vmatprep.subr.bf16.mxu0 0
        %2451 = vmatpush1.bf16.msra.mxu0 0
        %2452 = vmatprep.subr.bf16.mxu0 0
        %2453 = vmatpush1.bf16.msra.mxu0 0
        %2454 = vmatprep.subr.bf16.mxu0 0
        %2455 = vmatpush1.bf16.msra.mxu0 0
        %2456 = vmatprep.subr.bf16.mxu0 0
        %2457 = vmatpush1.bf16.msra.mxu0 0
        %2458 = vmatprep.subr.bf16.mxu0 0
        %2459 = vmatpush1.bf16.msra.mxu0 0
        %2460 = vmatprep.subr.bf16.mxu0 0
        %2461 = vmatpush1.bf16.msra.mxu0 0
        %2462 = vmatprep.subr.bf16.mxu0 0
        %2463 = vmatpush1.bf16.msra.mxu0 0
        %2464 = vmatprep.subr.bf16.mxu0 0
        %2465 = vmatpush1.bf16.msra.mxu0 0
        %2466 = vmatprep.subr.bf16.mxu0 0
        %2467 = vmatpush1.bf16.msra.mxu0 0
        %2468 = vmatprep.mubr.bf16.mxu0 0
        %2469 = vmatmul.mubr.bf16.gmra.mrb[0].mxu0 %v2341
        %v2470 = vpop.f32.mrb[0].mxu0
        %v2471 = vadd.f32 %v2332, %v2470
        %v2472 = vpop.f32.mrb[0].mxu0
        %v2473 = vpop.f32.mrb[0].mxu0
        %v2474 = vadd.f32 %v2332, %v2473
        %v2475 = vpop.f32.mrb[0].mxu0
        %2476 = vmatprep.mubr.bf16.mxu0 0
        %2477 = vmatmul.mubr.bf16.gmra.mrb[0].mxu0 %v2344
        %v2478 = vpop.f32.mrb[0].mxu0
        %v2479 = vadd.f32 %v2332, %v2478
        %v2480 = vpop.f32.mrb[0].mxu0
        %v2481 = vpop.f32.mrb[0].mxu0
        %v2482 = vadd.f32 %v2332, %v2481
        %v2483 = vpop.f32.mrb[0].mxu0
        %2484 = vmatprep.mubr.bf16.mxu0 0
        %2485 = vmatmul.mubr.bf16.gmra.mrb[0].mxu0 %v2347
        %v2486 = vpop.f32.mrb[0].mxu0
        %v2487 = vadd.f32 %v2332, %v2486
        %v2488 = vpop.f32.mrb[0].mxu0
        %v2489 = vpop.f32.mrb[0].mxu0
        %v2490 = vadd.f32 %v2332, %v2489
        %v2491 = vpop.f32.mrb[0].mxu0
        %2492 = vmatprep.mubr.bf16.mxu0 0
        %2493 = vmatmul.mubr.bf16.gmra.mrb[0].mxu0 %v2350
        %v2494 = vpop.f32.mrb[0].mxu0
        %v2495 = vadd.f32 %v2332, %v2494
        %v2496 = vpop.f32.mrb[0].mxu0
        %v2497 = vpop.f32.mrb[0].mxu0
        %v2498 = vadd.f32 %v2332, %v2497
        %v2499 = vpop.f32.mrb[0].mxu0
        %2500 = vmatprep.mubr.bf16.mxu0 0
        %2501 = vmatmul.mubr.bf16.gmra.mrb[0].mxu0 %v2353
        %v2502 = vpop.f32.mrb[0].mxu0
        %v2503 = vadd.f32 %v2332, %v2502
        %v2504 = vpop.f32.mrb[0].mxu0
        %v2505 = vpop.f32.mrb[0].mxu0
        %v2506 = vadd.f32 %v2332, %v2505
        %v2507 = vpop.f32.mrb[0].mxu0
        %2508 = vmatprep.mubr.bf16.mxu0 0
        %2509 = vmatmul.mubr.bf16.gmra.mrb[0].mxu0 %v2356
        %v2510 = vpop.f32.mrb[0].mxu0
        %v2511 = vadd.f32 %v2332, %v2510
        %v2512 = vpop.f32.mrb[0].mxu0
        %v2513 = vpop.f32.mrb[0].mxu0
        %v2514 = vadd.f32 %v2332, %v2513
        %v2515 = vpop.f32.mrb[0].mxu0
        %2516 = vmatprep.mubr.bf16.mxu0 0
        %2517 = vmatmul.mubr.bf16.gmra.mrb[0].mxu0 %v2359
        %v2518 = vpop.f32.mrb[0].mxu0
        %v2519 = vadd.f32 %v2332, %v2518
        %v2520 = vpop.f32.mrb[0].mxu0
        %v2521 = vpop.f32.mrb[0].mxu0
        %v2522 = vadd.f32 %v2332, %v2521
        %v2523 = vpop.f32.mrb[0].mxu0
        %2524 = vmatprep.mubr.bf16.mxu0 0
        %2525 = vmatmul.mubr.bf16.gmra.mrb[0].mxu0 %v2362
        %v2526 = vpop.f32.mrb[0].mxu0
        %v2527 = vadd.f32 %v2332, %v2526
        %v2528 = vpop.f32.mrb[0].mxu0
        %v2529 = vpop.f32.mrb[0].mxu0
        %v2530 = vadd.f32 %v2332, %v2529
        %v2531 = vpop.f32.mrb[0].mxu0
        %2532 = vmatprep.mubr.bf16.mxu0 0
        %2533 = vmatmul.mubr.bf16.gmra.mrb[0].mxu0 %v2365
        %v2534 = vpop.f32.mrb[0].mxu0
        %v2535 = vadd.f32 %v2332, %v2534
        %v2536 = vpop.f32.mrb[0].mxu0
        %v2537 = vpop.f32.mrb[0].mxu0
        %v2538 = vadd.f32 %v2332, %v2537
        %v2539 = vpop.f32.mrb[0].mxu0
        %2540 = vmatprep.mubr.bf16.mxu0 0
        %2541 = vmatmul.mubr.bf16.gmra.mrb[0].mxu0 %v2368
        %v2542 = vpop.f32.mrb[0].mxu0
        %v2543 = vadd.f32 %v2332, %v2542
        %v2544 = vpop.f32.mrb[0].mxu0
        %v2545 = vpop.f32.mrb[0].mxu0
        %v2546 = vadd.f32 %v2332, %v2545
        %v2547 = vpop.f32.mrb[0].mxu0
        %2548 = vmatprep.mubr.bf16.mxu0 0
        %2549 = vmatmul.mubr.bf16.gmra.mrb[0].mxu0 %v2371
        %v2550 = vpop.f32.mrb[0].mxu0
        %v2551 = vadd.f32 %v2332, %v2550
        %v2552 = vpop.f32.mrb[0].mxu0
        %v2553 = vpop.f32.mrb[0].mxu0
        %v2554 = vadd.f32 %v2332, %v2553
        %v2555 = vpop.f32.mrb[0].mxu0
        %2556 = vmatprep.mubr.bf16.mxu0 0
        %2557 = vmatmul.mubr.bf16.gmra.mrb[0].mxu0 %v2374
        %v2558 = vpop.f32.mrb[0].mxu0
        %v2559 = vadd.f32 %v2332, %v2558
        %v2560 = vpop.f32.mrb[0].mxu0
        %v2561 = vpop.f32.mrb[0].mxu0
        %v2562 = vadd.f32 %v2332, %v2561
        %v2563 = vpop.f32.mrb[0].mxu0
        %2564 = vmatprep.mubr.bf16.mxu0 0
        %2565 = vmatmul.mubr.bf16.gmra.mrb[0].mxu0 %v2377
        %v2566 = vpop.f32.mrb[0].mxu0
        %v2567 = vadd.f32 %v2332, %v2566
        %v2568 = vpop.f32.mrb[0].mxu0
        %v2569 = vpop.f32.mrb[0].mxu0
        %v2570 = vadd.f32 %v2332, %v2569
        %v2571 = vpop.f32.mrb[0].mxu0
        %2572 = vmatprep.mubr.bf16.mxu0 0
        %2573 = vmatmul.mubr.bf16.gmra.mrb[0].mxu0 %v2380
        %v2574 = vpop.f32.mrb[0].mxu0
        %v2575 = vadd.f32 %v2332, %v2574
        %v2576 = vpop.f32.mrb[0].mxu0
        %v2577 = vpop.f32.mrb[0].mxu0
        %v2578 = vadd.f32 %v2332, %v2577
        %v2579 = vpop.f32.mrb[0].mxu0
        %2580 = vmatprep.mubr.bf16.mxu0 0
        %2581 = vmatmul.mubr.bf16.gmra.mrb[0].mxu0 %v2383
        %v2582 = vpop.f32.mrb[0].mxu0
        %v2583 = vadd.f32 %v2332, %v2582
        %v2584 = vpop.f32.mrb[0].mxu0
        %v2585 = vpop.f32.mrb[0].mxu0
        %v2586 = vadd.f32 %v2332, %v2585
        %v2587 = vpop.f32.mrb[0].mxu0
        %2588 = vmatprep.mubr.bf16.mxu0 0
        %2589 = vmatmul.mubr.bf16.gmra.mrb[0].mxu0 %v2386
        %v2590 = vpop.f32.mrb[0].mxu0
        %v2591 = vadd.f32 %v2332, %v2590
        %v2592 = vpop.f32.mrb[0].mxu0
        %v2593 = vpop.f32.mrb[0].mxu0
        %v2594 = vadd.f32 %v2332, %v2593
        %v2595 = vpop.f32.mrb[0].mxu0
        %2596 = vmatprep.mubr.bf16.mxu0 0
        %2597 = vmatmul.mubr.bf16.gmra.mrb[0].mxu0 %v2389
        %v2598 = vpop.f32.mrb[0].mxu0
        %v2599 = vadd.f32 %v2332, %v2598
        %v2600 = vpop.f32.mrb[0].mxu0
        %v2601 = vpop.f32.mrb[0].mxu0
        %v2602 = vadd.f32 %v2332, %v2601
        %v2603 = vpop.f32.mrb[0].mxu0
        %2604 = vmatprep.mubr.bf16.mxu0 0
        %2605 = vmatmul.mubr.bf16.gmra.mrb[0].mxu0 %v2392
        %v2606 = vpop.f32.mrb[0].mxu0
        %v2607 = vadd.f32 %v2332, %v2606
        %v2608 = vpop.f32.mrb[0].mxu0
        %v2609 = vpop.f32.mrb[0].mxu0
        %v2610 = vadd.f32 %v2332, %v2609
        %v2611 = vpop.f32.mrb[0].mxu0
        %2612 = vmatprep.mubr.bf16.mxu0 0
        %2613 = vmatmul.mubr.bf16.gmra.mrb[0].mxu0 %v2395
        %v2614 = vpop.f32.mrb[0].mxu0
        %v2615 = vadd.f32 %v2332, %v2614
        %v2616 = vpop.f32.mrb[0].mxu0
        %v2617 = vpop.f32.mrb[0].mxu0
        %v2618 = vadd.f32 %v2332, %v2617
        %v2619 = vpop.f32.mrb[0].mxu0
        %2620 = vmatprep.mubr.bf16.mxu0 0
        %2621 = vmatmul.mubr.bf16.gmra.mrb[0].mxu0 %v2398
        %v2622 = vpop.f32.mrb[0].mxu0
        %v2623 = vadd.f32 %v2332, %v2622
        %v2624 = vpop.f32.mrb[0].mxu0
        %v2625 = vpop.f32.mrb[0].mxu0
        %v2626 = vadd.f32 %v2332, %v2625
        %v2627 = vpop.f32.mrb[0].mxu0
        %2628 = vmatprep.mubr.bf16.mxu0 0
        %2629 = vmatmul.mubr.bf16.gmra.mrb[0].mxu0 %v2401
        %v2630 = vpop.f32.mrb[0].mxu0
        %v2631 = vadd.f32 %v2332, %v2630
        %v2632 = vpop.f32.mrb[0].mxu0
        %v2633 = vpop.f32.mrb[0].mxu0
        %v2634 = vadd.f32 %v2332, %v2633
        %v2635 = vpop.f32.mrb[0].mxu0
        %2636 = vmatprep.mubr.bf16.mxu0 0
        %2637 = vmatmul.mubr.bf16.gmra.mrb[0].mxu0 %v2404
        %v2638 = vpop.f32.mrb[0].mxu0
        %v2639 = vadd.f32 %v2332, %v2638
        %v2640 = vpop.f32.mrb[0].mxu0
        %v2641 = vpop.f32.mrb[0].mxu0
        %v2642 = vadd.f32 %v2332, %v2641
        %v2643 = vpop.f32.mrb[0].mxu0
        %2644 = vmatprep.mubr.bf16.mxu0 0
        %2645 = vmatmul.mubr.bf16.gmra.mrb[0].mxu0 %v2407
        %v2646 = vpop.f32.mrb[0].mxu0
        %v2647 = vadd.f32 %v2332, %v2646
        %v2648 = vpop.f32.mrb[0].mxu0
        %v2649 = vpop.f32.mrb[0].mxu0
        %v2650 = vadd.f32 %v2332, %v2649
        %v2651 = vpop.f32.mrb[0].mxu0
        %2652 = vmatprep.mubr.bf16.mxu0 0
        %2653 = vmatmul.mubr.bf16.gmra.mrb[0].mxu0 %v2410
        %v2654 = vpop.f32.mrb[0].mxu0
        %v2655 = vadd.f32 %v2332, %v2654
        %v2656 = vpop.f32.mrb[0].mxu0
        %v2657 = vpop.f32.mrb[0].mxu0
        %v2658 = vadd.f32 %v2332, %v2657
        %v2659 = vpop.f32.mrb[0].mxu0
        %2660 = vmatprep.mubr.bf16.mxu0 0
        %2661 = vmatmul.mubr.bf16.gmra.mrb[0].mxu0 %v2413
        %v2662 = vpop.f32.mrb[0].mxu0
        %v2663 = vadd.f32 %v2332, %v2662
        %v2664 = vpop.f32.mrb[0].mxu0
        %v2665 = vpop.f32.mrb[0].mxu0
        %v2666 = vadd.f32 %v2332, %v2665
        %v2667 = vpop.f32.mrb[0].mxu0
        %2668 = vmatprep.mubr.bf16.mxu0 0
        %2669 = vmatmul.mubr.bf16.gmra.mrb[0].mxu0 %v2416
        %v2670 = vpop.f32.mrb[0].mxu0
        %v2671 = vadd.f32 %v2332, %v2670
        %v2672 = vpop.f32.mrb[0].mxu0
        %v2673 = vpop.f32.mrb[0].mxu0
        %v2674 = vadd.f32 %v2332, %v2673
        %v2675 = vpop.f32.mrb[0].mxu0
        %2676 = vmatprep.mubr.bf16.mxu0 0
        %2677 = vmatmul.mubr.bf16.gmra.mrb[0].mxu0 %v2419
        %v2678 = vpop.f32.mrb[0].mxu0
        %v2679 = vadd.f32 %v2332, %v2678
        %v2680 = vpop.f32.mrb[0].mxu0
        %v2681 = vpop.f32.mrb[0].mxu0
        %v2682 = vadd.f32 %v2332, %v2681
        %v2683 = vpop.f32.mrb[0].mxu0
        %2684 = vmatprep.mubr.bf16.mxu0 0
        %2685 = vmatmul.mubr.bf16.gmra.mrb[0].mxu0 %v2422
        %v2686 = vpop.f32.mrb[0].mxu0
        %v2687 = vadd.f32 %v2332, %v2686
        %v2688 = vpop.f32.mrb[0].mxu0
        %v2689 = vpop.f32.mrb[0].mxu0
        %v2690 = vadd.f32 %v2332, %v2689
        %v2691 = vpop.f32.mrb[0].mxu0
        %2692 = vmatprep.mubr.bf16.mxu0 0
        %2693 = vmatmul.mubr.bf16.gmra.mrb[0].mxu0 %v2425
        %v2694 = vpop.f32.mrb[0].mxu0
        %v2695 = vadd.f32 %v2332, %v2694
        %v2696 = vpop.f32.mrb[0].mxu0
        %v2697 = vpop.f32.mrb[0].mxu0
        %v2698 = vadd.f32 %v2332, %v2697
        %v2699 = vpop.f32.mrb[0].mxu0
        %2700 = vmatprep.mubr.bf16.mxu0 0
        %2701 = vmatmul.mubr.bf16.gmra.mrb[0].mxu0 %v2428
        %v2702 = vpop.f32.mrb[0].mxu0
        %v2703 = vadd.f32 %v2332, %v2702
        %v2704 = vpop.f32.mrb[0].mxu0
        %v2705 = vpop.f32.mrb[0].mxu0
        %v2706 = vadd.f32 %v2332, %v2705
        %v2707 = vpop.f32.mrb[0].mxu0
        %2708 = vmatprep.mubr.bf16.mxu0 0
        %2709 = vmatmul.mubr.bf16.gmra.mrb[0].mxu0 %v2431
        %v2710 = vpop.f32.mrb[0].mxu0
        %v2711 = vadd.f32 %v2332, %v2710
        %v2712 = vpop.f32.mrb[0].mxu0
        %v2713 = vpop.f32.mrb[0].mxu0
        %v2714 = vadd.f32 %v2332, %v2713
        %v2715 = vpop.f32.mrb[0].mxu0
        %2716 = vmatprep.mubr.bf16.mxu0 0
        %2717 = vmatmul.mubr.bf16.gmra.mrb[0].mxu0 %v2434
        %v2718 = vpop.f32.mrb[0].mxu0
        %v2719 = vadd.f32 %v2332, %v2718
        %v2720 = vpop.f32.mrb[0].mxu0
        %v2721 = vpop.f32.mrb[0].mxu0
        %v2722 = vadd.f32 %v2332, %v2721
        %v2723 = vpop.f32.mrb[0].mxu0
        %2724 = vdwg.mxu0
        %v2725 = vmax.f32 %v2471, 0.0
        %v2726 = vmax.f32 %v2474, 0.0
        %v2727 = vmax.f32 %v2479, 0.0
        %v2728 = vmax.f32 %v2482, 0.0
        %v2729 = vmax.f32 %v2487, 0.0
        %v2730 = vmax.f32 %v2490, 0.0
        %v2731 = vmax.f32 %v2495, 0.0
        %v2732 = vmax.f32 %v2498, 0.0
        %v2733 = vmax.f32 %v2503, 0.0
        %v2734 = vmax.f32 %v2506, 0.0
        %v2735 = vmax.f32 %v2511, 0.0
        %v2736 = vmax.f32 %v2514, 0.0
        %v2737 = vmax.f32 %v2519, 0.0
        %v2738 = vmax.f32 %v2522, 0.0
        %v2739 = vmax.f32 %v2527, 0.0
        %v2740 = vmax.f32 %v2530, 0.0
        %v2741 = vmax.f32 %v2535, 0.0
        %v2742 = vmax.f32 %v2538, 0.0
        %v2743 = vmax.f32 %v2543, 0.0
        %v2744 = vmax.f32 %v2546, 0.0
        %v2745 = vmax.f32 %v2551, 0.0
        %v2746 = vmax.f32 %v2554, 0.0
        %v2747 = vmax.f32 %v2559, 0.0
        %v2748 = vmax.f32 %v2562, 0.0
        %v2749 = vmax.f32 %v2567, 0.0
        %v2750 = vmax.f32 %v2570, 0.0
        %v2751 = vmax.f32 %v2575, 0.0
        %v2752 = vmax.f32 %v2578, 0.0
        %v2753 = vmax.f32 %v2583, 0.0
        %v2754 = vmax.f32 %v2586, 0.0
        %v2755 = vmax.f32 %v2591, 0.0
        %v2756 = vmax.f32 %v2594, 0.0
        %v2757 = vmax.f32 %v2599, 0.0
        %v2758 = vmax.f32 %v2602, 0.0
        %v2759 = vmax.f32 %v2607, 0.0
        %v2760 = vmax.f32 %v2610, 0.0
        %v2761 = vmax.f32 %v2615, 0.0
        %v2762 = vmax.f32 %v2618, 0.0
        %v2763 = vmax.f32 %v2623, 0.0
        %v2764 = vmax.f32 %v2626, 0.0
        %v2765 = vmax.f32 %v2631, 0.0
        %v2766 = vmax.f32 %v2634, 0.0
        %v2767 = vmax.f32 %v2639, 0.0
        %v2768 = vmax.f32 %v2642, 0.0
        %v2769 = vmax.f32 %v2647, 0.0
        %v2770 = vmax.f32 %v2650, 0.0
        %v2771 = vmax.f32 %v2655, 0.0
        %v2772 = vmax.f32 %v2658, 0.0
        %v2773 = vmax.f32 %v2663, 0.0
        %v2774 = vmax.f32 %v2666, 0.0
        %v2775 = vmax.f32 %v2671, 0.0
        %v2776 = vmax.f32 %v2674, 0.0
        %v2777 = vmax.f32 %v2679, 0.0
        %v2778 = vmax.f32 %v2682, 0.0
        %v2779 = vmax.f32 %v2687, 0.0
        %v2780 = vmax.f32 %v2690, 0.0
        %v2781 = vmax.f32 %v2695, 0.0
        %v2782 = vmax.f32 %v2698, 0.0
        %v2783 = vmax.f32 %v2703, 0.0
        %v2784 = vmax.f32 %v2706, 0.0
        %v2785 = vmax.f32 %v2711, 0.0
        %v2786 = vmax.f32 %v2714, 0.0
        %v2787 = vmax.f32 %v2719, 0.0
        %v2788 = vmax.f32 %v2722, 0.0
        %v2789 = vld [vmem:[%s9] sm:$0xf]
        %v2790 = vld [vmem:[%s9 + $0x4] sm:$0xf]
        %v2791 = vld [vmem:[%s9 + $0x8] sm:$0xf]
        %v2792 = vld [vmem:[%s9 + $0xc] sm:$0xf]
        %v2793 = vld [vmem:[%s10] sm:$0x1]
        %v2794 = vpack.c.bf16 %v2726, %v2725
        %v2795 = vpack.c.bf16 %v2728, %v2727
        %v2796 = vpack.c.bf16 %v2730, %v2729
        %v2797 = vpack.c.bf16 %v2732, %v2731
        %v2798 = vpack.c.bf16 %v2734, %v2733
        %v2799 = vpack.c.bf16 %v2736, %v2735
        %v2800 = vpack.c.bf16 %v2738, %v2737
        %v2801 = vpack.c.bf16 %v2740, %v2739
        %v2802 = vpack.c.bf16 %v2742, %v2741
        %v2803 = vpack.c.bf16 %v2744, %v2743
        %v2804 = vpack.c.bf16 %v2746, %v2745
        %v2805 = vpack.c.bf16 %v2748, %v2747
        %v2806 = vpack.c.bf16 %v2750, %v2749
        %v2807 = vpack.c.bf16 %v2752, %v2751
        %v2808 = vpack.c.bf16 %v2754, %v2753
        %v2809 = vpack.c.bf16 %v2756, %v2755
        %v2810 = vpack.c.bf16 %v2758, %v2757
        %v2811 = vpack.c.bf16 %v2760, %v2759
        %v2812 = vpack.c.bf16 %v2762, %v2761
        %v2813 = vpack.c.bf16 %v2764, %v2763
        %v2814 = vpack.c.bf16 %v2766, %v2765
        %v2815 = vpack.c.bf16 %v2768, %v2767
        %v2816 = vpack.c.bf16 %v2770, %v2769
        %v2817 = vpack.c.bf16 %v2772, %v2771
        %v2818 = vpack.c.bf16 %v2774, %v2773
        %v2819 = vpack.c.bf16 %v2776, %v2775
        %v2820 = vpack.c.bf16 %v2778, %v2777
        %v2821 = vpack.c.bf16 %v2780, %v2779
        %v2822 = vpack.c.bf16 %v2782, %v2781
        %v2823 = vpack.c.bf16 %v2784, %v2783
        %v2824 = vpack.c.bf16 %v2786, %v2785
        %v2825 = vpack.c.bf16 %v2788, %v2787
        %v2827 = vlaneseq
        %v2828 = vshrl.u32 %v2827, 7
        %v2829 = vsub.s32 0, %v2828
        %v2830 = vrot.slane %v2793, %v2829
        %v2836 = vunpack.c.l.b16 %v2789
        %v2837 = vunpack.c.l.b16 %v2790
        %v2838 = vunpack.c.l.b16 %v2791
        %v2839 = vunpack.c.l.b16 %v2792
        %v2840 = vpack.c.b16 %v2837, %v2836
        %v2841 = vpack.c.b16 %v2839, %v2838
        %vm2844 = vcmask 261120
        %v2846 = vsel %vm2844, %v2794, 0
        %v2849 = vsel %vm2844, %v2795, 0
        %v2852 = vsel %vm2844, %v2796, 0
        %v2855 = vsel %vm2844, %v2797, 0
        %v2858 = vsel %vm2844, %v2798, 0
        %v2861 = vsel %vm2844, %v2799, 0
        %v2864 = vsel %vm2844, %v2800, 0
        %v2867 = vsel %vm2844, %v2801, 0
        %v2870 = vsel %vm2844, %v2802, 0
        %v2873 = vsel %vm2844, %v2803, 0
        %v2876 = vsel %vm2844, %v2804, 0
        %v2879 = vsel %vm2844, %v2805, 0
        %v2882 = vsel %vm2844, %v2806, 0
        %v2885 = vsel %vm2844, %v2807, 0
        %v2888 = vsel %vm2844, %v2808, 0
        %v2891 = vsel %vm2844, %v2809, 0
        %v2894 = vsel %vm2844, %v2810, 0
        %v2897 = vsel %vm2844, %v2811, 0
        %v2900 = vsel %vm2844, %v2812, 0
        %v2903 = vsel %vm2844, %v2813, 0
        %v2906 = vsel %vm2844, %v2814, 0
        %v2909 = vsel %vm2844, %v2815, 0
        %v2912 = vsel %vm2844, %v2816, 0
        %v2915 = vsel %vm2844, %v2817, 0
        %v2918 = vsel %vm2844, %v2818, 0
        %v2921 = vsel %vm2844, %v2819, 0
        %v2924 = vsel %vm2844, %v2820, 0
        %v2927 = vsel %vm2844, %v2821, 0
        %v2930 = vsel %vm2844, %v2822, 0
        %v2933 = vsel %vm2844, %v2823, 0
        %v2936 = vsel %vm2844, %v2824, 0
        %v2939 = vsel %vm2844, %v2825, 0
        %2941 = vmatprep.subr.bf16.mxu0 0
        %2942 = vmatpush1.bf16.msra.mxu0 %v2840
        %2943 = vmatprep.subr.bf16.mxu0 0
        %2944 = vmatpush1.bf16.msra.mxu0 %v2841
        %2945 = vmatprep.subr.bf16.mxu0 0
        %2946 = vmatpush1.bf16.msra.mxu0 0
        %2947 = vmatprep.subr.bf16.mxu0 0
        %2948 = vmatpush1.bf16.msra.mxu0 0
        %2949 = vmatprep.subr.bf16.mxu0 0
        %2950 = vmatpush1.bf16.msra.mxu0 0
        %2951 = vmatprep.subr.bf16.mxu0 0
        %2952 = vmatpush1.bf16.msra.mxu0 0
        %2953 = vmatprep.subr.bf16.mxu0 0
        %2954 = vmatpush1.bf16.msra.mxu0 0
        %2955 = vmatprep.subr.bf16.mxu0 0
        %2956 = vmatpush1.bf16.msra.mxu0 0
        %2957 = vmatprep.subr.bf16.mxu0 0
        %2958 = vmatpush1.bf16.msra.mxu0 0
        %2959 = vmatprep.subr.bf16.mxu0 0
        %2960 = vmatpush1.bf16.msra.mxu0 0
        %2961 = vmatprep.subr.bf16.mxu0 0
        %2962 = vmatpush1.bf16.msra.mxu0 0
        %2963 = vmatprep.subr.bf16.mxu0 0
        %2964 = vmatpush1.bf16.msra.mxu0 0
        %2965 = vmatprep.subr.bf16.mxu0 0
        %2966 = vmatpush1.bf16.msra.mxu0 0
        %2967 = vmatprep.subr.bf16.mxu0 0
        %2968 = vmatpush1.bf16.msra.mxu0 0
        %2969 = vmatprep.subr.bf16.mxu0 0
        %2970 = vmatpush1.bf16.msra.mxu0 0
        %2971 = vmatprep.subr.bf16.mxu0 0
        %2972 = vmatpush1.bf16.msra.mxu0 0
        %2973 = vmatprep.mubr.bf16.mxu0 0
        %2974 = vmatmul.mubr.bf16.gmra.mrb[0].mxu0 %v2846
        %v2975 = vpop.f32.mrb[0].mxu0
        %v2976 = vadd.f32 %v2830, %v2975
        %v2977 = vpop.f32.mrb[0].mxu0
        %v2978 = vpop.f32.mrb[0].mxu0
        %v2979 = vadd.f32 %v2830, %v2978
        %v2980 = vpop.f32.mrb[0].mxu0
        %2981 = vmatprep.mubr.bf16.mxu0 0
        %2982 = vmatmul.mubr.bf16.gmra.mrb[0].mxu0 %v2849
        %v2983 = vpop.f32.mrb[0].mxu0
        %v2984 = vadd.f32 %v2830, %v2983
        %v2985 = vpop.f32.mrb[0].mxu0
        %v2986 = vpop.f32.mrb[0].mxu0
        %v2987 = vadd.f32 %v2830, %v2986
        %v2988 = vpop.f32.mrb[0].mxu0
        %2989 = vmatprep.mubr.bf16.mxu0 0
        %2990 = vmatmul.mubr.bf16.gmra.mrb[0].mxu0 %v2852
        %v2991 = vpop.f32.mrb[0].mxu0
        %v2992 = vadd.f32 %v2830, %v2991
        %v2993 = vpop.f32.mrb[0].mxu0
        %v2994 = vpop.f32.mrb[0].mxu0
        %v2995 = vadd.f32 %v2830, %v2994
        %v2996 = vpop.f32.mrb[0].mxu0
        %2997 = vmatprep.mubr.bf16.mxu0 0
        %2998 = vmatmul.mubr.bf16.gmra.mrb[0].mxu0 %v2855
        %v2999 = vpop.f32.mrb[0].mxu0
        %v3000 = vadd.f32 %v2830, %v2999
        %v3001 = vpop.f32.mrb[0].mxu0
        %v3002 = vpop.f32.mrb[0].mxu0
        %v3003 = vadd.f32 %v2830, %v3002
        %v3004 = vpop.f32.mrb[0].mxu0
        %3005 = vmatprep.mubr.bf16.mxu0 0
        %3006 = vmatmul.mubr.bf16.gmra.mrb[0].mxu0 %v2858
        %v3007 = vpop.f32.mrb[0].mxu0
        %v3008 = vadd.f32 %v2830, %v3007
        %v3009 = vpop.f32.mrb[0].mxu0
        %v3010 = vpop.f32.mrb[0].mxu0
        %v3011 = vadd.f32 %v2830, %v3010
        %v3012 = vpop.f32.mrb[0].mxu0
        %3013 = vmatprep.mubr.bf16.mxu0 0
        %3014 = vmatmul.mubr.bf16.gmra.mrb[0].mxu0 %v2861
        %v3015 = vpop.f32.mrb[0].mxu0
        %v3016 = vadd.f32 %v2830, %v3015
        %v3017 = vpop.f32.mrb[0].mxu0
        %v3018 = vpop.f32.mrb[0].mxu0
        %v3019 = vadd.f32 %v2830, %v3018
        %v3020 = vpop.f32.mrb[0].mxu0
        %3021 = vmatprep.mubr.bf16.mxu0 0
        %3022 = vmatmul.mubr.bf16.gmra.mrb[0].mxu0 %v2864
        %v3023 = vpop.f32.mrb[0].mxu0
        %v3024 = vadd.f32 %v2830, %v3023
        %v3025 = vpop.f32.mrb[0].mxu0
        %v3026 = vpop.f32.mrb[0].mxu0
        %v3027 = vadd.f32 %v2830, %v3026
        %v3028 = vpop.f32.mrb[0].mxu0
        %3029 = vmatprep.mubr.bf16.mxu0 0
        %3030 = vmatmul.mubr.bf16.gmra.mrb[0].mxu0 %v2867
        %v3031 = vpop.f32.mrb[0].mxu0
        %v3032 = vadd.f32 %v2830, %v3031
        %v3033 = vpop.f32.mrb[0].mxu0
        %v3034 = vpop.f32.mrb[0].mxu0
        %v3035 = vadd.f32 %v2830, %v3034
        %v3036 = vpop.f32.mrb[0].mxu0
        %3037 = vmatprep.mubr.bf16.mxu0 0
        %3038 = vmatmul.mubr.bf16.gmra.mrb[0].mxu0 %v2870
        %v3039 = vpop.f32.mrb[0].mxu0
        %v3040 = vadd.f32 %v2830, %v3039
        %v3041 = vpop.f32.mrb[0].mxu0
        %v3042 = vpop.f32.mrb[0].mxu0
        %v3043 = vadd.f32 %v2830, %v3042
        %v3044 = vpop.f32.mrb[0].mxu0
        %3045 = vmatprep.mubr.bf16.mxu0 0
        %3046 = vmatmul.mubr.bf16.gmra.mrb[0].mxu0 %v2873
        %v3047 = vpop.f32.mrb[0].mxu0
        %v3048 = vadd.f32 %v2830, %v3047
        %v3049 = vpop.f32.mrb[0].mxu0
        %v3050 = vpop.f32.mrb[0].mxu0
        %v3051 = vadd.f32 %v2830, %v3050
        %v3052 = vpop.f32.mrb[0].mxu0
        %3053 = vmatprep.mubr.bf16.mxu0 0
        %3054 = vmatmul.mubr.bf16.gmra.mrb[0].mxu0 %v2876
        %v3055 = vpop.f32.mrb[0].mxu0
        %v3056 = vadd.f32 %v2830, %v3055
        %v3057 = vpop.f32.mrb[0].mxu0
        %v3058 = vpop.f32.mrb[0].mxu0
        %v3059 = vadd.f32 %v2830, %v3058
        %v3060 = vpop.f32.mrb[0].mxu0
        %3061 = vmatprep.mubr.bf16.mxu0 0
        %3062 = vmatmul.mubr.bf16.gmra.mrb[0].mxu0 %v2879
        %v3063 = vpop.f32.mrb[0].mxu0
        %v3064 = vadd.f32 %v2830, %v3063
        %v3065 = vpop.f32.mrb[0].mxu0
        %v3066 = vpop.f32.mrb[0].mxu0
        %v3067 = vadd.f32 %v2830, %v3066
        %v3068 = vpop.f32.mrb[0].mxu0
        %3069 = vmatprep.mubr.bf16.mxu0 0
        %3070 = vmatmul.mubr.bf16.gmra.mrb[0].mxu0 %v2882
        %v3071 = vpop.f32.mrb[0].mxu0
        %v3072 = vadd.f32 %v2830, %v3071
        %v3073 = vpop.f32.mrb[0].mxu0
        %v3074 = vpop.f32.mrb[0].mxu0
        %v3075 = vadd.f32 %v2830, %v3074
        %v3076 = vpop.f32.mrb[0].mxu0
        %3077 = vmatprep.mubr.bf16.mxu0 0
        %3078 = vmatmul.mubr.bf16.gmra.mrb[0].mxu0 %v2885
        %v3079 = vpop.f32.mrb[0].mxu0
        %v3080 = vadd.f32 %v2830, %v3079
        %v3081 = vpop.f32.mrb[0].mxu0
        %v3082 = vpop.f32.mrb[0].mxu0
        %v3083 = vadd.f32 %v2830, %v3082
        %v3084 = vpop.f32.mrb[0].mxu0
        %3085 = vmatprep.mubr.bf16.mxu0 0
        %3086 = vmatmul.mubr.bf16.gmra.mrb[0].mxu0 %v2888
        %v3087 = vpop.f32.mrb[0].mxu0
        %v3088 = vadd.f32 %v2830, %v3087
        %v3089 = vpop.f32.mrb[0].mxu0
        %v3090 = vpop.f32.mrb[0].mxu0
        %v3091 = vadd.f32 %v2830, %v3090
        %v3092 = vpop.f32.mrb[0].mxu0
        %3093 = vmatprep.mubr.bf16.mxu0 0
        %3094 = vmatmul.mubr.bf16.gmra.mrb[0].mxu0 %v2891
        %v3095 = vpop.f32.mrb[0].mxu0
        %v3096 = vadd.f32 %v2830, %v3095
        %v3097 = vpop.f32.mrb[0].mxu0
        %v3098 = vpop.f32.mrb[0].mxu0
        %v3099 = vadd.f32 %v2830, %v3098
        %v3100 = vpop.f32.mrb[0].mxu0
        %3101 = vmatprep.mubr.bf16.mxu0 0
        %3102 = vmatmul.mubr.bf16.gmra.mrb[0].mxu0 %v2894
        %v3103 = vpop.f32.mrb[0].mxu0
        %v3104 = vadd.f32 %v2830, %v3103
        %v3105 = vpop.f32.mrb[0].mxu0
        %v3106 = vpop.f32.mrb[0].mxu0
        %v3107 = vadd.f32 %v2830, %v3106
        %v3108 = vpop.f32.mrb[0].mxu0
        %3109 = vmatprep.mubr.bf16.mxu0 0
        %3110 = vmatmul.mubr.bf16.gmra.mrb[0].mxu0 %v2897
        %v3111 = vpop.f32.mrb[0].mxu0
        %v3112 = vadd.f32 %v2830, %v3111
        %v3113 = vpop.f32.mrb[0].mxu0
        %v3114 = vpop.f32.mrb[0].mxu0
        %v3115 = vadd.f32 %v2830, %v3114
        %v3116 = vpop.f32.mrb[0].mxu0
        %3117 = vmatprep.mubr.bf16.mxu0 0
        %3118 = vmatmul.mubr.bf16.gmra.mrb[0].mxu0 %v2900
        %v3119 = vpop.f32.mrb[0].mxu0
        %v3120 = vadd.f32 %v2830, %v3119
        %v3121 = vpop.f32.mrb[0].mxu0
        %v3122 = vpop.f32.mrb[0].mxu0
        %v3123 = vadd.f32 %v2830, %v3122
        %v3124 = vpop.f32.mrb[0].mxu0
        %3125 = vmatprep.mubr.bf16.mxu0 0
        %3126 = vmatmul.mubr.bf16.gmra.mrb[0].mxu0 %v2903
        %v3127 = vpop.f32.mrb[0].mxu0
        %v3128 = vadd.f32 %v2830, %v3127
        %v3129 = vpop.f32.mrb[0].mxu0
        %v3130 = vpop.f32.mrb[0].mxu0
        %v3131 = vadd.f32 %v2830, %v3130
        %v3132 = vpop.f32.mrb[0].mxu0
        %3133 = vmatprep.mubr.bf16.mxu0 0
        %3134 = vmatmul.mubr.bf16.gmra.mrb[0].mxu0 %v2906
        %v3135 = vpop.f32.mrb[0].mxu0
        %v3136 = vadd.f32 %v2830, %v3135
        %v3137 = vpop.f32.mrb[0].mxu0
        %v3138 = vpop.f32.mrb[0].mxu0
        %v3139 = vadd.f32 %v2830, %v3138
        %v3140 = vpop.f32.mrb[0].mxu0
        %3141 = vmatprep.mubr.bf16.mxu0 0
        %3142 = vmatmul.mubr.bf16.gmra.mrb[0].mxu0 %v2909
        %v3143 = vpop.f32.mrb[0].mxu0
        %v3144 = vadd.f32 %v2830, %v3143
        %v3145 = vpop.f32.mrb[0].mxu0
        %v3146 = vpop.f32.mrb[0].mxu0
        %v3147 = vadd.f32 %v2830, %v3146
        %v3148 = vpop.f32.mrb[0].mxu0
        %3149 = vmatprep.mubr.bf16.mxu0 0
        %3150 = vmatmul.mubr.bf16.gmra.mrb[0].mxu0 %v2912
        %v3151 = vpop.f32.mrb[0].mxu0
        %v3152 = vadd.f32 %v2830, %v3151
        %v3153 = vpop.f32.mrb[0].mxu0
        %v3154 = vpop.f32.mrb[0].mxu0
        %v3155 = vadd.f32 %v2830, %v3154
        %v3156 = vpop.f32.mrb[0].mxu0
        %3157 = vmatprep.mubr.bf16.mxu0 0
        %3158 = vmatmul.mubr.bf16.gmra.mrb[0].mxu0 %v2915
        %v3159 = vpop.f32.mrb[0].mxu0
        %v3160 = vadd.f32 %v2830, %v3159
        %v3161 = vpop.f32.mrb[0].mxu0
        %v3162 = vpop.f32.mrb[0].mxu0
        %v3163 = vadd.f32 %v2830, %v3162
        %v3164 = vpop.f32.mrb[0].mxu0
        %3165 = vmatprep.mubr.bf16.mxu0 0
        %3166 = vmatmul.mubr.bf16.gmra.mrb[0].mxu0 %v2918
        %v3167 = vpop.f32.mrb[0].mxu0
        %v3168 = vadd.f32 %v2830, %v3167
        %v3169 = vpop.f32.mrb[0].mxu0
        %v3170 = vpop.f32.mrb[0].mxu0
        %v3171 = vadd.f32 %v2830, %v3170
        %v3172 = vpop.f32.mrb[0].mxu0
        %3173 = vmatprep.mubr.bf16.mxu0 0
        %3174 = vmatmul.mubr.bf16.gmra.mrb[0].mxu0 %v2921
        %v3175 = vpop.f32.mrb[0].mxu0
        %v3176 = vadd.f32 %v2830, %v3175
        %v3177 = vpop.f32.mrb[0].mxu0
        %v3178 = vpop.f32.mrb[0].mxu0
        %v3179 = vadd.f32 %v2830, %v3178
        %v3180 = vpop.f32.mrb[0].mxu0
        %3181 = vmatprep.mubr.bf16.mxu0 0
        %3182 = vmatmul.mubr.bf16.gmra.mrb[0].mxu0 %v2924
        %v3183 = vpop.f32.mrb[0].mxu0
        %v3184 = vadd.f32 %v2830, %v3183
        %v3185 = vpop.f32.mrb[0].mxu0
        %v3186 = vpop.f32.mrb[0].mxu0
        %v3187 = vadd.f32 %v2830, %v3186
        %v3188 = vpop.f32.mrb[0].mxu0
        %3189 = vmatprep.mubr.bf16.mxu0 0
        %3190 = vmatmul.mubr.bf16.gmra.mrb[0].mxu0 %v2927
        %v3191 = vpop.f32.mrb[0].mxu0
        %v3192 = vadd.f32 %v2830, %v3191
        %v3193 = vpop.f32.mrb[0].mxu0
        %v3194 = vpop.f32.mrb[0].mxu0
        %v3195 = vadd.f32 %v2830, %v3194
        %v3196 = vpop.f32.mrb[0].mxu0
        %3197 = vmatprep.mubr.bf16.mxu0 0
        %3198 = vmatmul.mubr.bf16.gmra.mrb[0].mxu0 %v2930
        %v3199 = vpop.f32.mrb[0].mxu0
        %v3200 = vadd.f32 %v2830, %v3199
        %v3201 = vpop.f32.mrb[0].mxu0
        %v3202 = vpop.f32.mrb[0].mxu0
        %v3203 = vadd.f32 %v2830, %v3202
        %v3204 = vpop.f32.mrb[0].mxu0
        %3205 = vmatprep.mubr.bf16.mxu0 0
        %3206 = vmatmul.mubr.bf16.gmra.mrb[0].mxu0 %v2933
        %v3207 = vpop.f32.mrb[0].mxu0
        %v3208 = vadd.f32 %v2830, %v3207
        %v3209 = vpop.f32.mrb[0].mxu0
        %v3210 = vpop.f32.mrb[0].mxu0
        %v3211 = vadd.f32 %v2830, %v3210
        %v3212 = vpop.f32.mrb[0].mxu0
        %3213 = vmatprep.mubr.bf16.mxu0 0
        %3214 = vmatmul.mubr.bf16.gmra.mrb[0].mxu0 %v2936
        %v3215 = vpop.f32.mrb[0].mxu0
        %v3216 = vadd.f32 %v2830, %v3215
        %v3217 = vpop.f32.mrb[0].mxu0
        %v3218 = vpop.f32.mrb[0].mxu0
        %v3219 = vadd.f32 %v2830, %v3218
        %v3220 = vpop.f32.mrb[0].mxu0
        %3221 = vmatprep.mubr.bf16.mxu0 0
        %3222 = vmatmul.mubr.bf16.gmra.mrb[0].mxu0 %v2939
        %v3223 = vpop.f32.mrb[0].mxu0
        %v3224 = vadd.f32 %v2830, %v3223
        %v3225 = vpop.f32.mrb[0].mxu0
        %v3226 = vpop.f32.mrb[0].mxu0
        %v3227 = vadd.f32 %v2830, %v3226
        %v3228 = vpop.f32.mrb[0].mxu0
        %3229 = vdwg.mxu0
        %v3230 = vmax.f32 %v2976, 0.0
        %v3231 = vmax.f32 %v2979, 0.0
        %v3232 = vmax.f32 %v2984, 0.0
        %v3233 = vmax.f32 %v2987, 0.0
        %v3234 = vmax.f32 %v2992, 0.0
        %v3235 = vmax.f32 %v2995, 0.0
        %v3236 = vmax.f32 %v3000, 0.0
        %v3237 = vmax.f32 %v3003, 0.0
        %v3238 = vmax.f32 %v3008, 0.0
        %v3239 = vmax.f32 %v3011, 0.0
        %v3240 = vmax.f32 %v3016, 0.0
        %v3241 = vmax.f32 %v3019, 0.0
        %v3242 = vmax.f32 %v3024, 0.0
        %v3243 = vmax.f32 %v3027, 0.0
        %v3244 = vmax.f32 %v3032, 0.0
        %v3245 = vmax.f32 %v3035, 0.0
        %v3246 = vmax.f32 %v3040, 0.0
        %v3247 = vmax.f32 %v3043, 0.0
        %v3248 = vmax.f32 %v3048, 0.0
        %v3249 = vmax.f32 %v3051, 0.0
        %v3250 = vmax.f32 %v3056, 0.0
        %v3251 = vmax.f32 %v3059, 0.0
        %v3252 = vmax.f32 %v3064, 0.0
        %v3253 = vmax.f32 %v3067, 0.0
        %v3254 = vmax.f32 %v3072, 0.0
        %v3255 = vmax.f32 %v3075, 0.0
        %v3256 = vmax.f32 %v3080, 0.0
        %v3257 = vmax.f32 %v3083, 0.0
        %v3258 = vmax.f32 %v3088, 0.0
        %v3259 = vmax.f32 %v3091, 0.0
        %v3260 = vmax.f32 %v3096, 0.0
        %v3261 = vmax.f32 %v3099, 0.0
        %v3262 = vmax.f32 %v3104, 0.0
        %v3263 = vmax.f32 %v3107, 0.0
        %v3264 = vmax.f32 %v3112, 0.0
        %v3265 = vmax.f32 %v3115, 0.0
        %v3266 = vmax.f32 %v3120, 0.0
        %v3267 = vmax.f32 %v3123, 0.0
        %v3268 = vmax.f32 %v3128, 0.0
        %v3269 = vmax.f32 %v3131, 0.0
        %v3270 = vmax.f32 %v3136, 0.0
        %v3271 = vmax.f32 %v3139, 0.0
        %v3272 = vmax.f32 %v3144, 0.0
        %v3273 = vmax.f32 %v3147, 0.0
        %v3274 = vmax.f32 %v3152, 0.0
        %v3275 = vmax.f32 %v3155, 0.0
        %v3276 = vmax.f32 %v3160, 0.0
        %v3277 = vmax.f32 %v3163, 0.0
        %v3278 = vmax.f32 %v3168, 0.0
        %v3279 = vmax.f32 %v3171, 0.0
        %v3280 = vmax.f32 %v3176, 0.0
        %v3281 = vmax.f32 %v3179, 0.0
        %v3282 = vmax.f32 %v3184, 0.0
        %v3283 = vmax.f32 %v3187, 0.0
        %v3284 = vmax.f32 %v3192, 0.0
        %v3285 = vmax.f32 %v3195, 0.0
        %v3286 = vmax.f32 %v3200, 0.0
        %v3287 = vmax.f32 %v3203, 0.0
        %v3288 = vmax.f32 %v3208, 0.0
        %v3289 = vmax.f32 %v3211, 0.0
        %v3290 = vmax.f32 %v3216, 0.0
        %v3291 = vmax.f32 %v3219, 0.0
        %v3292 = vmax.f32 %v3224, 0.0
        %v3293 = vmax.f32 %v3227, 0.0
        %v3294 = vld [vmem:[%s11] sm:$0xff]
        %v3295 = vld [vmem:[%s11 + $0x8] sm:$0xff]
        %v3296 = vld [vmem:[%s11 + $0x10] sm:$0xff]
        %v3297 = vld [vmem:[%s11 + $0x18] sm:$0xff]
        %v3298 = vld [vmem:[%s11 + $0x20] sm:$0xff]
        %v3299 = vld [vmem:[%s11 + $0x28] sm:$0xff]
        %v3300 = vld [vmem:[%s11 + $0x30] sm:$0xff]
        %v3301 = vld [vmem:[%s11 + $0x38] sm:$0xff]
        %v3302 = vld [vmem:[%s12] sm:$0x3]
        %v3303 = vpack.c.bf16 %v3231, %v3230
        %v3304 = vpack.c.bf16 %v3233, %v3232
        %v3305 = vpack.c.bf16 %v3235, %v3234
        %v3306 = vpack.c.bf16 %v3237, %v3236
        %v3307 = vpack.c.bf16 %v3239, %v3238
        %v3308 = vpack.c.bf16 %v3241, %v3240
        %v3309 = vpack.c.bf16 %v3243, %v3242
        %v3310 = vpack.c.bf16 %v3245, %v3244
        %v3311 = vpack.c.bf16 %v3247, %v3246
        %v3312 = vpack.c.bf16 %v3249, %v3248
        %v3313 = vpack.c.bf16 %v3251, %v3250
        %v3314 = vpack.c.bf16 %v3253, %v3252
        %v3315 = vpack.c.bf16 %v3255, %v3254
        %v3316 = vpack.c.bf16 %v3257, %v3256
        %v3317 = vpack.c.bf16 %v3259, %v3258
        %v3318 = vpack.c.bf16 %v3261, %v3260
        %v3319 = vpack.c.bf16 %v3263, %v3262
        %v3320 = vpack.c.bf16 %v3265, %v3264
        %v3321 = vpack.c.bf16 %v3267, %v3266
        %v3322 = vpack.c.bf16 %v3269, %v3268
        %v3323 = vpack.c.bf16 %v3271, %v3270
        %v3324 = vpack.c.bf16 %v3273, %v3272
        %v3325 = vpack.c.bf16 %v3275, %v3274
        %v3326 = vpack.c.bf16 %v3277, %v3276
        %v3327 = vpack.c.bf16 %v3279, %v3278
        %v3328 = vpack.c.bf16 %v3281, %v3280
        %v3329 = vpack.c.bf16 %v3283, %v3282
        %v3330 = vpack.c.bf16 %v3285, %v3284
        %v3331 = vpack.c.bf16 %v3287, %v3286
        %v3332 = vpack.c.bf16 %v3289, %v3288
        %v3333 = vpack.c.bf16 %v3291, %v3290
        %v3334 = vpack.c.bf16 %v3293, %v3292
        %v3336 = vlaneseq
        %v3337 = vshrl.u32 %v3336, 7
        %v3338 = vsub.s32 0, %v3337
        %v3339 = vrot.slane %v3302, %v3338
        %v3340 = vlaneseq
        %v3341 = vshrl.u32 %v3340, 7
        %v3342 = vsub.s32 1, %v3341
        %v3343 = vrot.slane %v3302, %v3342
        %v3354 = vunpack.c.l.b16 %v3294
        %v3355 = vunpack.c.h.b16 %v3294
        %v3356 = vunpack.c.l.b16 %v3295
        %v3357 = vunpack.c.h.b16 %v3295
        %v3358 = vunpack.c.l.b16 %v3296
        %v3359 = vunpack.c.h.b16 %v3296
        %v3360 = vunpack.c.l.b16 %v3297
        %v3361 = vunpack.c.h.b16 %v3297
        %v3362 = vunpack.c.l.b16 %v3298
        %v3363 = vunpack.c.h.b16 %v3298
        %v3364 = vunpack.c.l.b16 %v3299
        %v3365 = vunpack.c.h.b16 %v3299
        %v3366 = vunpack.c.l.b16 %v3300
        %v3367 = vunpack.c.h.b16 %v3300
        %v3368 = vunpack.c.l.b16 %v3301
        %v3369 = vunpack.c.h.b16 %v3301
        %v3370 = vpack.c.b16 %v3356, %v3354
        %v3371 = vpack.c.b16 %v3357, %v3355
        %v3372 = vpack.c.b16 %v3360, %v3358
        %v3373 = vpack.c.b16 %v3361, %v3359
        %v3374 = vpack.c.b16 %v3364, %v3362
        %v3375 = vpack.c.b16 %v3365, %v3363
        %v3376 = vpack.c.b16 %v3368, %v3366
        %v3377 = vpack.c.b16 %v3369, %v3367
        %vm3386 = vcmask 523264
        %v3388 = vsel %vm3386, %v3303, 0
        %v3391 = vsel %vm3386, %v3304, 0
        %v3394 = vsel %vm3386, %v3305, 0
        %v3397 = vsel %vm3386, %v3306, 0
        %v3400 = vsel %vm3386, %v3307, 0
        %v3403 = vsel %vm3386, %v3308, 0
        %v3406 = vsel %vm3386, %v3309, 0
        %v3409 = vsel %vm3386, %v3310, 0
        %v3412 = vsel %vm3386, %v3311, 0
        %v3415 = vsel %vm3386, %v3312, 0
        %v3418 = vsel %vm3386, %v3313, 0
        %v3421 = vsel %vm3386, %v3314, 0
        %v3424 = vsel %vm3386, %v3315, 0
        %v3427 = vsel %vm3386, %v3316, 0
        %v3430 = vsel %vm3386, %v3317, 0
        %v3433 = vsel %vm3386, %v3318, 0
        %v3436 = vsel %vm3386, %v3319, 0
        %v3439 = vsel %vm3386, %v3320, 0
        %v3442 = vsel %vm3386, %v3321, 0
        %v3445 = vsel %vm3386, %v3322, 0
        %v3448 = vsel %vm3386, %v3323, 0
        %v3451 = vsel %vm3386, %v3324, 0
        %v3454 = vsel %vm3386, %v3325, 0
        %v3457 = vsel %vm3386, %v3326, 0
        %v3460 = vsel %vm3386, %v3327, 0
        %v3463 = vsel %vm3386, %v3328, 0
        %v3466 = vsel %vm3386, %v3329, 0
        %v3469 = vsel %vm3386, %v3330, 0
        %v3472 = vsel %vm3386, %v3331, 0
        %v3475 = vsel %vm3386, %v3332, 0
        %v3478 = vsel %vm3386, %v3333, 0
        %v3481 = vsel %vm3386, %v3334, 0
        %3483 = vmatprep.subr.bf16.mxu0 %v3371
        %3484 = vmatpush1.bf16.msra.mxu0 %v3370
        %3485 = vmatprep.subr.bf16.mxu0 %v3373
        %3486 = vmatpush1.bf16.msra.mxu0 %v3372
        %3487 = vmatprep.subr.bf16.mxu0 %v3375
        %3488 = vmatpush1.bf16.msra.mxu0 %v3374
        %3489 = vmatprep.subr.bf16.mxu0 %v3377
        %3490 = vmatpush1.bf16.msra.mxu0 %v3376
        %3491 = vmatprep.subr.bf16.mxu0 0
        %3492 = vmatpush1.bf16.msra.mxu0 0
        %3493 = vmatprep.subr.bf16.mxu0 0
        %3494 = vmatpush1.bf16.msra.mxu0 0
        %3495 = vmatprep.subr.bf16.mxu0 0
        %3496 = vmatpush1.bf16.msra.mxu0 0
        %3497 = vmatprep.subr.bf16.mxu0 0
        %3498 = vmatpush1.bf16.msra.mxu0 0
        %3499 = vmatprep.subr.bf16.mxu0 0
        %3500 = vmatpush1.bf16.msra.mxu0 0
        %3501 = vmatprep.subr.bf16.mxu0 0
        %3502 = vmatpush1.bf16.msra.mxu0 0
        %3503 = vmatprep.subr.bf16.mxu0 0
        %3504 = vmatpush1.bf16.msra.mxu0 0
        %3505 = vmatprep.subr.bf16.mxu0 0
        %3506 = vmatpush1.bf16.msra.mxu0 0
        %3507 = vmatprep.subr.bf16.mxu0 0
        %3508 = vmatpush1.bf16.msra.mxu0 0
        %3509 = vmatprep.subr.bf16.mxu0 0
        %3510 = vmatpush1.bf16.msra.mxu0 0
        %3511 = vmatprep.subr.bf16.mxu0 0
        %3512 = vmatpush1.bf16.msra.mxu0 0
        %3513 = vmatprep.subr.bf16.mxu0 0
        %3514 = vmatpush1.bf16.msra.mxu0 0
        %3515 = vmatprep.mubr.bf16.mxu0 0
        %3516 = vmatmul.mubr.bf16.gmra.mrb[0].mxu0 %v3388
        %v3517 = vpop.f32.mrb[0].mxu0
        %v3518 = vadd.f32 %v3339, %v3517
        %v3519 = vpop.f32.mrb[0].mxu0
        %v3520 = vadd.f32 %v3343, %v3519
        %v3521 = vpop.f32.mrb[0].mxu0
        %v3522 = vadd.f32 %v3339, %v3521
        %v3523 = vpop.f32.mrb[0].mxu0
        %v3524 = vadd.f32 %v3343, %v3523
        %3525 = vmatprep.mubr.bf16.mxu0 0
        %3526 = vmatmul.mubr.bf16.gmra.mrb[0].mxu0 %v3391
        %v3527 = vpop.f32.mrb[0].mxu0
        %v3528 = vadd.f32 %v3339, %v3527
        %v3529 = vpop.f32.mrb[0].mxu0
        %v3530 = vadd.f32 %v3343, %v3529
        %v3531 = vpop.f32.mrb[0].mxu0
        %v3532 = vadd.f32 %v3339, %v3531
        %v3533 = vpop.f32.mrb[0].mxu0
        %v3534 = vadd.f32 %v3343, %v3533
        %3535 = vmatprep.mubr.bf16.mxu0 0
        %3536 = vmatmul.mubr.bf16.gmra.mrb[0].mxu0 %v3394
        %v3537 = vpop.f32.mrb[0].mxu0
        %v3538 = vadd.f32 %v3339, %v3537
        %v3539 = vpop.f32.mrb[0].mxu0
        %v3540 = vadd.f32 %v3343, %v3539
        %v3541 = vpop.f32.mrb[0].mxu0
        %v3542 = vadd.f32 %v3339, %v3541
        %v3543 = vpop.f32.mrb[0].mxu0
        %v3544 = vadd.f32 %v3343, %v3543
        %3545 = vmatprep.mubr.bf16.mxu0 0
        %3546 = vmatmul.mubr.bf16.gmra.mrb[0].mxu0 %v3397
        %v3547 = vpop.f32.mrb[0].mxu0
        %v3548 = vadd.f32 %v3339, %v3547
        %v3549 = vpop.f32.mrb[0].mxu0
        %v3550 = vadd.f32 %v3343, %v3549
        %v3551 = vpop.f32.mrb[0].mxu0
        %v3552 = vadd.f32 %v3339, %v3551
        %v3553 = vpop.f32.mrb[0].mxu0
        %v3554 = vadd.f32 %v3343, %v3553
        %3555 = vmatprep.mubr.bf16.mxu0 0
        %3556 = vmatmul.mubr.bf16.gmra.mrb[0].mxu0 %v3400
        %v3557 = vpop.f32.mrb[0].mxu0
        %v3558 = vadd.f32 %v3339, %v3557
        %v3559 = vpop.f32.mrb[0].mxu0
        %v3560 = vadd.f32 %v3343, %v3559
        %v3561 = vpop.f32.mrb[0].mxu0
        %v3562 = vadd.f32 %v3339, %v3561
        %v3563 = vpop.f32.mrb[0].mxu0
        %v3564 = vadd.f32 %v3343, %v3563
        %3565 = vmatprep.mubr.bf16.mxu0 0
        %3566 = vmatmul.mubr.bf16.gmra.mrb[0].mxu0 %v3403
        %v3567 = vpop.f32.mrb[0].mxu0
        %v3568 = vadd.f32 %v3339, %v3567
        %v3569 = vpop.f32.mrb[0].mxu0
        %v3570 = vadd.f32 %v3343, %v3569
        %v3571 = vpop.f32.mrb[0].mxu0
        %v3572 = vadd.f32 %v3339, %v3571
        %v3573 = vpop.f32.mrb[0].mxu0
        %v3574 = vadd.f32 %v3343, %v3573
        %3575 = vmatprep.mubr.bf16.mxu0 0
        %3576 = vmatmul.mubr.bf16.gmra.mrb[0].mxu0 %v3406
        %v3577 = vpop.f32.mrb[0].mxu0
        %v3578 = vadd.f32 %v3339, %v3577
        %v3579 = vpop.f32.mrb[0].mxu0
        %v3580 = vadd.f32 %v3343, %v3579
        %v3581 = vpop.f32.mrb[0].mxu0
        %v3582 = vadd.f32 %v3339, %v3581
        %v3583 = vpop.f32.mrb[0].mxu0
        %v3584 = vadd.f32 %v3343, %v3583
        %3585 = vmatprep.mubr.bf16.mxu0 0
        %3586 = vmatmul.mubr.bf16.gmra.mrb[0].mxu0 %v3409
        %v3587 = vpop.f32.mrb[0].mxu0
        %v3588 = vadd.f32 %v3339, %v3587
        %v3589 = vpop.f32.mrb[0].mxu0
        %v3590 = vadd.f32 %v3343, %v3589
        %v3591 = vpop.f32.mrb[0].mxu0
        %v3592 = vadd.f32 %v3339, %v3591
        %v3593 = vpop.f32.mrb[0].mxu0
        %v3594 = vadd.f32 %v3343, %v3593
        %3595 = vmatprep.mubr.bf16.mxu0 0
        %3596 = vmatmul.mubr.bf16.gmra.mrb[0].mxu0 %v3412
        %v3597 = vpop.f32.mrb[0].mxu0
        %v3598 = vadd.f32 %v3339, %v3597
        %v3599 = vpop.f32.mrb[0].mxu0
        %v3600 = vadd.f32 %v3343, %v3599
        %v3601 = vpop.f32.mrb[0].mxu0
        %v3602 = vadd.f32 %v3339, %v3601
        %v3603 = vpop.f32.mrb[0].mxu0
        %v3604 = vadd.f32 %v3343, %v3603
        %3605 = vmatprep.mubr.bf16.mxu0 0
        %3606 = vmatmul.mubr.bf16.gmra.mrb[0].mxu0 %v3415
        %v3607 = vpop.f32.mrb[0].mxu0
        %v3608 = vadd.f32 %v3339, %v3607
        %v3609 = vpop.f32.mrb[0].mxu0
        %v3610 = vadd.f32 %v3343, %v3609
        %v3611 = vpop.f32.mrb[0].mxu0
        %v3612 = vadd.f32 %v3339, %v3611
        %v3613 = vpop.f32.mrb[0].mxu0
        %v3614 = vadd.f32 %v3343, %v3613
        %3615 = vmatprep.mubr.bf16.mxu0 0
        %3616 = vmatmul.mubr.bf16.gmra.mrb[0].mxu0 %v3418
        %v3617 = vpop.f32.mrb[0].mxu0
        %v3618 = vadd.f32 %v3339, %v3617
        %v3619 = vpop.f32.mrb[0].mxu0
        %v3620 = vadd.f32 %v3343, %v3619
        %v3621 = vpop.f32.mrb[0].mxu0
        %v3622 = vadd.f32 %v3339, %v3621
        %v3623 = vpop.f32.mrb[0].mxu0
        %v3624 = vadd.f32 %v3343, %v3623
        %3625 = vmatprep.mubr.bf16.mxu0 0
        %3626 = vmatmul.mubr.bf16.gmra.mrb[0].mxu0 %v3421
        %v3627 = vpop.f32.mrb[0].mxu0
        %v3628 = vadd.f32 %v3339, %v3627
        %v3629 = vpop.f32.mrb[0].mxu0
        %v3630 = vadd.f32 %v3343, %v3629
        %v3631 = vpop.f32.mrb[0].mxu0
        %v3632 = vadd.f32 %v3339, %v3631
        %v3633 = vpop.f32.mrb[0].mxu0
        %v3634 = vadd.f32 %v3343, %v3633
        %3635 = vmatprep.mubr.bf16.mxu0 0
        %3636 = vmatmul.mubr.bf16.gmra.mrb[0].mxu0 %v3424
        %v3637 = vpop.f32.mrb[0].mxu0
        %v3638 = vadd.f32 %v3339, %v3637
        %v3639 = vpop.f32.mrb[0].mxu0
        %v3640 = vadd.f32 %v3343, %v3639
        %v3641 = vpop.f32.mrb[0].mxu0
        %v3642 = vadd.f32 %v3339, %v3641
        %v3643 = vpop.f32.mrb[0].mxu0
        %v3644 = vadd.f32 %v3343, %v3643
        %3645 = vmatprep.mubr.bf16.mxu0 0
        %3646 = vmatmul.mubr.bf16.gmra.mrb[0].mxu0 %v3427
        %v3647 = vpop.f32.mrb[0].mxu0
        %v3648 = vadd.f32 %v3339, %v3647
        %v3649 = vpop.f32.mrb[0].mxu0
        %v3650 = vadd.f32 %v3343, %v3649
        %v3651 = vpop.f32.mrb[0].mxu0
        %v3652 = vadd.f32 %v3339, %v3651
        %v3653 = vpop.f32.mrb[0].mxu0
        %v3654 = vadd.f32 %v3343, %v3653
        %3655 = vmatprep.mubr.bf16.mxu0 0
        %3656 = vmatmul.mubr.bf16.gmra.mrb[0].mxu0 %v3430
        %v3657 = vpop.f32.mrb[0].mxu0
        %v3658 = vadd.f32 %v3339, %v3657
        %v3659 = vpop.f32.mrb[0].mxu0
        %v3660 = vadd.f32 %v3343, %v3659
        %v3661 = vpop.f32.mrb[0].mxu0
        %v3662 = vadd.f32 %v3339, %v3661
        %v3663 = vpop.f32.mrb[0].mxu0
        %v3664 = vadd.f32 %v3343, %v3663
        %3665 = vmatprep.mubr.bf16.mxu0 0
        %3666 = vmatmul.mubr.bf16.gmra.mrb[0].mxu0 %v3433
        %v3667 = vpop.f32.mrb[0].mxu0
        %v3668 = vadd.f32 %v3339, %v3667
        %v3669 = vpop.f32.mrb[0].mxu0
        %v3670 = vadd.f32 %v3343, %v3669
        %v3671 = vpop.f32.mrb[0].mxu0
        %v3672 = vadd.f32 %v3339, %v3671
        %v3673 = vpop.f32.mrb[0].mxu0
        %v3674 = vadd.f32 %v3343, %v3673
        %3675 = vmatprep.mubr.bf16.mxu0 0
        %3676 = vmatmul.mubr.bf16.gmra.mrb[0].mxu0 %v3436
        %v3677 = vpop.f32.mrb[0].mxu0
        %v3678 = vadd.f32 %v3339, %v3677
        %v3679 = vpop.f32.mrb[0].mxu0
        %v3680 = vadd.f32 %v3343, %v3679
        %v3681 = vpop.f32.mrb[0].mxu0
        %v3682 = vadd.f32 %v3339, %v3681
        %v3683 = vpop.f32.mrb[0].mxu0
        %v3684 = vadd.f32 %v3343, %v3683
        %3685 = vmatprep.mubr.bf16.mxu0 0
        %3686 = vmatmul.mubr.bf16.gmra.mrb[0].mxu0 %v3439
        %v3687 = vpop.f32.mrb[0].mxu0
        %v3688 = vadd.f32 %v3339, %v3687
        %v3689 = vpop.f32.mrb[0].mxu0
        %v3690 = vadd.f32 %v3343, %v3689
        %v3691 = vpop.f32.mrb[0].mxu0
        %v3692 = vadd.f32 %v3339, %v3691
        %v3693 = vpop.f32.mrb[0].mxu0
        %v3694 = vadd.f32 %v3343, %v3693
        %3695 = vmatprep.mubr.bf16.mxu0 0
        %3696 = vmatmul.mubr.bf16.gmra.mrb[0].mxu0 %v3442
        %v3697 = vpop.f32.mrb[0].mxu0
        %v3698 = vadd.f32 %v3339, %v3697
        %v3699 = vpop.f32.mrb[0].mxu0
        %v3700 = vadd.f32 %v3343, %v3699
        %v3701 = vpop.f32.mrb[0].mxu0
        %v3702 = vadd.f32 %v3339, %v3701
        %v3703 = vpop.f32.mrb[0].mxu0
        %v3704 = vadd.f32 %v3343, %v3703
        %3705 = vmatprep.mubr.bf16.mxu0 0
        %3706 = vmatmul.mubr.bf16.gmra.mrb[0].mxu0 %v3445
        %v3707 = vpop.f32.mrb[0].mxu0
        %v3708 = vadd.f32 %v3339, %v3707
        %v3709 = vpop.f32.mrb[0].mxu0
        %v3710 = vadd.f32 %v3343, %v3709
        %v3711 = vpop.f32.mrb[0].mxu0
        %v3712 = vadd.f32 %v3339, %v3711
        %v3713 = vpop.f32.mrb[0].mxu0
        %v3714 = vadd.f32 %v3343, %v3713
        %3715 = vmatprep.mubr.bf16.mxu0 0
        %3716 = vmatmul.mubr.bf16.gmra.mrb[0].mxu0 %v3448
        %v3717 = vpop.f32.mrb[0].mxu0
        %v3718 = vadd.f32 %v3339, %v3717
        %v3719 = vpop.f32.mrb[0].mxu0
        %v3720 = vadd.f32 %v3343, %v3719
        %v3721 = vpop.f32.mrb[0].mxu0
        %v3722 = vadd.f32 %v3339, %v3721
        %v3723 = vpop.f32.mrb[0].mxu0
        %v3724 = vadd.f32 %v3343, %v3723
        %3725 = vmatprep.mubr.bf16.mxu0 0
        %3726 = vmatmul.mubr.bf16.gmra.mrb[0].mxu0 %v3451
        %v3727 = vpop.f32.mrb[0].mxu0
        %v3728 = vadd.f32 %v3339, %v3727
        %v3729 = vpop.f32.mrb[0].mxu0
        %v3730 = vadd.f32 %v3343, %v3729
        %v3731 = vpop.f32.mrb[0].mxu0
        %v3732 = vadd.f32 %v3339, %v3731
        %v3733 = vpop.f32.mrb[0].mxu0
        %v3734 = vadd.f32 %v3343, %v3733
        %3735 = vmatprep.mubr.bf16.mxu0 0
        %3736 = vmatmul.mubr.bf16.gmra.mrb[0].mxu0 %v3454
        %v3737 = vpop.f32.mrb[0].mxu0
        %v3738 = vadd.f32 %v3339, %v3737
        %v3739 = vpop.f32.mrb[0].mxu0
        %v3740 = vadd.f32 %v3343, %v3739
        %v3741 = vpop.f32.mrb[0].mxu0
        %v3742 = vadd.f32 %v3339, %v3741
        %v3743 = vpop.f32.mrb[0].mxu0
        %v3744 = vadd.f32 %v3343, %v3743
        %3745 = vmatprep.mubr.bf16.mxu0 0
        %3746 = vmatmul.mubr.bf16.gmra.mrb[0].mxu0 %v3457
        %v3747 = vpop.f32.mrb[0].mxu0
        %v3748 = vadd.f32 %v3339, %v3747
        %v3749 = vpop.f32.mrb[0].mxu0
        %v3750 = vadd.f32 %v3343, %v3749
        %v3751 = vpop.f32.mrb[0].mxu0
        %v3752 = vadd.f32 %v3339, %v3751
        %v3753 = vpop.f32.mrb[0].mxu0
        %v3754 = vadd.f32 %v3343, %v3753
        %3755 = vmatprep.mubr.bf16.mxu0 0
        %3756 = vmatmul.mubr.bf16.gmra.mrb[0].mxu0 %v3460
        %v3757 = vpop.f32.mrb[0].mxu0
        %v3758 = vadd.f32 %v3339, %v3757
        %v3759 = vpop.f32.mrb[0].mxu0
        %v3760 = vadd.f32 %v3343, %v3759
        %v3761 = vpop.f32.mrb[0].mxu0
        %v3762 = vadd.f32 %v3339, %v3761
        %v3763 = vpop.f32.mrb[0].mxu0
        %v3764 = vadd.f32 %v3343, %v3763
        %3765 = vmatprep.mubr.bf16.mxu0 0
        %3766 = vmatmul.mubr.bf16.gmra.mrb[0].mxu0 %v3463
        %v3767 = vpop.f32.mrb[0].mxu0
        %v3768 = vadd.f32 %v3339, %v3767
        %v3769 = vpop.f32.mrb[0].mxu0
        %v3770 = vadd.f32 %v3343, %v3769
        %v3771 = vpop.f32.mrb[0].mxu0
        %v3772 = vadd.f32 %v3339, %v3771
        %v3773 = vpop.f32.mrb[0].mxu0
        %v3774 = vadd.f32 %v3343, %v3773
        %3775 = vmatprep.mubr.bf16.mxu0 0
        %3776 = vmatmul.mubr.bf16.gmra.mrb[0].mxu0 %v3466
        %v3777 = vpop.f32.mrb[0].mxu0
        %v3778 = vadd.f32 %v3339, %v3777
        %v3779 = vpop.f32.mrb[0].mxu0
        %v3780 = vadd.f32 %v3343, %v3779
        %v3781 = vpop.f32.mrb[0].mxu0
        %v3782 = vadd.f32 %v3339, %v3781
        %v3783 = vpop.f32.mrb[0].mxu0
        %v3784 = vadd.f32 %v3343, %v3783
        %3785 = vmatprep.mubr.bf16.mxu0 0
        %3786 = vmatmul.mubr.bf16.gmra.mrb[0].mxu0 %v3469
        %v3787 = vpop.f32.mrb[0].mxu0
        %v3788 = vadd.f32 %v3339, %v3787
        %v3789 = vpop.f32.mrb[0].mxu0
        %v3790 = vadd.f32 %v3343, %v3789
        %v3791 = vpop.f32.mrb[0].mxu0
        %v3792 = vadd.f32 %v3339, %v3791
        %v3793 = vpop.f32.mrb[0].mxu0
        %v3794 = vadd.f32 %v3343, %v3793
        %3795 = vmatprep.mubr.bf16.mxu0 0
        %3796 = vmatmul.mubr.bf16.gmra.mrb[0].mxu0 %v3472
        %v3797 = vpop.f32.mrb[0].mxu0
        %v3798 = vadd.f32 %v3339, %v3797
        %v3799 = vpop.f32.mrb[0].mxu0
        %v3800 = vadd.f32 %v3343, %v3799
        %v3801 = vpop.f32.mrb[0].mxu0
        %v3802 = vadd.f32 %v3339, %v3801
        %v3803 = vpop.f32.mrb[0].mxu0
        %v3804 = vadd.f32 %v3343, %v3803
        %3805 = vmatprep.mubr.bf16.mxu0 0
        %3806 = vmatmul.mubr.bf16.gmra.mrb[0].mxu0 %v3475
        %v3807 = vpop.f32.mrb[0].mxu0
        %v3808 = vadd.f32 %v3339, %v3807
        %v3809 = vpop.f32.mrb[0].mxu0
        %v3810 = vadd.f32 %v3343, %v3809
        %v3811 = vpop.f32.mrb[0].mxu0
        %v3812 = vadd.f32 %v3339, %v3811
        %v3813 = vpop.f32.mrb[0].mxu0
        %v3814 = vadd.f32 %v3343, %v3813
        %3815 = vmatprep.mubr.bf16.mxu0 0
        %3816 = vmatmul.mubr.bf16.gmra.mrb[0].mxu0 %v3478
        %v3817 = vpop.f32.mrb[0].mxu0
        %v3818 = vadd.f32 %v3339, %v3817
        %v3819 = vpop.f32.mrb[0].mxu0
        %v3820 = vadd.f32 %v3343, %v3819
        %v3821 = vpop.f32.mrb[0].mxu0
        %v3822 = vadd.f32 %v3339, %v3821
        %v3823 = vpop.f32.mrb[0].mxu0
        %v3824 = vadd.f32 %v3343, %v3823
        %3825 = vmatprep.mubr.bf16.mxu0 0
        %3826 = vmatmul.mubr.bf16.gmra.mrb[0].mxu0 %v3481
        %v3827 = vpop.f32.mrb[0].mxu0
        %v3828 = vadd.f32 %v3339, %v3827
        %v3829 = vpop.f32.mrb[0].mxu0
        %v3830 = vadd.f32 %v3343, %v3829
        %v3831 = vpop.f32.mrb[0].mxu0
        %v3832 = vadd.f32 %v3339, %v3831
        %v3833 = vpop.f32.mrb[0].mxu0
        %v3834 = vadd.f32 %v3343, %v3833
        %3835 = vdwg.mxu0
        %v3836 = vmax.f32 %v3518, %v3528
        %v3837 = vmax.f32 %v3522, %v3532
        %v3838 = vmax.f32 %v3836, %v3538
        %v3839 = vmax.f32 %v3837, %v3542
        %v3840 = vmax.f32 %v3838, %v3548
        %v3841 = vmax.f32 %v3839, %v3552
        %v3842 = vmax.f32 %v3840, %v3558
        %v3843 = vmax.f32 %v3841, %v3562
        %v3844 = vmax.f32 %v3842, %v3568
        %v3845 = vmax.f32 %v3843, %v3572
        %v3846 = vmax.f32 %v3844, %v3578
        %v3847 = vmax.f32 %v3845, %v3582
        %v3848 = vmax.f32 %v3846, %v3588
        %v3849 = vmax.f32 %v3847, %v3592
        %v3850 = vmax.f32 %v3848, %v3598
        %v3851 = vmax.f32 %v3849, %v3602
        %v3852 = vmax.f32 %v3850, %v3608
        %v3853 = vmax.f32 %v3851, %v3612
        %v3854 = vmax.f32 %v3852, %v3618
        %v3855 = vmax.f32 %v3853, %v3622
        %v3856 = vmax.f32 %v3854, %v3628
        %v3857 = vmax.f32 %v3855, %v3632
        %v3858 = vmax.f32 %v3856, %v3638
        %v3859 = vmax.f32 %v3857, %v3642
        %v3860 = vmax.f32 %v3858, %v3648
        %v3861 = vmax.f32 %v3859, %v3652
        %v3862 = vmax.f32 %v3860, %v3658
        %v3863 = vmax.f32 %v3861, %v3662
        %v3864 = vmax.f32 %v3862, %v3668
        %v3865 = vmax.f32 %v3863, %v3672
        %v3866 = vmax.f32 %v3864, %v3678
        %v3867 = vmax.f32 %v3865, %v3682
        %v3868 = vmax.f32 %v3866, %v3688
        %v3869 = vmax.f32 %v3867, %v3692
        %v3870 = vmax.f32 %v3868, %v3698
        %v3871 = vmax.f32 %v3869, %v3702
        %v3872 = vmax.f32 %v3870, %v3708
        %v3873 = vmax.f32 %v3871, %v3712
        %v3874 = vmax.f32 %v3872, %v3718
        %v3875 = vmax.f32 %v3873, %v3722
        %v3876 = vmax.f32 %v3874, %v3728
        %v3877 = vmax.f32 %v3875, %v3732
        %v3878 = vmax.f32 %v3876, %v3738
        %v3879 = vmax.f32 %v3877, %v3742
        %v3880 = vmax.f32 %v3878, %v3748
        %v3881 = vmax.f32 %v3879, %v3752
        %v3882 = vmax.f32 %v3880, %v3758
        %v3883 = vmax.f32 %v3881, %v3762
        %v3884 = vmax.f32 %v3882, %v3768
        %v3885 = vmax.f32 %v3883, %v3772
        %v3886 = vmax.f32 %v3884, %v3778
        %v3887 = vmax.f32 %v3885, %v3782
        %v3888 = vmax.f32 %v3886, %v3788
        %v3889 = vmax.f32 %v3887, %v3792
        %v3890 = vmax.f32 %v3888, %v3798
        %v3891 = vmax.f32 %v3889, %v3802
        %v3892 = vmax.f32 %v3890, %v3808
        %v3893 = vmax.f32 %v3891, %v3812
        %v3894 = vmax.f32 %v3892, %v3818
        %v3895 = vmax.f32 %v3893, %v3822
        %v3896 = vmax.f32 %v3894, %v3828
        %v3897 = vmax.f32 %v3895, %v3832
        %v3898 = vmax.f32 %v3896, %v3897
        %v3899 = vrot.slane %v3898, 4
        %v3900 = vmax.f32 %v3898, %v3899
        %v3901 = vrot.slane %v3900, 2
        %v3902 = vmax.f32 %v3900, %v3901
        %v3903 = vrot.slane %v3902, 1
        %v3904 = vmax.f32 %v3902, %v3903
        %v3905 = vmax.f32 %v3520, %v3530
        %v3906 = vmax.f32 %v3524, %v3534
        %v3907 = vmax.f32 %v3905, %v3540
        %v3908 = vmax.f32 %v3906, %v3544
        %v3909 = vmax.f32 %v3907, %v3550
        %v3910 = vmax.f32 %v3908, %v3554
        %v3911 = vmax.f32 %v3909, %v3560
        %v3912 = vmax.f32 %v3910, %v3564
        %v3913 = vmax.f32 %v3911, %v3570
        %v3914 = vmax.f32 %v3912, %v3574
        %v3915 = vmax.f32 %v3913, %v3580
        %v3916 = vmax.f32 %v3914, %v3584
        %v3917 = vmax.f32 %v3915, %v3590
        %v3918 = vmax.f32 %v3916, %v3594
        %v3919 = vmax.f32 %v3917, %v3600
        %v3920 = vmax.f32 %v3918, %v3604
        %v3921 = vmax.f32 %v3919, %v3610
        %v3922 = vmax.f32 %v3920, %v3614
        %v3923 = vmax.f32 %v3921, %v3620
        %v3924 = vmax.f32 %v3922, %v3624
        %v3925 = vmax.f32 %v3923, %v3630
        %v3926 = vmax.f32 %v3924, %v3634
        %v3927 = vmax.f32 %v3925, %v3640
        %v3928 = vmax.f32 %v3926, %v3644
        %v3929 = vmax.f32 %v3927, %v3650
        %v3930 = vmax.f32 %v3928, %v3654
        %v3931 = vmax.f32 %v3929, %v3660
        %v3932 = vmax.f32 %v3930, %v3664
        %v3933 = vmax.f32 %v3931, %v3670
        %v3934 = vmax.f32 %v3932, %v3674
        %v3935 = vmax.f32 %v3933, %v3680
        %v3936 = vmax.f32 %v3934, %v3684
        %v3937 = vmax.f32 %v3935, %v3690
        %v3938 = vmax.f32 %v3936, %v3694
        %v3939 = vmax.f32 %v3937, %v3700
        %v3940 = vmax.f32 %v3938, %v3704
        %v3941 = vmax.f32 %v3939, %v3710
        %v3942 = vmax.f32 %v3940, %v3714
        %v3943 = vmax.f32 %v3941, %v3720
        %v3944 = vmax.f32 %v3942, %v3724
        %v3945 = vmax.f32 %v3943, %v3730
        %v3946 = vmax.f32 %v3944, %v3734
        %v3947 = vmax.f32 %v3945, %v3740
        %v3948 = vmax.f32 %v3946, %v3744
        %v3949 = vmax.f32 %v3947, %v3750
        %v3950 = vmax.f32 %v3948, %v3754
        %v3951 = vmax.f32 %v3949, %v3760
        %v3952 = vmax.f32 %v3950, %v3764
        %v3953 = vmax.f32 %v3951, %v3770
        %v3954 = vmax.f32 %v3952, %v3774
        %v3955 = vmax.f32 %v3953, %v3780
        %v3956 = vmax.f32 %v3954, %v3784
        %v3957 = vmax.f32 %v3955, %v3790
        %v3958 = vmax.f32 %v3956, %v3794
        %v3959 = vmax.f32 %v3957, %v3800
        %v3960 = vmax.f32 %v3958, %v3804
        %v3961 = vmax.f32 %v3959, %v3810
        %v3962 = vmax.f32 %v3960, %v3814
        %v3963 = vmax.f32 %v3961, %v3820
        %v3964 = vmax.f32 %v3962, %v3824
        %v3965 = vmax.f32 %v3963, %v3830
        %v3966 = vmax.f32 %v3964, %v3834
        %v3967 = vmax.f32 %v3965, %v3966
        %v3968 = vrot.slane %v3967, 4
        %v3969 = vmax.f32 %v3967, %v3968
        %v3970 = vrot.slane %v3969, 2
        %v3971 = vmax.f32 %v3969, %v3970
        %v3972 = vrot.slane %v3971, 1
        %v3973 = vmax.f32 %v3971, %v3972
        %p3974 = scmp.eq.s32.totalorder %s34, 0
        // Predicated region
        $region73: #{tpu_custom_call.1} parent=71 // pred_check
          %p3975 = pneg %p3974
        $region74: #{tpu_custom_call.1} parent=71 // pred_check_branch
          %3977 = sbr.rel (%p3975) target = $region76
        $region75: #{tpu_custom_call.1} parent=71 // pred_region
          %3978 = vst [vmem:[%s497] sm:$0xff] %v3904
          %3979 = vst [vmem:[%s497 + $0x8] sm:$0xff] %v3973
        $region76: #{tpu_custom_call.1} parent=71 // pred_fallthru
          _
        %p3980 = scmp.gt.s32.totalorder %s34, 0
        // Predicated region
        $region77: #{tpu_custom_call.1} parent=71 // pred_check
          %p3981 = pneg %p3980
        $region78: #{tpu_custom_call.1} parent=71 // pred_check_branch
          %3983 = sbr.rel (%p3981) target = $region80
        $region79: #{tpu_custom_call.1} parent=71 // pred_region
          %v3984 = vld [vmem:[%s497] sm:$0xff]
          %v3985 = vld [vmem:[%s497 + $0x8] sm:$0xff]
          %v3986 = vmax.f32 %v3984, %v3904
          %v3987 = vmax.f32 %v3985, %v3973
          %3988 = vst [vmem:[%s497] sm:$0xff] %v3986
          %3989 = vst [vmem:[%s497 + $0x8] sm:$0xff] %v3987
        $region80: #{tpu_custom_call.1} parent=71 // pred_fallthru
          _
        %s3990 = smul.u32 %s33, 2
        %s3991 = sadd.s32 %s3990, %s34
        %s3992 = smul.u32 64, %s3991
        %p3993 = scmp.lt.s32.totalorder %s3992, 255
        %s3994 = scalar_select %p3993, %s3992, 255
        %s3995 = smul.addr %s3994, 4
        %s3996 = scalar_lea.vmem %s13, %s3995
        %s3997 = sand.u32 %s361, 1
        %s3998 = scalar_lea.sflag [#allocation3], %s3997
        %s3999 = sand.u32 %s361, 1
        %s4000 = smul.addr %s3999, 16
        %s4001 = scalar_lea.vmem [#allocation2], %s4000
        // Predicated region
        $region81: #{tpu_custom_call.1} parent=71 // pred_check
          %p4002 = pneg %p345
        $region82: #{tpu_custom_call.1} parent=71 // pred_check_branch
          %4004 = sbr.rel (%p4002) target = $region84
        $region83: #{tpu_custom_call.1} parent=71 // pred_region
          %s4005 = smul.u32 %s33, 2
          %s4006 = sadd.s32 %s4005, %s34
          %s4007 = smul.u32 64, %s4006
        $region84: #{tpu_custom_call.1} parent=71 // pred_fallthru
          _
        // Predicated region
        $region85: #{tpu_custom_call.1} parent=71 // pred_check
          %p4008 = pneg %p371
        $region86: #{tpu_custom_call.1} parent=71 // pred_check_branch
          %4010 = sbr.rel (%p4008) target = $region88
        $region87: #{tpu_custom_call.1} parent=71 // pred_region
          %s4012 = ssub.s32 256, 256
          %4013 = vsyncadd %s3998, %s4012
          %s4014 = smul.addr %s33, 2
          %s4015 = smul.addr %s4014, 128
          %s4016 = scalar_lea.hbm %s14, %s4015
          %s4018 = sshll.u32 %s4001, 4
          %s4019 = int_to_ptr.vmem [resolvable:$true] %s4018
          %4021 = dma.vmem_to_hbm [thread:$0]  %s4019, 256, %s4016, %s3998
        $region88: #{tpu_custom_call.1} parent=71 // pred_fallthru
          _
      $region72: #{tpu_custom_call.1} parent=5 // pred_fallthru
        _
      %p4022 = scmp.le.s32.totalorder 2, %s24
      // Predicated region
      $region89: #{tpu_custom_call.1} parent=5 // pred_check
        %p4023 = pneg %p4022
      $region90: #{tpu_custom_call.1} parent=5 // pred_check_branch
        %4025 = sbr.rel (%p4023) target = $region92
      $region91: #{tpu_custom_call.1} parent=5 // pred_region
        %s4026 = ssub.s32 %s24, 2
        // Predicated region
        $region93: #{tpu_custom_call.1} parent=91 // pred_check
          %p4027 = pneg %p351
        $region94: #{tpu_custom_call.1} parent=91 // pred_check_branch
          %4029 = sbr.rel (%p4027) target = $region96
        $region95: #{tpu_custom_call.1} parent=91 // pred_region
          %s4030 = smul.u32 %s35, 2
          %s4031 = sadd.s32 %s4030, %s36
          %s4032 = smul.u32 64, %s4031
          %p4033 = scmp.lt.s32.totalorder %s4032, 255
          %s4034 = scalar_select %p4033, %s4032, 255
          %s4035 = smul.addr %s4034, 4
          %s4036 = scalar_lea.vmem %s13, %s4035
        $region96: #{tpu_custom_call.1} parent=91 // pred_fallthru
          _
        // Predicated region
        $region97: #{tpu_custom_call.1} parent=91 // pred_check
          %p4037 = pneg %p377
        $region98: #{tpu_custom_call.1} parent=91 // pred_check_branch
          %4039 = sbr.rel (%p4037) target = $region100
        $region99: #{tpu_custom_call.1} parent=91 // pred_region
          %s4040 = sand.u32 %s362, 1
          %s4041 = scalar_lea.sflag [#allocation3], %s4040
          %s4042 = sand.u32 %s362, 1
          %s4043 = smul.addr %s4042, 16
          %s4044 = scalar_lea.vmem [#allocation2], %s4043
          %4045 = dma.done %s4041, 256
        $region100: #{tpu_custom_call.1} parent=91 // pred_fallthru
          _
      $region92: #{tpu_custom_call.1} parent=5 // pred_fallthru
        _
    $region6: #{tpu_custom_call.1} parent=1 // loop_footer
      %s28 = sadd.s32 1, %s24
    $region7: #{tpu_custom_call.1} parent=1 // loop_footer_branch
      %23 = sbr.rel target = $region3
    $region8: #{tpu_custom_call.1} parent=1 // loop_exit
      _
    %4046 = vsyncpa [#allocation3], 1
    %s4047 = scalar_lea.sflag [#allocation3], 1
    %4048 = vsyncpa %s4047, 1

</llo_original>
